<compile_context>
chip_gen: v7x
topology: tpu7x:2x2x1
jax: 0.10.0
libtpu: 0.0.40
codegen_flags: <defaults>
</compile_context>

<pallas_src>
import functools

import jax
import jax.numpy as jnp
from jax.experimental import pallas as pl
from jax.experimental.pallas import tpu as pltpu


# ------------------------------ fused kernel --------------------------------


def _rdb_fused_kernel(x_ref, mask_ref, w1, b1, w2, b2, w3, b3, w4, b4, w5, b5,
                      o_ref, sh, *, H, W, C0, G, scale):
    """Fused ResidualDenseBlock forward for one batch element.

    x_ref    : (1, C0, H*W)       input (channel-major, flat spatial on lanes)
    mask_ref : (9, H*W)           per-tap validity masks (0 on the zero-padding
                                  border / wrapped lanes of the roll, 1 inside)
    w_k      : (Cout_k, 9*Cin_k)  packed weights, column r = 9*base_g
                                  + (dy*3+dx)*group_size + c_within_group
    b_k      : (Cout_k, 1)
    o_ref    : (1, C0, H*W)
    sh       : VMEM (9*Ctot, H*W) tap stack; row r holds the (dy,dx) tap of
                                  channel c (same ordering as the weights)
    """
    f32 = jnp.float32
    HW = H * W

    def write_taps(feat, base):
        # feat: (cg, HW).  Store its 9 shifted, zero-padded conv taps into
        # sh[9*base : 9*(base+cg)].  Shifts run on the XLU (lane roll); the
        # masks zero the SAME-padding border (which also covers the roll's
        # wrap-around lanes).  All stores are sublane-aligned full-lane vst.
        cg = feat.shape[0]
        r0 = 9 * base
        for dy in range(3):
            for dx in range(3):
                t = dy * 3 + dx
                s = (dy - 1) * W + (dx - 1)            # source offset in flat HW
                tap = feat if s == 0 else pltpu.roll(feat, shift=(-s) % HW,
                                                     axis=1)
                if t != 4:                             # centre tap: mask is all 1
                    tap = tap * mask_ref[t:t + 1, :]
                sh[r0 + t * cg:r0 + (t + 1) * cg, :] = tap

    def conv(w_ref, b_ref, cin, relu):
        # One MXU matmul over the whole 3x3 field and every channel written so
        # far (the dense concat is the contiguous K-prefix of the tap stack):
        #   (Cout, 9*cin) x (9*cin, HW) -> (Cout, HW)
        y = jnp.dot(w_ref[...], sh[0:9 * cin, :], preferred_element_type=f32)
        y = y + b_ref[...]                             # (Cout, 1) lane-broadcast
        if relu:
            y = jnp.where(y >= 0, y, 0.2 * y)          # LeakyReLU(0.2)
        return y

    x = x_ref[0].astype(f32)                           # (C0, HW)
    write_taps(x, 0)

    x1 = conv(w1, b1, C0, True)
    write_taps(x1, C0)
    x2 = conv(w2, b2, C0 + G, True)
    write_taps(x2, C0 + G)
    x3 = conv(w3, b3, C0 + 2 * G, True)
    write_taps(x3, C0 + 2 * G)
    x4 = conv(w4, b4, C0 + 3 * G, True)
    write_taps(x4, C0 + 3 * G)

    # conv5 (no activation) fused with the scaled residual.
    x5 = conv(w5, b5, C0 + 4 * G, False)
    o_ref[0] = (x5 * scale + x).astype(o_ref.dtype)


# ------------------------------ call wrapper ---------------------------------


def _pack_weight(w_hwio, group_sizes):
    """(3,3,Cin,Cout) HWIO -> (Cout, 9*Cin), columns r = 9*base + tap*cg + c."""
    cout = w_hwio.shape[-1]
    parts, base = [], 0
    for cg in group_sizes:
        wg = w_hwio[:, :, base:base + cg, :]                     # (3,3,cg,cout)
        parts.append(jnp.transpose(wg, (3, 0, 1, 2)).reshape(cout, 9 * cg))
        base += cg
    return jnp.concatenate(parts, axis=1)


def _border_masks(H, W, dtype=jnp.float32):
    """(9, H*W) masks: 1 where tap (dy,dx) reads inside the image, else 0."""
    ii, jj = jnp.meshgrid(jnp.arange(H), jnp.arange(W), indexing="ij")
    ii, jj = ii.reshape(-1), jj.reshape(-1)
    rows = []
    for dy in range(3):
        for dx in range(3):
            valid = ((ii + dy - 1 >= 0) & (ii + dy - 1 < H) &
                     (jj + dx - 1 >= 0) & (jj + dx - 1 < W))
            rows.append(valid.astype(dtype))
    return jnp.stack(rows)


def residual_dense_block(x_nchw, params, scale=0.2):
    """Forward pass matching the PyTorch module (input/output NCHW)."""
    N, C0, H, W = x_nchw.shape
    HW = H * W
    G = params[0][0].shape[-1]
    Ctot = C0 + 4 * G

    x = x_nchw.reshape(N, C0, HW)            # free reshape: NCHW is channel-major
    masks = _border_masks(H, W)

    args = [x, masks]
    in_specs = [pl.BlockSpec((1, C0, HW), lambda n: (n, 0, 0)),
                pl.BlockSpec((9, HW), lambda n: (0, 0))]
    for k, (w, b) in enumerate(params):
        cout = w.shape[-1]
        wp = _pack_weight(w, [C0] + [G] * k)                     # (cout, 9*cin_k)
        args += [wp, b.reshape(cout, 1)]
        in_specs += [pl.BlockSpec(wp.shape, lambda n: (0, 0)),
                     pl.BlockSpec((cout, 1), lambda n: (0, 0))]

    kernel = functools.partial(_rdb_fused_kernel, H=H, W=W, C0=C0, G=G,
                               scale=scale)
    y = pl.pallas_call(
        kernel,
        out_shape=jax.ShapeDtypeStruct((N, C0, HW), x.dtype),
        grid=(N,),          # 1 image/step keeps grid >= 2 -> both v7x cores busy
        in_specs=in_specs,
        out_specs=pl.BlockSpec((1, C0, HW), lambda n: (n, 0, 0)),
        scratch_shapes=[pltpu.VMEM((9 * Ctot, HW), jnp.float32)],  # tap stack
        compiler_params=pltpu.CompilerParams(
            dimension_semantics=("parallel",),
            vmem_limit_bytes=32 * 1024 * 1024),
    )(*args)
    return y.reshape(N, C0, H, W)


# ------------------------------ params & reference ---------------------------


def init_rdb_params(key, mid_channels=32, growth_channels=16,
                    dtype=jnp.float32):
    """Deterministic synthetic init (PyTorch-style kaiming-uniform bounds)."""
    params = []
    for i in range(5):
        in_ch = mid_channels + i * growth_channels
        out_ch = mid_channels if i == 4 else growth_channels
        key, kw, kb = jax.random.split(key, 3)
        fan_in = in_ch * 9
        bound = 1.0 / (fan_in ** 0.5)
        w = jax.random.uniform(kw, (3, 3, in_ch, out_ch), dtype,
                               minval=-bound, maxval=bound)
        b = jax.random.uniform(kb, (out_ch,), dtype,
                               minval=-bound, maxval=bound)
        params.append((w, b))
    return params


def _ref_conv(x, w, b, lrelu):
    y = jax.lax.conv_general_dilated(
        x, w, window_strides=(1, 1), padding="SAME",
        dimension_numbers=("NHWC", "HWIO", "NHWC"))
    y = y + b
    if lrelu:
        y = jnp.where(y >= 0, y, 0.2 * y)
    return y


def residual_dense_block_ref(x_nchw, params, scale=0.2):
    x = jnp.transpose(x_nchw, (0, 2, 3, 1))
    feats = [x]
    for i in range(4):
        w, b = params[i]
        feats.append(_ref_conv(jnp.concatenate(feats, axis=-1), w, b, True))
    w5, b5 = params[4]
    y = _ref_conv(jnp.concatenate(feats, axis=-1), w5, b5, False)
    y = y * scale + x
    return jnp.transpose(y, (0, 3, 1, 2))


# ---------------------------------- main --------------------------------------


if __name__ == "__main__":
    key = jax.random.PRNGKey(0)
    kx, kp = jax.random.split(key)

    N, MID, GROWTH, H, W = 2, 32, 16, 16, 16
    x = jax.random.normal(kx, (N, MID, H, W), jnp.float32)   # NCHW, like torch
    params = init_rdb_params(kp, mid_channels=MID, growth_channels=GROWTH)

    out = jax.block_until_ready(residual_dense_block(x, params))
    ref = jax.block_until_ready(residual_dense_block_ref(x, params))

    assert out.shape == x.shape and out.dtype == x.dtype
    max_err = float(jnp.max(jnp.abs(out - ref)))
    assert jnp.allclose(out, ref, atol=1e-4, rtol=1e-4), max_err

    print("KERNEL_OK")
</pallas_src>

<mosaic_0001>
module attributes {stable_mosaic.version = 11 : i64} {
  func.func @_rdb_fused_kernel(%arg0: i32, %arg1: memref<1x32x256xf32, #tpu.memory_space<vmem>>, %arg2: memref<9x256xf32, #tpu.memory_space<vmem>>, %arg3: memref<16x288xf32, #tpu.memory_space<vmem>>, %arg4: memref<16x1xf32, #tpu.memory_space<vmem>>, %arg5: memref<16x432xf32, #tpu.memory_space<vmem>>, %arg6: memref<16x1xf32, #tpu.memory_space<vmem>>, %arg7: memref<16x576xf32, #tpu.memory_space<vmem>>, %arg8: memref<16x1xf32, #tpu.memory_space<vmem>>, %arg9: memref<16x720xf32, #tpu.memory_space<vmem>>, %arg10: memref<16x1xf32, #tpu.memory_space<vmem>>, %arg11: memref<32x864xf32, #tpu.memory_space<vmem>>, %arg12: memref<32x1xf32, #tpu.memory_space<vmem>>, %arg13: memref<1x32x256xf32, #tpu.memory_space<vmem>>, %arg14: memref<864x256xf32, #tpu.memory_space<vmem>>) attributes {dimension_semantics = [#tpu.dimension_semantics<parallel>], iteration_bounds = array<i64: 2>, scalar_prefetch = 0 : i64, scratch_operands = 1 : i64, tpu.core_type = #tpu.core_type<tc>, window_params = [{transform_indices = @transform_0, window_bounds = array<i64: 1, 32, 256>}, {pipeline_mode = #tpu.pipeline_mode<synchronous>, transform_indices = @transform_1, window_bounds = array<i64: 9, 256>}, {pipeline_mode = #tpu.pipeline_mode<synchronous>, transform_indices = @transform_2, window_bounds = array<i64: 16, 288>}, {pipeline_mode = #tpu.pipeline_mode<synchronous>, transform_indices = @transform_3, window_bounds = array<i64: 16, 1>}, {pipeline_mode = #tpu.pipeline_mode<synchronous>, transform_indices = @transform_4, window_bounds = array<i64: 16, 432>}, {pipeline_mode = #tpu.pipeline_mode<synchronous>, transform_indices = @transform_5, window_bounds = array<i64: 16, 1>}, {pipeline_mode = #tpu.pipeline_mode<synchronous>, transform_indices = @transform_6, window_bounds = array<i64: 16, 576>}, {pipeline_mode = #tpu.pipeline_mode<synchronous>, transform_indices = @transform_7, window_bounds = array<i64: 16, 1>}, {pipeline_mode = #tpu.pipeline_mode<synchronous>, transform_indices = @transform_8, window_bounds = array<i64: 16, 720>}, {pipeline_mode = #tpu.pipeline_mode<synchronous>, transform_indices = @transform_9, window_bounds = array<i64: 16, 1>}, {pipeline_mode = #tpu.pipeline_mode<synchronous>, transform_indices = @transform_10, window_bounds = array<i64: 32, 864>}, {pipeline_mode = #tpu.pipeline_mode<synchronous>, transform_indices = @transform_11, window_bounds = array<i64: 32, 1>}, {transform_indices = @transform_12, window_bounds = array<i64: 1, 32, 256>}]} {
    %c0 = arith.constant 0 : index
    %c0_0 = arith.constant 0 : index
    %c0_1 = arith.constant 0 : index
    %0 = vector.load %arg1[%c0, %c0_0, %c0_1] : memref<1x32x256xf32, #tpu.memory_space<vmem>>, vector<1x32x256xf32>
    %1 = vector.shape_cast %0 : vector<1x32x256xf32> to vector<32x256xf32>
    %c17_i32 = arith.constant 17 : i32
    %2 = tpu.dynamic_rotate %1 by %c17_i32 dim 1 : vector<32x256xf32>, i32 -> vector<32x256xf32>
    %c0_2 = arith.constant 0 : index
    %c0_3 = arith.constant 0 : index
    %3 = vector.load %arg2[%c0_2, %c0_3] : memref<9x256xf32, #tpu.memory_space<vmem>>, vector<1x256xf32>
    %4 = vector.broadcast %3 : vector<1x256xf32> to vector<32x256xf32>
    %5 = arith.mulf %2, %4 : vector<32x256xf32>
    %c0_4 = arith.constant 0 : index
    %c0_5 = arith.constant 0 : index
    %6 = vector.load %arg14[%c0_4, %c0_5] : memref<864x256xf32, #tpu.memory_space<vmem>>, vector<32x256xf32>
    tpu.vector_store %arg14[%c0_4, %c0_5], %5 {strides = array<i32>} : memref<864x256xf32, #tpu.memory_space<vmem>>, vector<32x256xf32>,
    %c16_i32 = arith.constant 16 : i32
    %7 = tpu.dynamic_rotate %1 by %c16_i32 dim 1 : vector<32x256xf32>, i32 -> vector<32x256xf32>
    %c1 = arith.constant 1 : index
    %c0_6 = arith.constant 0 : index
    %8 = vector.load %arg2[%c1, %c0_6] : memref<9x256xf32, #tpu.memory_space<vmem>>, vector<1x256xf32>
    %9 = vector.broadcast %8 : vector<1x256xf32> to vector<32x256xf32>
    %10 = arith.mulf %7, %9 : vector<32x256xf32>
    %c32 = arith.constant 32 : index
    %c0_7 = arith.constant 0 : index
    %11 = vector.load %arg14[%c32, %c0_7] : memref<864x256xf32, #tpu.memory_space<vmem>>, vector<32x256xf32>
    tpu.vector_store %arg14[%c32, %c0_7], %10 {strides = array<i32>} : memref<864x256xf32, #tpu.memory_space<vmem>>, vector<32x256xf32>,
    %c15_i32 = arith.constant 15 : i32
    %12 = tpu.dynamic_rotate %1 by %c15_i32 dim 1 : vector<32x256xf32>, i32 -> vector<32x256xf32>
    %c2 = arith.constant 2 : index
    %c0_8 = arith.constant 0 : index
    %13 = vector.load %arg2[%c2, %c0_8] : memref<9x256xf32, #tpu.memory_space<vmem>>, vector<1x256xf32>
    %14 = vector.broadcast %13 : vector<1x256xf32> to vector<32x256xf32>
    %15 = arith.mulf %12, %14 : vector<32x256xf32>
    %c64 = arith.constant 64 : index
    %c0_9 = arith.constant 0 : index
    %16 = vector.load %arg14[%c64, %c0_9] : memref<864x256xf32, #tpu.memory_space<vmem>>, vector<32x256xf32>
    tpu.vector_store %arg14[%c64, %c0_9], %15 {strides = array<i32>} : memref<864x256xf32, #tpu.memory_space<vmem>>, vector<32x256xf32>,
    %c1_i32 = arith.constant 1 : i32
    %17 = tpu.dynamic_rotate %1 by %c1_i32 dim 1 : vector<32x256xf32>, i32 -> vector<32x256xf32>
    %c3 = arith.constant 3 : index
    %c0_10 = arith.constant 0 : index
    %18 = vector.load %arg2[%c3, %c0_10] : memref<9x256xf32, #tpu.memory_space<vmem>>, vector<1x256xf32>
    %19 = vector.broadcast %18 : vector<1x256xf32> to vector<32x256xf32>
    %20 = arith.mulf %17, %19 : vector<32x256xf32>
    %c96 = arith.constant 96 : index
    %c0_11 = arith.constant 0 : index
    %21 = vector.load %arg14[%c96, %c0_11] : memref<864x256xf32, #tpu.memory_space<vmem>>, vector<32x256xf32>
    tpu.vector_store %arg14[%c96, %c0_11], %20 {strides = array<i32>} : memref<864x256xf32, #tpu.memory_space<vmem>>, vector<32x256xf32>,
    %c128 = arith.constant 128 : index
    %c0_12 = arith.constant 0 : index
    %22 = vector.load %arg14[%c128, %c0_12] : memref<864x256xf32, #tpu.memory_space<vmem>>, vector<32x256xf32>
    tpu.vector_store %arg14[%c128, %c0_12], %1 {strides = array<i32>} : memref<864x256xf32, #tpu.memory_space<vmem>>, vector<32x256xf32>,
    %c255_i32 = arith.constant 255 : i32
    %23 = tpu.dynamic_rotate %1 by %c255_i32 dim 1 : vector<32x256xf32>, i32 -> vector<32x256xf32>
    %c5 = arith.constant 5 : index
    %c0_13 = arith.constant 0 : index
    %24 = vector.load %arg2[%c5, %c0_13] : memref<9x256xf32, #tpu.memory_space<vmem>>, vector<1x256xf32>
    %25 = vector.broadcast %24 : vector<1x256xf32> to vector<32x256xf32>
    %26 = arith.mulf %23, %25 : vector<32x256xf32>
    %c160 = arith.constant 160 : index
    %c0_14 = arith.constant 0 : index
    %27 = vector.load %arg14[%c160, %c0_14] : memref<864x256xf32, #tpu.memory_space<vmem>>, vector<32x256xf32>
    tpu.vector_store %arg14[%c160, %c0_14], %26 {strides = array<i32>} : memref<864x256xf32, #tpu.memory_space<vmem>>, vector<32x256xf32>,
    %c241_i32 = arith.constant 241 : i32
    %28 = tpu.dynamic_rotate %1 by %c241_i32 dim 1 : vector<32x256xf32>, i32 -> vector<32x256xf32>
    %c6 = arith.constant 6 : index
    %c0_15 = arith.constant 0 : index
    %29 = vector.load %arg2[%c6, %c0_15] : memref<9x256xf32, #tpu.memory_space<vmem>>, vector<1x256xf32>
    %30 = vector.broadcast %29 : vector<1x256xf32> to vector<32x256xf32>
    %31 = arith.mulf %28, %30 : vector<32x256xf32>
    %c192 = arith.constant 192 : index
    %c0_16 = arith.constant 0 : index
    %32 = vector.load %arg14[%c192, %c0_16] : memref<864x256xf32, #tpu.memory_space<vmem>>, vector<32x256xf32>
    tpu.vector_store %arg14[%c192, %c0_16], %31 {strides = array<i32>} : memref<864x256xf32, #tpu.memory_space<vmem>>, vector<32x256xf32>,
    %c240_i32 = arith.constant 240 : i32
    %33 = tpu.dynamic_rotate %1 by %c240_i32 dim 1 : vector<32x256xf32>, i32 -> vector<32x256xf32>
    %c7 = arith.constant 7 : index
    %c0_17 = arith.constant 0 : index
    %34 = vector.load %arg2[%c7, %c0_17] : memref<9x256xf32, #tpu.memory_space<vmem>>, vector<1x256xf32>
    %35 = vector.broadcast %34 : vector<1x256xf32> to vector<32x256xf32>
    %36 = arith.mulf %33, %35 : vector<32x256xf32>
    %c224 = arith.constant 224 : index
    %c0_18 = arith.constant 0 : index
    %37 = vector.load %arg14[%c224, %c0_18] : memref<864x256xf32, #tpu.memory_space<vmem>>, vector<32x256xf32>
    tpu.vector_store %arg14[%c224, %c0_18], %36 {strides = array<i32>} : memref<864x256xf32, #tpu.memory_space<vmem>>, vector<32x256xf32>,
    %c239_i32 = arith.constant 239 : i32
    %38 = tpu.dynamic_rotate %1 by %c239_i32 dim 1 : vector<32x256xf32>, i32 -> vector<32x256xf32>
    %c8 = arith.constant 8 : index
    %c0_19 = arith.constant 0 : index
    %39 = vector.load %arg2[%c8, %c0_19] : memref<9x256xf32, #tpu.memory_space<vmem>>, vector<1x256xf32>
    %40 = vector.broadcast %39 : vector<1x256xf32> to vector<32x256xf32>
    %41 = arith.mulf %38, %40 : vector<32x256xf32>
    %c256 = arith.constant 256 : index
    %c0_20 = arith.constant 0 : index
    %42 = vector.load %arg14[%c256, %c0_20] : memref<864x256xf32, #tpu.memory_space<vmem>>, vector<32x256xf32>
    tpu.vector_store %arg14[%c256, %c0_20], %41 {strides = array<i32>} : memref<864x256xf32, #tpu.memory_space<vmem>>, vector<32x256xf32>,
    %c0_21 = arith.constant 0 : index
    %c0_22 = arith.constant 0 : index
    %43 = vector.load %arg3[%c0_21, %c0_22] : memref<16x288xf32, #tpu.memory_space<vmem>>, vector<16x288xf32>
    %c0_23 = arith.constant 0 : index
    %c0_24 = arith.constant 0 : index
    %44 = vector.load %arg14[%c0_23, %c0_24] : memref<864x256xf32, #tpu.memory_space<vmem>>, vector<288x256xf32>
    %cst = arith.constant dense<0.000000e+00> : vector<16x256xf32>
    %45 = tpu.matmul %43, %44, %cst {dimension_numbers = #tpu.dot_dimension_numbers<[1], [0], [0], [1], [0, 0, 1, 1], [], []>} : vector<16x288xf32>, vector<288x256xf32>, vector<16x256xf32> -> vector<16x256xf32>
    %c0_25 = arith.constant 0 : index
    %c0_26 = arith.constant 0 : index
    %46 = vector.load %arg4[%c0_25, %c0_26] : memref<16x1xf32, #tpu.memory_space<vmem>>, vector<16x1xf32>
    %47 = vector.broadcast %46 : vector<16x1xf32> to vector<16x256xf32>
    %48 = arith.addf %45, %47 : vector<16x256xf32>
    %cst_27 = arith.constant 0.000000e+00 : f32
    %49 = vector.broadcast %cst_27 : f32 to vector<16x256xf32>
    %50 = arith.cmpf oge, %48, %49 : vector<16x256xf32>
    %cst_28 = arith.constant 2.000000e-01 : f32
    %51 = vector.broadcast %cst_28 : f32 to vector<16x256xf32>
    %52 = arith.mulf %51, %48 : vector<16x256xf32>
    %53 = arith.select %50, %48, %52 : vector<16x256xi1>, vector<16x256xf32>
    %c17_i32_29 = arith.constant 17 : i32
    %54 = tpu.dynamic_rotate %53 by %c17_i32_29 dim 1 : vector<16x256xf32>, i32 -> vector<16x256xf32>
    %c0_30 = arith.constant 0 : index
    %c0_31 = arith.constant 0 : index
    %55 = vector.load %arg2[%c0_30, %c0_31] : memref<9x256xf32, #tpu.memory_space<vmem>>, vector<1x256xf32>
    %56 = vector.broadcast %55 : vector<1x256xf32> to vector<16x256xf32>
    %57 = arith.mulf %54, %56 : vector<16x256xf32>
    %c288 = arith.constant 288 : index
    %c0_32 = arith.constant 0 : index
    %58 = vector.load %arg14[%c288, %c0_32] : memref<864x256xf32, #tpu.memory_space<vmem>>, vector<16x256xf32>
    tpu.vector_store %arg14[%c288, %c0_32], %57 {strides = array<i32>} : memref<864x256xf32, #tpu.memory_space<vmem>>, vector<16x256xf32>,
    %c16_i32_33 = arith.constant 16 : i32
    %59 = tpu.dynamic_rotate %53 by %c16_i32_33 dim 1 : vector<16x256xf32>, i32 -> vector<16x256xf32>
    %c1_34 = arith.constant 1 : index
    %c0_35 = arith.constant 0 : index
    %60 = vector.load %arg2[%c1_34, %c0_35] : memref<9x256xf32, #tpu.memory_space<vmem>>, vector<1x256xf32>
    %61 = vector.broadcast %60 : vector<1x256xf32> to vector<16x256xf32>
    %62 = arith.mulf %59, %61 : vector<16x256xf32>
    %c304 = arith.constant 304 : index
    %c0_36 = arith.constant 0 : index
    %63 = vector.load %arg14[%c304, %c0_36] : memref<864x256xf32, #tpu.memory_space<vmem>>, vector<16x256xf32>
    tpu.vector_store %arg14[%c304, %c0_36], %62 {strides = array<i32>} : memref<864x256xf32, #tpu.memory_space<vmem>>, vector<16x256xf32>,
    %c15_i32_37 = arith.constant 15 : i32
    %64 = tpu.dynamic_rotate %53 by %c15_i32_37 dim 1 : vector<16x256xf32>, i32 -> vector<16x256xf32>
    %c2_38 = arith.constant 2 : index
    %c0_39 = arith.constant 0 : index
    %65 = vector.load %arg2[%c2_38, %c0_39] : memref<9x256xf32, #tpu.memory_space<vmem>>, vector<1x256xf32>
    %66 = vector.broadcast %65 : vector<1x256xf32> to vector<16x256xf32>
    %67 = arith.mulf %64, %66 : vector<16x256xf32>
    %c320 = arith.constant 320 : index
    %c0_40 = arith.constant 0 : index
    %68 = vector.load %arg14[%c320, %c0_40] : memref<864x256xf32, #tpu.memory_space<vmem>>, vector<16x256xf32>
    tpu.vector_store %arg14[%c320, %c0_40], %67 {strides = array<i32>} : memref<864x256xf32, #tpu.memory_space<vmem>>, vector<16x256xf32>,
    %c1_i32_41 = arith.constant 1 : i32
    %69 = tpu.dynamic_rotate %53 by %c1_i32_41 dim 1 : vector<16x256xf32>, i32 -> vector<16x256xf32>
    %c3_42 = arith.constant 3 : index
    %c0_43 = arith.constant 0 : index
    %70 = vector.load %arg2[%c3_42, %c0_43] : memref<9x256xf32, #tpu.memory_space<vmem>>, vector<1x256xf32>
    %71 = vector.broadcast %70 : vector<1x256xf32> to vector<16x256xf32>
    %72 = arith.mulf %69, %71 : vector<16x256xf32>
    %c336 = arith.constant 336 : index
    %c0_44 = arith.constant 0 : index
    %73 = vector.load %arg14[%c336, %c0_44] : memref<864x256xf32, #tpu.memory_space<vmem>>, vector<16x256xf32>
    tpu.vector_store %arg14[%c336, %c0_44], %72 {strides = array<i32>} : memref<864x256xf32, #tpu.memory_space<vmem>>, vector<16x256xf32>,
    %c352 = arith.constant 352 : index
    %c0_45 = arith.constant 0 : index
    %74 = vector.load %arg14[%c352, %c0_45] : memref<864x256xf32, #tpu.memory_space<vmem>>, vector<16x256xf32>
    tpu.vector_store %arg14[%c352, %c0_45], %53 {strides = array<i32>} : memref<864x256xf32, #tpu.memory_space<vmem>>, vector<16x256xf32>,
    %c255_i32_46 = arith.constant 255 : i32
    %75 = tpu.dynamic_rotate %53 by %c255_i32_46 dim 1 : vector<16x256xf32>, i32 -> vector<16x256xf32>
    %c5_47 = arith.constant 5 : index
    %c0_48 = arith.constant 0 : index
    %76 = vector.load %arg2[%c5_47, %c0_48] : memref<9x256xf32, #tpu.memory_space<vmem>>, vector<1x256xf32>
    %77 = vector.broadcast %76 : vector<1x256xf32> to vector<16x256xf32>
    %78 = arith.mulf %75, %77 : vector<16x256xf32>
    %c368 = arith.constant 368 : index
    %c0_49 = arith.constant 0 : index
    %79 = vector.load %arg14[%c368, %c0_49] : memref<864x256xf32, #tpu.memory_space<vmem>>, vector<16x256xf32>
    tpu.vector_store %arg14[%c368, %c0_49], %78 {strides = array<i32>} : memref<864x256xf32, #tpu.memory_space<vmem>>, vector<16x256xf32>,
    %c241_i32_50 = arith.constant 241 : i32
    %80 = tpu.dynamic_rotate %53 by %c241_i32_50 dim 1 : vector<16x256xf32>, i32 -> vector<16x256xf32>
    %c6_51 = arith.constant 6 : index
    %c0_52 = arith.constant 0 : index
    %81 = vector.load %arg2[%c6_51, %c0_52] : memref<9x256xf32, #tpu.memory_space<vmem>>, vector<1x256xf32>
    %82 = vector.broadcast %81 : vector<1x256xf32> to vector<16x256xf32>
    %83 = arith.mulf %80, %82 : vector<16x256xf32>
    %c384 = arith.constant 384 : index
    %c0_53 = arith.constant 0 : index
    %84 = vector.load %arg14[%c384, %c0_53] : memref<864x256xf32, #tpu.memory_space<vmem>>, vector<16x256xf32>
    tpu.vector_store %arg14[%c384, %c0_53], %83 {strides = array<i32>} : memref<864x256xf32, #tpu.memory_space<vmem>>, vector<16x256xf32>,
    %c240_i32_54 = arith.constant 240 : i32
    %85 = tpu.dynamic_rotate %53 by %c240_i32_54 dim 1 : vector<16x256xf32>, i32 -> vector<16x256xf32>
    %c7_55 = arith.constant 7 : index
    %c0_56 = arith.constant 0 : index
    %86 = vector.load %arg2[%c7_55, %c0_56] : memref<9x256xf32, #tpu.memory_space<vmem>>, vector<1x256xf32>
    %87 = vector.broadcast %86 : vector<1x256xf32> to vector<16x256xf32>
    %88 = arith.mulf %85, %87 : vector<16x256xf32>
    %c400 = arith.constant 400 : index
    %c0_57 = arith.constant 0 : index
    %89 = vector.load %arg14[%c400, %c0_57] : memref<864x256xf32, #tpu.memory_space<vmem>>, vector<16x256xf32>
    tpu.vector_store %arg14[%c400, %c0_57], %88 {strides = array<i32>} : memref<864x256xf32, #tpu.memory_space<vmem>>, vector<16x256xf32>,
    %c239_i32_58 = arith.constant 239 : i32
    %90 = tpu.dynamic_rotate %53 by %c239_i32_58 dim 1 : vector<16x256xf32>, i32 -> vector<16x256xf32>
    %c8_59 = arith.constant 8 : index
    %c0_60 = arith.constant 0 : index
    %91 = vector.load %arg2[%c8_59, %c0_60] : memref<9x256xf32, #tpu.memory_space<vmem>>, vector<1x256xf32>
    %92 = vector.broadcast %91 : vector<1x256xf32> to vector<16x256xf32>
    %93 = arith.mulf %90, %92 : vector<16x256xf32>
    %c416 = arith.constant 416 : index
    %c0_61 = arith.constant 0 : index
    %94 = vector.load %arg14[%c416, %c0_61] : memref<864x256xf32, #tpu.memory_space<vmem>>, vector<16x256xf32>
    tpu.vector_store %arg14[%c416, %c0_61], %93 {strides = array<i32>} : memref<864x256xf32, #tpu.memory_space<vmem>>, vector<16x256xf32>,
    %c0_62 = arith.constant 0 : index
    %c0_63 = arith.constant 0 : index
    %95 = vector.load %arg5[%c0_62, %c0_63] : memref<16x432xf32, #tpu.memory_space<vmem>>, vector<16x432xf32>
    %c0_64 = arith.constant 0 : index
    %c0_65 = arith.constant 0 : index
    %96 = vector.load %arg14[%c0_64, %c0_65] : memref<864x256xf32, #tpu.memory_space<vmem>>, vector<432x256xf32>
    %cst_66 = arith.constant dense<0.000000e+00> : vector<16x256xf32>
    %97 = tpu.matmul %95, %96, %cst_66 {dimension_numbers = #tpu.dot_dimension_numbers<[1], [0], [0], [1], [0, 0, 1, 1], [], []>} : vector<16x432xf32>, vector<432x256xf32>, vector<16x256xf32> -> vector<16x256xf32>
    %c0_67 = arith.constant 0 : index
    %c0_68 = arith.constant 0 : index
    %98 = vector.load %arg6[%c0_67, %c0_68] : memref<16x1xf32, #tpu.memory_space<vmem>>, vector<16x1xf32>
    %99 = vector.broadcast %98 : vector<16x1xf32> to vector<16x256xf32>
    %100 = arith.addf %97, %99 : vector<16x256xf32>
    %cst_69 = arith.constant 0.000000e+00 : f32
    %101 = vector.broadcast %cst_69 : f32 to vector<16x256xf32>
    %102 = arith.cmpf oge, %100, %101 : vector<16x256xf32>
    %cst_70 = arith.constant 2.000000e-01 : f32
    %103 = vector.broadcast %cst_70 : f32 to vector<16x256xf32>
    %104 = arith.mulf %103, %100 : vector<16x256xf32>
    %105 = arith.select %102, %100, %104 : vector<16x256xi1>, vector<16x256xf32>
    %c17_i32_71 = arith.constant 17 : i32
    %106 = tpu.dynamic_rotate %105 by %c17_i32_71 dim 1 : vector<16x256xf32>, i32 -> vector<16x256xf32>
    %c0_72 = arith.constant 0 : index
    %c0_73 = arith.constant 0 : index
    %107 = vector.load %arg2[%c0_72, %c0_73] : memref<9x256xf32, #tpu.memory_space<vmem>>, vector<1x256xf32>
    %108 = vector.broadcast %107 : vector<1x256xf32> to vector<16x256xf32>
    %109 = arith.mulf %106, %108 : vector<16x256xf32>
    %c432 = arith.constant 432 : index
    %c0_74 = arith.constant 0 : index
    %110 = vector.load %arg14[%c432, %c0_74] : memref<864x256xf32, #tpu.memory_space<vmem>>, vector<16x256xf32>
    tpu.vector_store %arg14[%c432, %c0_74], %109 {strides = array<i32>} : memref<864x256xf32, #tpu.memory_space<vmem>>, vector<16x256xf32>,
    %c16_i32_75 = arith.constant 16 : i32
    %111 = tpu.dynamic_rotate %105 by %c16_i32_75 dim 1 : vector<16x256xf32>, i32 -> vector<16x256xf32>
    %c1_76 = arith.constant 1 : index
    %c0_77 = arith.constant 0 : index
    %112 = vector.load %arg2[%c1_76, %c0_77] : memref<9x256xf32, #tpu.memory_space<vmem>>, vector<1x256xf32>
    %113 = vector.broadcast %112 : vector<1x256xf32> to vector<16x256xf32>
    %114 = arith.mulf %111, %113 : vector<16x256xf32>
    %c448 = arith.constant 448 : index
    %c0_78 = arith.constant 0 : index
    %115 = vector.load %arg14[%c448, %c0_78] : memref<864x256xf32, #tpu.memory_space<vmem>>, vector<16x256xf32>
    tpu.vector_store %arg14[%c448, %c0_78], %114 {strides = array<i32>} : memref<864x256xf32, #tpu.memory_space<vmem>>, vector<16x256xf32>,
    %c15_i32_79 = arith.constant 15 : i32
    %116 = tpu.dynamic_rotate %105 by %c15_i32_79 dim 1 : vector<16x256xf32>, i32 -> vector<16x256xf32>
    %c2_80 = arith.constant 2 : index
    %c0_81 = arith.constant 0 : index
    %117 = vector.load %arg2[%c2_80, %c0_81] : memref<9x256xf32, #tpu.memory_space<vmem>>, vector<1x256xf32>
    %118 = vector.broadcast %117 : vector<1x256xf32> to vector<16x256xf32>
    %119 = arith.mulf %116, %118 : vector<16x256xf32>
    %c464 = arith.constant 464 : index
    %c0_82 = arith.constant 0 : index
    %120 = vector.load %arg14[%c464, %c0_82] : memref<864x256xf32, #tpu.memory_space<vmem>>, vector<16x256xf32>
    tpu.vector_store %arg14[%c464, %c0_82], %119 {strides = array<i32>} : memref<864x256xf32, #tpu.memory_space<vmem>>, vector<16x256xf32>,
    %c1_i32_83 = arith.constant 1 : i32
    %121 = tpu.dynamic_rotate %105 by %c1_i32_83 dim 1 : vector<16x256xf32>, i32 -> vector<16x256xf32>
    %c3_84 = arith.constant 3 : index
    %c0_85 = arith.constant 0 : index
    %122 = vector.load %arg2[%c3_84, %c0_85] : memref<9x256xf32, #tpu.memory_space<vmem>>, vector<1x256xf32>
    %123 = vector.broadcast %122 : vector<1x256xf32> to vector<16x256xf32>
    %124 = arith.mulf %121, %123 : vector<16x256xf32>
    %c480 = arith.constant 480 : index
    %c0_86 = arith.constant 0 : index
    %125 = vector.load %arg14[%c480, %c0_86] : memref<864x256xf32, #tpu.memory_space<vmem>>, vector<16x256xf32>
    tpu.vector_store %arg14[%c480, %c0_86], %124 {strides = array<i32>} : memref<864x256xf32, #tpu.memory_space<vmem>>, vector<16x256xf32>,
    %c496 = arith.constant 496 : index
    %c0_87 = arith.constant 0 : index
    %126 = vector.load %arg14[%c496, %c0_87] : memref<864x256xf32, #tpu.memory_space<vmem>>, vector<16x256xf32>
    tpu.vector_store %arg14[%c496, %c0_87], %105 {strides = array<i32>} : memref<864x256xf32, #tpu.memory_space<vmem>>, vector<16x256xf32>,
    %c255_i32_88 = arith.constant 255 : i32
    %127 = tpu.dynamic_rotate %105 by %c255_i32_88 dim 1 : vector<16x256xf32>, i32 -> vector<16x256xf32>
    %c5_89 = arith.constant 5 : index
    %c0_90 = arith.constant 0 : index
    %128 = vector.load %arg2[%c5_89, %c0_90] : memref<9x256xf32, #tpu.memory_space<vmem>>, vector<1x256xf32>
    %129 = vector.broadcast %128 : vector<1x256xf32> to vector<16x256xf32>
    %130 = arith.mulf %127, %129 : vector<16x256xf32>
    %c512 = arith.constant 512 : index
    %c0_91 = arith.constant 0 : index
    %131 = vector.load %arg14[%c512, %c0_91] : memref<864x256xf32, #tpu.memory_space<vmem>>, vector<16x256xf32>
    tpu.vector_store %arg14[%c512, %c0_91], %130 {strides = array<i32>} : memref<864x256xf32, #tpu.memory_space<vmem>>, vector<16x256xf32>,
    %c241_i32_92 = arith.constant 241 : i32
    %132 = tpu.dynamic_rotate %105 by %c241_i32_92 dim 1 : vector<16x256xf32>, i32 -> vector<16x256xf32>
    %c6_93 = arith.constant 6 : index
    %c0_94 = arith.constant 0 : index
    %133 = vector.load %arg2[%c6_93, %c0_94] : memref<9x256xf32, #tpu.memory_space<vmem>>, vector<1x256xf32>
    %134 = vector.broadcast %133 : vector<1x256xf32> to vector<16x256xf32>
    %135 = arith.mulf %132, %134 : vector<16x256xf32>
    %c528 = arith.constant 528 : index
    %c0_95 = arith.constant 0 : index
    %136 = vector.load %arg14[%c528, %c0_95] : memref<864x256xf32, #tpu.memory_space<vmem>>, vector<16x256xf32>
    tpu.vector_store %arg14[%c528, %c0_95], %135 {strides = array<i32>} : memref<864x256xf32, #tpu.memory_space<vmem>>, vector<16x256xf32>,
    %c240_i32_96 = arith.constant 240 : i32
    %137 = tpu.dynamic_rotate %105 by %c240_i32_96 dim 1 : vector<16x256xf32>, i32 -> vector<16x256xf32>
    %c7_97 = arith.constant 7 : index
    %c0_98 = arith.constant 0 : index
    %138 = vector.load %arg2[%c7_97, %c0_98] : memref<9x256xf32, #tpu.memory_space<vmem>>, vector<1x256xf32>
    %139 = vector.broadcast %138 : vector<1x256xf32> to vector<16x256xf32>
    %140 = arith.mulf %137, %139 : vector<16x256xf32>
    %c544 = arith.constant 544 : index
    %c0_99 = arith.constant 0 : index
    %141 = vector.load %arg14[%c544, %c0_99] : memref<864x256xf32, #tpu.memory_space<vmem>>, vector<16x256xf32>
    tpu.vector_store %arg14[%c544, %c0_99], %140 {strides = array<i32>} : memref<864x256xf32, #tpu.memory_space<vmem>>, vector<16x256xf32>,
    %c239_i32_100 = arith.constant 239 : i32
    %142 = tpu.dynamic_rotate %105 by %c239_i32_100 dim 1 : vector<16x256xf32>, i32 -> vector<16x256xf32>
    %c8_101 = arith.constant 8 : index
    %c0_102 = arith.constant 0 : index
    %143 = vector.load %arg2[%c8_101, %c0_102] : memref<9x256xf32, #tpu.memory_space<vmem>>, vector<1x256xf32>
    %144 = vector.broadcast %143 : vector<1x256xf32> to vector<16x256xf32>
    %145 = arith.mulf %142, %144 : vector<16x256xf32>
    %c560 = arith.constant 560 : index
    %c0_103 = arith.constant 0 : index
    %146 = vector.load %arg14[%c560, %c0_103] : memref<864x256xf32, #tpu.memory_space<vmem>>, vector<16x256xf32>
    tpu.vector_store %arg14[%c560, %c0_103], %145 {strides = array<i32>} : memref<864x256xf32, #tpu.memory_space<vmem>>, vector<16x256xf32>,
    %c0_104 = arith.constant 0 : index
    %c0_105 = arith.constant 0 : index
    %147 = vector.load %arg7[%c0_104, %c0_105] : memref<16x576xf32, #tpu.memory_space<vmem>>, vector<16x576xf32>
    %c0_106 = arith.constant 0 : index
    %c0_107 = arith.constant 0 : index
    %148 = vector.load %arg14[%c0_106, %c0_107] : memref<864x256xf32, #tpu.memory_space<vmem>>, vector<576x256xf32>
    %cst_108 = arith.constant dense<0.000000e+00> : vector<16x256xf32>
    %149 = tpu.matmul %147, %148, %cst_108 {dimension_numbers = #tpu.dot_dimension_numbers<[1], [0], [0], [1], [0, 0, 1, 1], [], []>} : vector<16x576xf32>, vector<576x256xf32>, vector<16x256xf32> -> vector<16x256xf32>
    %c0_109 = arith.constant 0 : index
    %c0_110 = arith.constant 0 : index
    %150 = vector.load %arg8[%c0_109, %c0_110] : memref<16x1xf32, #tpu.memory_space<vmem>>, vector<16x1xf32>
    %151 = vector.broadcast %150 : vector<16x1xf32> to vector<16x256xf32>
    %152 = arith.addf %149, %151 : vector<16x256xf32>
    %cst_111 = arith.constant 0.000000e+00 : f32
    %153 = vector.broadcast %cst_111 : f32 to vector<16x256xf32>
    %154 = arith.cmpf oge, %152, %153 : vector<16x256xf32>
    %cst_112 = arith.constant 2.000000e-01 : f32
    %155 = vector.broadcast %cst_112 : f32 to vector<16x256xf32>
    %156 = arith.mulf %155, %152 : vector<16x256xf32>
    %157 = arith.select %154, %152, %156 : vector<16x256xi1>, vector<16x256xf32>
    %c17_i32_113 = arith.constant 17 : i32
    %158 = tpu.dynamic_rotate %157 by %c17_i32_113 dim 1 : vector<16x256xf32>, i32 -> vector<16x256xf32>
    %c0_114 = arith.constant 0 : index
    %c0_115 = arith.constant 0 : index
    %159 = vector.load %arg2[%c0_114, %c0_115] : memref<9x256xf32, #tpu.memory_space<vmem>>, vector<1x256xf32>
    %160 = vector.broadcast %159 : vector<1x256xf32> to vector<16x256xf32>
    %161 = arith.mulf %158, %160 : vector<16x256xf32>
    %c576 = arith.constant 576 : index
    %c0_116 = arith.constant 0 : index
    %162 = vector.load %arg14[%c576, %c0_116] : memref<864x256xf32, #tpu.memory_space<vmem>>, vector<16x256xf32>
    tpu.vector_store %arg14[%c576, %c0_116], %161 {strides = array<i32>} : memref<864x256xf32, #tpu.memory_space<vmem>>, vector<16x256xf32>,
    %c16_i32_117 = arith.constant 16 : i32
    %163 = tpu.dynamic_rotate %157 by %c16_i32_117 dim 1 : vector<16x256xf32>, i32 -> vector<16x256xf32>
    %c1_118 = arith.constant 1 : index
    %c0_119 = arith.constant 0 : index
    %164 = vector.load %arg2[%c1_118, %c0_119] : memref<9x256xf32, #tpu.memory_space<vmem>>, vector<1x256xf32>
    %165 = vector.broadcast %164 : vector<1x256xf32> to vector<16x256xf32>
    %166 = arith.mulf %163, %165 : vector<16x256xf32>
    %c592 = arith.constant 592 : index
    %c0_120 = arith.constant 0 : index
    %167 = vector.load %arg14[%c592, %c0_120] : memref<864x256xf32, #tpu.memory_space<vmem>>, vector<16x256xf32>
    tpu.vector_store %arg14[%c592, %c0_120], %166 {strides = array<i32>} : memref<864x256xf32, #tpu.memory_space<vmem>>, vector<16x256xf32>,
    %c15_i32_121 = arith.constant 15 : i32
    %168 = tpu.dynamic_rotate %157 by %c15_i32_121 dim 1 : vector<16x256xf32>, i32 -> vector<16x256xf32>
    %c2_122 = arith.constant 2 : index
    %c0_123 = arith.constant 0 : index
    %169 = vector.load %arg2[%c2_122, %c0_123] : memref<9x256xf32, #tpu.memory_space<vmem>>, vector<1x256xf32>
    %170 = vector.broadcast %169 : vector<1x256xf32> to vector<16x256xf32>
    %171 = arith.mulf %168, %170 : vector<16x256xf32>
    %c608 = arith.constant 608 : index
    %c0_124 = arith.constant 0 : index
    %172 = vector.load %arg14[%c608, %c0_124] : memref<864x256xf32, #tpu.memory_space<vmem>>, vector<16x256xf32>
    tpu.vector_store %arg14[%c608, %c0_124], %171 {strides = array<i32>} : memref<864x256xf32, #tpu.memory_space<vmem>>, vector<16x256xf32>,
    %c1_i32_125 = arith.constant 1 : i32
    %173 = tpu.dynamic_rotate %157 by %c1_i32_125 dim 1 : vector<16x256xf32>, i32 -> vector<16x256xf32>
    %c3_126 = arith.constant 3 : index
    %c0_127 = arith.constant 0 : index
    %174 = vector.load %arg2[%c3_126, %c0_127] : memref<9x256xf32, #tpu.memory_space<vmem>>, vector<1x256xf32>
    %175 = vector.broadcast %174 : vector<1x256xf32> to vector<16x256xf32>
    %176 = arith.mulf %173, %175 : vector<16x256xf32>
    %c624 = arith.constant 624 : index
    %c0_128 = arith.constant 0 : index
    %177 = vector.load %arg14[%c624, %c0_128] : memref<864x256xf32, #tpu.memory_space<vmem>>, vector<16x256xf32>
    tpu.vector_store %arg14[%c624, %c0_128], %176 {strides = array<i32>} : memref<864x256xf32, #tpu.memory_space<vmem>>, vector<16x256xf32>,
    %c640 = arith.constant 640 : index
    %c0_129 = arith.constant 0 : index
    %178 = vector.load %arg14[%c640, %c0_129] : memref<864x256xf32, #tpu.memory_space<vmem>>, vector<16x256xf32>
    tpu.vector_store %arg14[%c640, %c0_129], %157 {strides = array<i32>} : memref<864x256xf32, #tpu.memory_space<vmem>>, vector<16x256xf32>,
    %c255_i32_130 = arith.constant 255 : i32
    %179 = tpu.dynamic_rotate %157 by %c255_i32_130 dim 1 : vector<16x256xf32>, i32 -> vector<16x256xf32>
    %c5_131 = arith.constant 5 : index
    %c0_132 = arith.constant 0 : index
    %180 = vector.load %arg2[%c5_131, %c0_132] : memref<9x256xf32, #tpu.memory_space<vmem>>, vector<1x256xf32>
    %181 = vector.broadcast %180 : vector<1x256xf32> to vector<16x256xf32>
    %182 = arith.mulf %179, %181 : vector<16x256xf32>
    %c656 = arith.constant 656 : index
    %c0_133 = arith.constant 0 : index
    %183 = vector.load %arg14[%c656, %c0_133] : memref<864x256xf32, #tpu.memory_space<vmem>>, vector<16x256xf32>
    tpu.vector_store %arg14[%c656, %c0_133], %182 {strides = array<i32>} : memref<864x256xf32, #tpu.memory_space<vmem>>, vector<16x256xf32>,
    %c241_i32_134 = arith.constant 241 : i32
    %184 = tpu.dynamic_rotate %157 by %c241_i32_134 dim 1 : vector<16x256xf32>, i32 -> vector<16x256xf32>
    %c6_135 = arith.constant 6 : index
    %c0_136 = arith.constant 0 : index
    %185 = vector.load %arg2[%c6_135, %c0_136] : memref<9x256xf32, #tpu.memory_space<vmem>>, vector<1x256xf32>
    %186 = vector.broadcast %185 : vector<1x256xf32> to vector<16x256xf32>
    %187 = arith.mulf %184, %186 : vector<16x256xf32>
    %c672 = arith.constant 672 : index
    %c0_137 = arith.constant 0 : index
    %188 = vector.load %arg14[%c672, %c0_137] : memref<864x256xf32, #tpu.memory_space<vmem>>, vector<16x256xf32>
    tpu.vector_store %arg14[%c672, %c0_137], %187 {strides = array<i32>} : memref<864x256xf32, #tpu.memory_space<vmem>>, vector<16x256xf32>,
    %c240_i32_138 = arith.constant 240 : i32
    %189 = tpu.dynamic_rotate %157 by %c240_i32_138 dim 1 : vector<16x256xf32>, i32 -> vector<16x256xf32>
    %c7_139 = arith.constant 7 : index
    %c0_140 = arith.constant 0 : index
    %190 = vector.load %arg2[%c7_139, %c0_140] : memref<9x256xf32, #tpu.memory_space<vmem>>, vector<1x256xf32>
    %191 = vector.broadcast %190 : vector<1x256xf32> to vector<16x256xf32>
    %192 = arith.mulf %189, %191 : vector<16x256xf32>
    %c688 = arith.constant 688 : index
    %c0_141 = arith.constant 0 : index
    %193 = vector.load %arg14[%c688, %c0_141] : memref<864x256xf32, #tpu.memory_space<vmem>>, vector<16x256xf32>
    tpu.vector_store %arg14[%c688, %c0_141], %192 {strides = array<i32>} : memref<864x256xf32, #tpu.memory_space<vmem>>, vector<16x256xf32>,
    %c239_i32_142 = arith.constant 239 : i32
    %194 = tpu.dynamic_rotate %157 by %c239_i32_142 dim 1 : vector<16x256xf32>, i32 -> vector<16x256xf32>
    %c8_143 = arith.constant 8 : index
    %c0_144 = arith.constant 0 : index
    %195 = vector.load %arg2[%c8_143, %c0_144] : memref<9x256xf32, #tpu.memory_space<vmem>>, vector<1x256xf32>
    %196 = vector.broadcast %195 : vector<1x256xf32> to vector<16x256xf32>
    %197 = arith.mulf %194, %196 : vector<16x256xf32>
    %c704 = arith.constant 704 : index
    %c0_145 = arith.constant 0 : index
    %198 = vector.load %arg14[%c704, %c0_145] : memref<864x256xf32, #tpu.memory_space<vmem>>, vector<16x256xf32>
    tpu.vector_store %arg14[%c704, %c0_145], %197 {strides = array<i32>} : memref<864x256xf32, #tpu.memory_space<vmem>>, vector<16x256xf32>,
    %c0_146 = arith.constant 0 : index
    %c0_147 = arith.constant 0 : index
    %199 = vector.load %arg9[%c0_146, %c0_147] : memref<16x720xf32, #tpu.memory_space<vmem>>, vector<16x720xf32>
    %c0_148 = arith.constant 0 : index
    %c0_149 = arith.constant 0 : index
    %200 = vector.load %arg14[%c0_148, %c0_149] : memref<864x256xf32, #tpu.memory_space<vmem>>, vector<720x256xf32>
    %cst_150 = arith.constant dense<0.000000e+00> : vector<16x256xf32>
    %201 = tpu.matmul %199, %200, %cst_150 {dimension_numbers = #tpu.dot_dimension_numbers<[1], [0], [0], [1], [0, 0, 1, 1], [], []>} : vector<16x720xf32>, vector<720x256xf32>, vector<16x256xf32> -> vector<16x256xf32>
    %c0_151 = arith.constant 0 : index
    %c0_152 = arith.constant 0 : index
    %202 = vector.load %arg10[%c0_151, %c0_152] : memref<16x1xf32, #tpu.memory_space<vmem>>, vector<16x1xf32>
    %203 = vector.broadcast %202 : vector<16x1xf32> to vector<16x256xf32>
    %204 = arith.addf %201, %203 : vector<16x256xf32>
    %cst_153 = arith.constant 0.000000e+00 : f32
    %205 = vector.broadcast %cst_153 : f32 to vector<16x256xf32>
    %206 = arith.cmpf oge, %204, %205 : vector<16x256xf32>
    %cst_154 = arith.constant 2.000000e-01 : f32
    %207 = vector.broadcast %cst_154 : f32 to vector<16x256xf32>
    %208 = arith.mulf %207, %204 : vector<16x256xf32>
    %209 = arith.select %206, %204, %208 : vector<16x256xi1>, vector<16x256xf32>
    %c17_i32_155 = arith.constant 17 : i32
    %210 = tpu.dynamic_rotate %209 by %c17_i32_155 dim 1 : vector<16x256xf32>, i32 -> vector<16x256xf32>
    %c0_156 = arith.constant 0 : index
    %c0_157 = arith.constant 0 : index
    %211 = vector.load %arg2[%c0_156, %c0_157] : memref<9x256xf32, #tpu.memory_space<vmem>>, vector<1x256xf32>
    %212 = vector.broadcast %211 : vector<1x256xf32> to vector<16x256xf32>
    %213 = arith.mulf %210, %212 : vector<16x256xf32>
    %c720 = arith.constant 720 : index
    %c0_158 = arith.constant 0 : index
    %214 = vector.load %arg14[%c720, %c0_158] : memref<864x256xf32, #tpu.memory_space<vmem>>, vector<16x256xf32>
    tpu.vector_store %arg14[%c720, %c0_158], %213 {strides = array<i32>} : memref<864x256xf32, #tpu.memory_space<vmem>>, vector<16x256xf32>,
    %c16_i32_159 = arith.constant 16 : i32
    %215 = tpu.dynamic_rotate %209 by %c16_i32_159 dim 1 : vector<16x256xf32>, i32 -> vector<16x256xf32>
    %c1_160 = arith.constant 1 : index
    %c0_161 = arith.constant 0 : index
    %216 = vector.load %arg2[%c1_160, %c0_161] : memref<9x256xf32, #tpu.memory_space<vmem>>, vector<1x256xf32>
    %217 = vector.broadcast %216 : vector<1x256xf32> to vector<16x256xf32>
    %218 = arith.mulf %215, %217 : vector<16x256xf32>
    %c736 = arith.constant 736 : index
    %c0_162 = arith.constant 0 : index
    %219 = vector.load %arg14[%c736, %c0_162] : memref<864x256xf32, #tpu.memory_space<vmem>>, vector<16x256xf32>
    tpu.vector_store %arg14[%c736, %c0_162], %218 {strides = array<i32>} : memref<864x256xf32, #tpu.memory_space<vmem>>, vector<16x256xf32>,
    %c15_i32_163 = arith.constant 15 : i32
    %220 = tpu.dynamic_rotate %209 by %c15_i32_163 dim 1 : vector<16x256xf32>, i32 -> vector<16x256xf32>
    %c2_164 = arith.constant 2 : index
    %c0_165 = arith.constant 0 : index
    %221 = vector.load %arg2[%c2_164, %c0_165] : memref<9x256xf32, #tpu.memory_space<vmem>>, vector<1x256xf32>
    %222 = vector.broadcast %221 : vector<1x256xf32> to vector<16x256xf32>
    %223 = arith.mulf %220, %222 : vector<16x256xf32>
    %c752 = arith.constant 752 : index
    %c0_166 = arith.constant 0 : index
    %224 = vector.load %arg14[%c752, %c0_166] : memref<864x256xf32, #tpu.memory_space<vmem>>, vector<16x256xf32>
    tpu.vector_store %arg14[%c752, %c0_166], %223 {strides = array<i32>} : memref<864x256xf32, #tpu.memory_space<vmem>>, vector<16x256xf32>,
    %c1_i32_167 = arith.constant 1 : i32
    %225 = tpu.dynamic_rotate %209 by %c1_i32_167 dim 1 : vector<16x256xf32>, i32 -> vector<16x256xf32>
    %c3_168 = arith.constant 3 : index
    %c0_169 = arith.constant 0 : index
    %226 = vector.load %arg2[%c3_168, %c0_169] : memref<9x256xf32, #tpu.memory_space<vmem>>, vector<1x256xf32>
    %227 = vector.broadcast %226 : vector<1x256xf32> to vector<16x256xf32>
    %228 = arith.mulf %225, %227 : vector<16x256xf32>
    %c768 = arith.constant 768 : index
    %c0_170 = arith.constant 0 : index
    %229 = vector.load %arg14[%c768, %c0_170] : memref<864x256xf32, #tpu.memory_space<vmem>>, vector<16x256xf32>
    tpu.vector_store %arg14[%c768, %c0_170], %228 {strides = array<i32>} : memref<864x256xf32, #tpu.memory_space<vmem>>, vector<16x256xf32>,
    %c784 = arith.constant 784 : index
    %c0_171 = arith.constant 0 : index
    %230 = vector.load %arg14[%c784, %c0_171] : memref<864x256xf32, #tpu.memory_space<vmem>>, vector<16x256xf32>
    tpu.vector_store %arg14[%c784, %c0_171], %209 {strides = array<i32>} : memref<864x256xf32, #tpu.memory_space<vmem>>, vector<16x256xf32>,
    %c255_i32_172 = arith.constant 255 : i32
    %231 = tpu.dynamic_rotate %209 by %c255_i32_172 dim 1 : vector<16x256xf32>, i32 -> vector<16x256xf32>
    %c5_173 = arith.constant 5 : index
    %c0_174 = arith.constant 0 : index
    %232 = vector.load %arg2[%c5_173, %c0_174] : memref<9x256xf32, #tpu.memory_space<vmem>>, vector<1x256xf32>
    %233 = vector.broadcast %232 : vector<1x256xf32> to vector<16x256xf32>
    %234 = arith.mulf %231, %233 : vector<16x256xf32>
    %c800 = arith.constant 800 : index
    %c0_175 = arith.constant 0 : index
    %235 = vector.load %arg14[%c800, %c0_175] : memref<864x256xf32, #tpu.memory_space<vmem>>, vector<16x256xf32>
    tpu.vector_store %arg14[%c800, %c0_175], %234 {strides = array<i32>} : memref<864x256xf32, #tpu.memory_space<vmem>>, vector<16x256xf32>,
    %c241_i32_176 = arith.constant 241 : i32
    %236 = tpu.dynamic_rotate %209 by %c241_i32_176 dim 1 : vector<16x256xf32>, i32 -> vector<16x256xf32>
    %c6_177 = arith.constant 6 : index
    %c0_178 = arith.constant 0 : index
    %237 = vector.load %arg2[%c6_177, %c0_178] : memref<9x256xf32, #tpu.memory_space<vmem>>, vector<1x256xf32>
    %238 = vector.broadcast %237 : vector<1x256xf32> to vector<16x256xf32>
    %239 = arith.mulf %236, %238 : vector<16x256xf32>
    %c816 = arith.constant 816 : index
    %c0_179 = arith.constant 0 : index
    %240 = vector.load %arg14[%c816, %c0_179] : memref<864x256xf32, #tpu.memory_space<vmem>>, vector<16x256xf32>
    tpu.vector_store %arg14[%c816, %c0_179], %239 {strides = array<i32>} : memref<864x256xf32, #tpu.memory_space<vmem>>, vector<16x256xf32>,
    %c240_i32_180 = arith.constant 240 : i32
    %241 = tpu.dynamic_rotate %209 by %c240_i32_180 dim 1 : vector<16x256xf32>, i32 -> vector<16x256xf32>
    %c7_181 = arith.constant 7 : index
    %c0_182 = arith.constant 0 : index
    %242 = vector.load %arg2[%c7_181, %c0_182] : memref<9x256xf32, #tpu.memory_space<vmem>>, vector<1x256xf32>
    %243 = vector.broadcast %242 : vector<1x256xf32> to vector<16x256xf32>
    %244 = arith.mulf %241, %243 : vector<16x256xf32>
    %c832 = arith.constant 832 : index
    %c0_183 = arith.constant 0 : index
    %245 = vector.load %arg14[%c832, %c0_183] : memref<864x256xf32, #tpu.memory_space<vmem>>, vector<16x256xf32>
    tpu.vector_store %arg14[%c832, %c0_183], %244 {strides = array<i32>} : memref<864x256xf32, #tpu.memory_space<vmem>>, vector<16x256xf32>,
    %c239_i32_184 = arith.constant 239 : i32
    %246 = tpu.dynamic_rotate %209 by %c239_i32_184 dim 1 : vector<16x256xf32>, i32 -> vector<16x256xf32>
    %c8_185 = arith.constant 8 : index
    %c0_186 = arith.constant 0 : index
    %247 = vector.load %arg2[%c8_185, %c0_186] : memref<9x256xf32, #tpu.memory_space<vmem>>, vector<1x256xf32>
    %248 = vector.broadcast %247 : vector<1x256xf32> to vector<16x256xf32>
    %249 = arith.mulf %246, %248 : vector<16x256xf32>
    %c848 = arith.constant 848 : index
    %c0_187 = arith.constant 0 : index
    %250 = vector.load %arg14[%c848, %c0_187] : memref<864x256xf32, #tpu.memory_space<vmem>>, vector<16x256xf32>
    tpu.vector_store %arg14[%c848, %c0_187], %249 {strides = array<i32>} : memref<864x256xf32, #tpu.memory_space<vmem>>, vector<16x256xf32>,
    %c0_188 = arith.constant 0 : index
    %c0_189 = arith.constant 0 : index
    %251 = vector.load %arg11[%c0_188, %c0_189] : memref<32x864xf32, #tpu.memory_space<vmem>>, vector<32x864xf32>
    %c0_190 = arith.constant 0 : index
    %c0_191 = arith.constant 0 : index
    %252 = vector.load %arg14[%c0_190, %c0_191] : memref<864x256xf32, #tpu.memory_space<vmem>>, vector<864x256xf32>
    %cst_192 = arith.constant dense<0.000000e+00> : vector<32x256xf32>
    %253 = tpu.matmul %251, %252, %cst_192 {dimension_numbers = #tpu.dot_dimension_numbers<[1], [0], [0], [1], [0, 0, 1, 1], [], []>} : vector<32x864xf32>, vector<864x256xf32>, vector<32x256xf32> -> vector<32x256xf32>
    %c0_193 = arith.constant 0 : index
    %c0_194 = arith.constant 0 : index
    %254 = vector.load %arg12[%c0_193, %c0_194] : memref<32x1xf32, #tpu.memory_space<vmem>>, vector<32x1xf32>
    %255 = vector.broadcast %254 : vector<32x1xf32> to vector<32x256xf32>
    %256 = arith.addf %253, %255 : vector<32x256xf32>
    %cst_195 = arith.constant 2.000000e-01 : f32
    %257 = vector.broadcast %cst_195 : f32 to vector<32x256xf32>
    %258 = arith.mulf %256, %257 : vector<32x256xf32>
    %259 = arith.addf %258, %1 : vector<32x256xf32>
    %c0_196 = arith.constant 0 : index
    %c0_197 = arith.constant 0 : index
    %c0_198 = arith.constant 0 : index
    %260 = vector.load %arg13[%c0_196, %c0_197, %c0_198] : memref<1x32x256xf32, #tpu.memory_space<vmem>>, vector<1x32x256xf32>
    %261 = vector.shape_cast %260 : vector<1x32x256xf32> to vector<32x256xf32>
    %262 = vector.shape_cast %259 : vector<32x256xf32> to vector<1x32x256xf32>
    tpu.vector_store %arg13[%c0_196, %c0_197, %c0_198], %262 {strides = array<i32>} : memref<1x32x256xf32, #tpu.memory_space<vmem>>, vector<1x32x256xf32>,
    return
  }
  func.func @transform_0(%arg0: i32) -> (i32, i32, i32) {
    %c0_i32 = arith.constant 0 : i32
    %c0_i32_0 = arith.constant 0 : i32
    %c0_i32_1 = arith.constant 0 : i32
    return %arg0, %c0_i32, %c0_i32_0 : i32, i32, i32
  }
  func.func @transform_1(%arg0: i32) -> (i32, i32) {
    %c0_i32 = arith.constant 0 : i32
    %c0_i32_0 = arith.constant 0 : i32
    %c0_i32_1 = arith.constant 0 : i32
    return %c0_i32, %c0_i32_0 : i32, i32
  }
  func.func @transform_2(%arg0: i32) -> (i32, i32) {
    %c0_i32 = arith.constant 0 : i32
    %c0_i32_0 = arith.constant 0 : i32
    %c0_i32_1 = arith.constant 0 : i32
    return %c0_i32, %c0_i32_0 : i32, i32
  }
  func.func @transform_3(%arg0: i32) -> (i32, i32) {
    %c0_i32 = arith.constant 0 : i32
    %c0_i32_0 = arith.constant 0 : i32
    %c0_i32_1 = arith.constant 0 : i32
    return %c0_i32, %c0_i32_0 : i32, i32
  }
  func.func @transform_4(%arg0: i32) -> (i32, i32) {
    %c0_i32 = arith.constant 0 : i32
    %c0_i32_0 = arith.constant 0 : i32
    %c0_i32_1 = arith.constant 0 : i32
    return %c0_i32, %c0_i32_0 : i32, i32
  }
  func.func @transform_5(%arg0: i32) -> (i32, i32) {
    %c0_i32 = arith.constant 0 : i32
    %c0_i32_0 = arith.constant 0 : i32
    %c0_i32_1 = arith.constant 0 : i32
    return %c0_i32, %c0_i32_0 : i32, i32
  }
  func.func @transform_6(%arg0: i32) -> (i32, i32) {
    %c0_i32 = arith.constant 0 : i32
    %c0_i32_0 = arith.constant 0 : i32
    %c0_i32_1 = arith.constant 0 : i32
    return %c0_i32, %c0_i32_0 : i32, i32
  }
  func.func @transform_7(%arg0: i32) -> (i32, i32) {
    %c0_i32 = arith.constant 0 : i32
    %c0_i32_0 = arith.constant 0 : i32
    %c0_i32_1 = arith.constant 0 : i32
    return %c0_i32, %c0_i32_0 : i32, i32
  }
  func.func @transform_8(%arg0: i32) -> (i32, i32) {
    %c0_i32 = arith.constant 0 : i32
    %c0_i32_0 = arith.constant 0 : i32
    %c0_i32_1 = arith.constant 0 : i32
    return %c0_i32, %c0_i32_0 : i32, i32
  }
  func.func @transform_9(%arg0: i32) -> (i32, i32) {
    %c0_i32 = arith.constant 0 : i32
    %c0_i32_0 = arith.constant 0 : i32
    %c0_i32_1 = arith.constant 0 : i32
    return %c0_i32, %c0_i32_0 : i32, i32
  }
  func.func @transform_10(%arg0: i32) -> (i32, i32) {
    %c0_i32 = arith.constant 0 : i32
    %c0_i32_0 = arith.constant 0 : i32
    %c0_i32_1 = arith.constant 0 : i32
    return %c0_i32, %c0_i32_0 : i32, i32
  }
  func.func @transform_11(%arg0: i32) -> (i32, i32) {
    %c0_i32 = arith.constant 0 : i32
    %c0_i32_0 = arith.constant 0 : i32
    %c0_i32_1 = arith.constant 0 : i32
    return %c0_i32, %c0_i32_0 : i32, i32
  }
  func.func @transform_12(%arg0: i32) -> (i32, i32, i32) {
    %c0_i32 = arith.constant 0 : i32
    %c0_i32_0 = arith.constant 0 : i32
    %c0_i32_1 = arith.constant 0 : i32
    return %arg0, %c0_i32, %c0_i32_0 : i32, i32, i32
  }
}

</mosaic_0001>

<llo_original>
// kernel: tpu_custom_call.1
$region0: #{tpu_custom_call.1}
  #allocation0 [shape = 'u32[]', space=smem, size = 0x4, offset = 0x4, fixed_abs, tag = 'smem constant byte address 0x4 - core index']
  #allocation1 [shape = 'u32[144,128]{1,0:T(1,128)}', space=vmem, size = 0x12000, scoped, tag = 'internal scratch']
  #allocation2 [shape = 'f32[864,256]{1,0:T(8,128)}', space=vmem, size = 0xd8000, scoped, tag = 'scratch operand']
  %s0 = inlined_call_operand.hbm [shape: f32[2,32,256], index: 0, kind: input, shape index: {}]
  %s1 = inlined_call_operand.vmem [shape: f32[9,256], index: 1, kind: input, shape index: {}]
  %s2 = inlined_call_operand.hbm [shape: f32[16,288], index: 2, kind: input, shape index: {}]
  %s3 = inlined_call_operand.vmem [shape: f32[16,1], index: 3, kind: input, shape index: {}]
  %s4 = inlined_call_operand.hbm [shape: f32[16,432], index: 4, kind: input, shape index: {}]
  %s5 = inlined_call_operand.vmem [shape: f32[16,1], index: 5, kind: input, shape index: {}]
  %s6 = inlined_call_operand.hbm [shape: f32[16,576], index: 6, kind: input, shape index: {}]
  %s7 = inlined_call_operand.vmem [shape: f32[16,1], index: 7, kind: input, shape index: {}]
  %s8 = inlined_call_operand.vmem [shape: f32[16,720], index: 8, kind: input, shape index: {}]
  %s9 = inlined_call_operand.vmem [shape: f32[16,1], index: 9, kind: input, shape index: {}]
  %s10 = inlined_call_operand.hbm [shape: f32[32,864], index: 10, kind: input, shape index: {}]
  %s11 = inlined_call_operand.vmem [shape: f32[32,1], index: 11, kind: input, shape index: {}]
  %s12 = inlined_call_operand.hbm [shape: f32[2,32,256], index: 12, kind: output, shape index: {}]
  %s13 = sld [smem:[#allocation0]]
  $region101: #{tpu_custom_call.1} parent=0
    _
  %s15 = ssub.s32 1, %s13
  %s16 = scalar_select 0, %s15, %s13
  $region1: #{tpu_custom_call.1} parent=0
    #allocation3 [shape = 'u8[65536]{0}', space=vmem, size = 0x10000, scoped, tag = 'input window, operand 0']
    #allocation4 [shape = 's32[2]{0}', space=sflag, size = 0x8, scoped, tag = 'scoped memory for tpu_custom_call.1']
    #allocation5 [shape = 's32[2]{0}', space=sflag, size = 0x8, scoped, tag = 'scoped memory for tpu_custom_call.1']
    #allocation6 [shape = 'u8[24576]{0}', space=vmem, size = 0x6000, scoped, tag = 'input window, operand 2, single buffered']
    #allocation7 [shape = 's32[1]{0}', space=sflag, size = 0x4, scoped, tag = 'scoped memory for tpu_custom_call.1']
    #allocation8 [shape = 'u8[32768]{0}', space=vmem, size = 0x8000, scoped, tag = 'input window, operand 4, single buffered']
    #allocation9 [shape = 'u8[40960]{0}', space=vmem, size = 0xa000, scoped, tag = 'input window, operand 6, single buffered']
    #allocation10 [shape = 's32[1]{0}', space=sflag, size = 0x4, scoped, tag = 'scoped memory for tpu_custom_call.1']
    #allocation11 [shape = 'u8[114688]{0}', space=vmem, size = 0x1c000, scoped, tag = 'input window, operand 10, single buffered']
    #allocation12 [shape = 'u8[65536]{0}', space=vmem, size = 0x10000, scoped, tag = 'output window, operand 0']
    %17 = vsyncpa [#allocation4], 0
    %s18 = scalar_lea.sflag [#allocation4], 1
    %19 = vsyncpa %s18, 0
    %20 = vsyncpa [#allocation7], 0
    %21 = vsyncpa [#allocation10], 0
    %22 = vsyncpa [#allocation5], 0
    %s23 = scalar_lea.sflag [#allocation5], 1
    %24 = vsyncpa %s23, 0
    loop: start=0, step=1, limit=4
    $region2: #{tpu_custom_call.1} parent=1 // loop_pre_header
      _
    $region3: #{tpu_custom_call.1} parent=1 // loop_header
      %s26 = sphi 0, %s30
      %p27 = scmp.ge.s32.totalorder %s26, 4
      %s36 = sphi 0, %s38
      %s39 = sphi 0, %s36
      %s40 = sphi 0, %s39
      %s56 = sphi 0, %s40
      %s60 = sphi 0, %s60
      %s62 = sphi 0, %s60
      %s63 = sphi 0, %s62
      %s77 = sphi 0, %s63
      %s81 = sphi 0, %s81
      %s83 = sphi 0, %s81
      %s84 = sphi 0, %s83
      %s98 = sphi 0, %s84
      %s102 = sphi 0, %s102
      %s104 = sphi 0, %s102
      %s105 = sphi 0, %s104
      %s119 = sphi 0, %s105
      %s123 = sphi 0, %s123
      %s125 = sphi 0, %s123
      %s126 = sphi 0, %s125
      %s140 = sphi 0, %s126
      %s144 = sphi 0, %s144
      %s146 = sphi 0, %s144
      %s147 = sphi 0, %s146
      %s161 = sphi 0, %s147
      %s165 = sphi 0, %s165
      %s167 = sphi 0, %s165
      %s168 = sphi 0, %s167
      %s182 = sphi 0, %s168
      %s186 = sphi 0, %s186
      %s188 = sphi 0, %s186
      %s189 = sphi 0, %s188
      %s203 = sphi 0, %s189
      %s207 = sphi 0, %s207
      %s209 = sphi 0, %s207
      %s210 = sphi 0, %s209
      %s224 = sphi 0, %s210
      %s228 = sphi 0, %s228
      %s230 = sphi 0, %s228
      %s231 = sphi 0, %s230
      %s245 = sphi 0, %s231
      %s249 = sphi 0, %s249
      %s251 = sphi 0, %s249
      %s252 = sphi 0, %s251
      %s266 = sphi 0, %s252
      %s270 = sphi 0, %s270
      %s272 = sphi 0, %s270
      %s273 = sphi 0, %s272
      %s287 = sphi 0, %s273
      %s293 = sphi 0, %s295
      %s296 = sphi 0, %s293
      %s297 = sphi 0, %s296
      %s313 = sphi 0, %s297
    $region4: #{tpu_custom_call.1} parent=1 // loop_header_branch
      %29 = sbr.rel (%p27) target = $region8
    $region5: #{tpu_custom_call.1} parent=1 // loop_body
      %s31 = ssub.s32 %s26, 1
      %s32 = ssub.s32 %s26, 2
      %s33 = sadd.s32 %s26, 1
      %s34 = ssub.s32 %s26, %s33
      %p35 = scmp.eq.s32.totalorder %s34, 0
      %s37 = sadd.s32 %s36, 1
      %s38 = scalar_select %p35, %s36, %s37
      %p41 = pneg %p35
      %p42 = scmp.eq.s32.totalorder %s26, 1
      %p43 = por %p41, %p42
      %p44 = scmp.ne.s32.totalorder %s36, %s39
      %p45 = scmp.eq.s32.totalorder %s26, 0
      %p46 = por %p44, %p45
      %p47 = scmp.ne.s32.totalorder %s36, %s39
      %p48 = scmp.eq.s32.totalorder %s31, 1
      %p49 = por %p47, %p48
      %p50 = scmp.ne.s32.totalorder %s39, %s40
      %p51 = scmp.eq.s32.totalorder %s31, 0
      %p52 = por %p50, %p51
      %p53 = scmp.ne.s32.totalorder %s39, %s40
      %p54 = scmp.eq.s32.totalorder %s32, 1
      %p55 = por %p53, %p54
      %p57 = scmp.ne.s32.totalorder %s40, %s56
      %p58 = scmp.eq.s32.totalorder %s32, 0
      %p59 = por %p57, %p58
      %s61 = sadd.s32 %s60, 1
      %p64 = scmp.eq.s32.totalorder %s26, 1
      %p65 = scmp.ne.s32.totalorder %s60, %s62
      %p66 = scmp.eq.s32.totalorder %s26, 0
      %p67 = por %p65, %p66
      %p68 = scmp.ne.s32.totalorder %s60, %s62
      %p69 = scmp.eq.s32.totalorder %s31, 1
      %p70 = por %p68, %p69
      %p71 = scmp.ne.s32.totalorder %s62, %s63
      %p72 = scmp.eq.s32.totalorder %s31, 0
      %p73 = por %p71, %p72
      %p74 = scmp.ne.s32.totalorder %s62, %s63
      %p75 = scmp.eq.s32.totalorder %s32, 1
      %p76 = por %p74, %p75
      %p78 = scmp.ne.s32.totalorder %s63, %s77
      %p79 = scmp.eq.s32.totalorder %s32, 0
      %p80 = por %p78, %p79
      %s82 = sadd.s32 %s81, 1
      %p85 = scmp.eq.s32.totalorder %s26, 1
      %p86 = scmp.ne.s32.totalorder %s81, %s83
      %p87 = scmp.eq.s32.totalorder %s26, 0
      %p88 = por %p86, %p87
      %p89 = scmp.ne.s32.totalorder %s81, %s83
      %p90 = scmp.eq.s32.totalorder %s31, 1
      %p91 = por %p89, %p90
      %p92 = scmp.ne.s32.totalorder %s83, %s84
      %p93 = scmp.eq.s32.totalorder %s31, 0
      %p94 = por %p92, %p93
      %p95 = scmp.ne.s32.totalorder %s83, %s84
      %p96 = scmp.eq.s32.totalorder %s32, 1
      %p97 = por %p95, %p96
      %p99 = scmp.ne.s32.totalorder %s84, %s98
      %p100 = scmp.eq.s32.totalorder %s32, 0
      %p101 = por %p99, %p100
      %s103 = sadd.s32 %s102, 1
      %p106 = scmp.eq.s32.totalorder %s26, 1
      %p107 = scmp.ne.s32.totalorder %s102, %s104
      %p108 = scmp.eq.s32.totalorder %s26, 0
      %p109 = por %p107, %p108
      %p110 = scmp.ne.s32.totalorder %s102, %s104
      %p111 = scmp.eq.s32.totalorder %s31, 1
      %p112 = por %p110, %p111
      %p113 = scmp.ne.s32.totalorder %s104, %s105
      %p114 = scmp.eq.s32.totalorder %s31, 0
      %p115 = por %p113, %p114
      %p116 = scmp.ne.s32.totalorder %s104, %s105
      %p117 = scmp.eq.s32.totalorder %s32, 1
      %p118 = por %p116, %p117
      %p120 = scmp.ne.s32.totalorder %s105, %s119
      %p121 = scmp.eq.s32.totalorder %s32, 0
      %p122 = por %p120, %p121
      %s124 = sadd.s32 %s123, 1
      %p127 = scmp.eq.s32.totalorder %s26, 1
      %p128 = scmp.ne.s32.totalorder %s123, %s125
      %p129 = scmp.eq.s32.totalorder %s26, 0
      %p130 = por %p128, %p129
      %p131 = scmp.ne.s32.totalorder %s123, %s125
      %p132 = scmp.eq.s32.totalorder %s31, 1
      %p133 = por %p131, %p132
      %p134 = scmp.ne.s32.totalorder %s125, %s126
      %p135 = scmp.eq.s32.totalorder %s31, 0
      %p136 = por %p134, %p135
      %p137 = scmp.ne.s32.totalorder %s125, %s126
      %p138 = scmp.eq.s32.totalorder %s32, 1
      %p139 = por %p137, %p138
      %p141 = scmp.ne.s32.totalorder %s126, %s140
      %p142 = scmp.eq.s32.totalorder %s32, 0
      %p143 = por %p141, %p142
      %s145 = sadd.s32 %s144, 1
      %p148 = scmp.eq.s32.totalorder %s26, 1
      %p149 = scmp.ne.s32.totalorder %s144, %s146
      %p150 = scmp.eq.s32.totalorder %s26, 0
      %p151 = por %p149, %p150
      %p152 = scmp.ne.s32.totalorder %s144, %s146
      %p153 = scmp.eq.s32.totalorder %s31, 1
      %p154 = por %p152, %p153
      %p155 = scmp.ne.s32.totalorder %s146, %s147
      %p156 = scmp.eq.s32.totalorder %s31, 0
      %p157 = por %p155, %p156
      %p158 = scmp.ne.s32.totalorder %s146, %s147
      %p159 = scmp.eq.s32.totalorder %s32, 1
      %p160 = por %p158, %p159
      %p162 = scmp.ne.s32.totalorder %s147, %s161
      %p163 = scmp.eq.s32.totalorder %s32, 0
      %p164 = por %p162, %p163
      %s166 = sadd.s32 %s165, 1
      %p169 = scmp.eq.s32.totalorder %s26, 1
      %p170 = scmp.ne.s32.totalorder %s165, %s167
      %p171 = scmp.eq.s32.totalorder %s26, 0
      %p172 = por %p170, %p171
      %p173 = scmp.ne.s32.totalorder %s165, %s167
      %p174 = scmp.eq.s32.totalorder %s31, 1
      %p175 = por %p173, %p174
      %p176 = scmp.ne.s32.totalorder %s167, %s168
      %p177 = scmp.eq.s32.totalorder %s31, 0
      %p178 = por %p176, %p177
      %p179 = scmp.ne.s32.totalorder %s167, %s168
      %p180 = scmp.eq.s32.totalorder %s32, 1
      %p181 = por %p179, %p180
      %p183 = scmp.ne.s32.totalorder %s168, %s182
      %p184 = scmp.eq.s32.totalorder %s32, 0
      %p185 = por %p183, %p184
      %s187 = sadd.s32 %s186, 1
      %p190 = scmp.eq.s32.totalorder %s26, 1
      %p191 = scmp.ne.s32.totalorder %s186, %s188
      %p192 = scmp.eq.s32.totalorder %s26, 0
      %p193 = por %p191, %p192
      %p194 = scmp.ne.s32.totalorder %s186, %s188
      %p195 = scmp.eq.s32.totalorder %s31, 1
      %p196 = por %p194, %p195
      %p197 = scmp.ne.s32.totalorder %s188, %s189
      %p198 = scmp.eq.s32.totalorder %s31, 0
      %p199 = por %p197, %p198
      %p200 = scmp.ne.s32.totalorder %s188, %s189
      %p201 = scmp.eq.s32.totalorder %s32, 1
      %p202 = por %p200, %p201
      %p204 = scmp.ne.s32.totalorder %s189, %s203
      %p205 = scmp.eq.s32.totalorder %s32, 0
      %p206 = por %p204, %p205
      %s208 = sadd.s32 %s207, 1
      %p211 = scmp.eq.s32.totalorder %s26, 1
      %p212 = scmp.ne.s32.totalorder %s207, %s209
      %p213 = scmp.eq.s32.totalorder %s26, 0
      %p214 = por %p212, %p213
      %p215 = scmp.ne.s32.totalorder %s207, %s209
      %p216 = scmp.eq.s32.totalorder %s31, 1
      %p217 = por %p215, %p216
      %p218 = scmp.ne.s32.totalorder %s209, %s210
      %p219 = scmp.eq.s32.totalorder %s31, 0
      %p220 = por %p218, %p219
      %p221 = scmp.ne.s32.totalorder %s209, %s210
      %p222 = scmp.eq.s32.totalorder %s32, 1
      %p223 = por %p221, %p222
      %p225 = scmp.ne.s32.totalorder %s210, %s224
      %p226 = scmp.eq.s32.totalorder %s32, 0
      %p227 = por %p225, %p226
      %s229 = sadd.s32 %s228, 1
      %p232 = scmp.eq.s32.totalorder %s26, 1
      %p233 = scmp.ne.s32.totalorder %s228, %s230
      %p234 = scmp.eq.s32.totalorder %s26, 0
      %p235 = por %p233, %p234
      %p236 = scmp.ne.s32.totalorder %s228, %s230
      %p237 = scmp.eq.s32.totalorder %s31, 1
      %p238 = por %p236, %p237
      %p239 = scmp.ne.s32.totalorder %s230, %s231
      %p240 = scmp.eq.s32.totalorder %s31, 0
      %p241 = por %p239, %p240
      %p242 = scmp.ne.s32.totalorder %s230, %s231
      %p243 = scmp.eq.s32.totalorder %s32, 1
      %p244 = por %p242, %p243
      %p246 = scmp.ne.s32.totalorder %s231, %s245
      %p247 = scmp.eq.s32.totalorder %s32, 0
      %p248 = por %p246, %p247
      %s250 = sadd.s32 %s249, 1
      %p253 = scmp.eq.s32.totalorder %s26, 1
      %p254 = scmp.ne.s32.totalorder %s249, %s251
      %p255 = scmp.eq.s32.totalorder %s26, 0
      %p256 = por %p254, %p255
      %p257 = scmp.ne.s32.totalorder %s249, %s251
      %p258 = scmp.eq.s32.totalorder %s31, 1
      %p259 = por %p257, %p258
      %p260 = scmp.ne.s32.totalorder %s251, %s252
      %p261 = scmp.eq.s32.totalorder %s31, 0
      %p262 = por %p260, %p261
      %p263 = scmp.ne.s32.totalorder %s251, %s252
      %p264 = scmp.eq.s32.totalorder %s32, 1
      %p265 = por %p263, %p264
      %p267 = scmp.ne.s32.totalorder %s252, %s266
      %p268 = scmp.eq.s32.totalorder %s32, 0
      %p269 = por %p267, %p268
      %s271 = sadd.s32 %s270, 1
      %p274 = scmp.eq.s32.totalorder %s26, 1
      %p275 = scmp.ne.s32.totalorder %s270, %s272
      %p276 = scmp.eq.s32.totalorder %s26, 0
      %p277 = por %p275, %p276
      %p278 = scmp.ne.s32.totalorder %s270, %s272
      %p279 = scmp.eq.s32.totalorder %s31, 1
      %p280 = por %p278, %p279
      %p281 = scmp.ne.s32.totalorder %s272, %s273
      %p282 = scmp.eq.s32.totalorder %s31, 0
      %p283 = por %p281, %p282
      %p284 = scmp.ne.s32.totalorder %s272, %s273
      %p285 = scmp.eq.s32.totalorder %s32, 1
      %p286 = por %p284, %p285
      %p288 = scmp.ne.s32.totalorder %s273, %s287
      %p289 = scmp.eq.s32.totalorder %s32, 0
      %p290 = por %p288, %p289
      %s291 = ssub.s32 %s26, %s33
      %p292 = scmp.eq.s32.totalorder %s291, 0
      %s294 = sadd.s32 %s293, 1
      %s295 = scalar_select %p292, %s293, %s294
      %p298 = pneg %p292
      %p299 = scmp.eq.s32.totalorder %s26, 1
      %p300 = por %p298, %p299
      %p301 = scmp.ne.s32.totalorder %s293, %s296
      %p302 = scmp.eq.s32.totalorder %s26, 0
      %p303 = por %p301, %p302
      %p304 = scmp.ne.s32.totalorder %s293, %s296
      %p305 = scmp.eq.s32.totalorder %s31, 1
      %p306 = por %p304, %p305
      %p307 = scmp.ne.s32.totalorder %s296, %s297
      %p308 = scmp.eq.s32.totalorder %s31, 0
      %p309 = por %p307, %p308
      %p310 = scmp.ne.s32.totalorder %s296, %s297
      %p311 = scmp.eq.s32.totalorder %s32, 1
      %p312 = por %p310, %p311
      %p314 = scmp.ne.s32.totalorder %s297, %s313
      %p315 = scmp.eq.s32.totalorder %s32, 0
      %p316 = por %p314, %p315
      %p317 = scmp.le.s32.totalorder 1, %s26
      %p318 = scmp.lt.s32.totalorder %s26, 3
      %p319 = pnand %p317, %p318
      %p320 = pneg %p319
      // Predicated region
      $region9: #{tpu_custom_call.1} parent=5 // pred_check
        _
      $region10: #{tpu_custom_call.1} parent=5 // pred_check_branch
        %322 = sbr.rel (%p319) target = $region12
      $region11: #{tpu_custom_call.1} parent=5 // pred_region
        %s323 = ssub.s32 %s26, 1
        // Predicated region
        $region13: #{tpu_custom_call.1} parent=11 // pred_check
          %p324 = pneg %p73
        $region14: #{tpu_custom_call.1} parent=11 // pred_check_branch
          %326 = sbr.rel (%p324) target = $region16
        $region15: #{tpu_custom_call.1} parent=11 // pred_region
          _
        $region16: #{tpu_custom_call.1} parent=11 // pred_fallthru
          _
        // Predicated region
        $region17: #{tpu_custom_call.1} parent=11 // pred_check
          %p327 = pneg %p94
        $region18: #{tpu_custom_call.1} parent=11 // pred_check_branch
          %329 = sbr.rel (%p327) target = $region20
        $region19: #{tpu_custom_call.1} parent=11 // pred_region
          %s331 = ssub.s32 768, 768
          %332 = vsyncadd [#allocation7], %s331
          %s333 = sshll.u32 [#allocation6], 4
          %s334 = int_to_ptr.vmem [resolvable:$true] %s333
          %339 = dma.hbm_to_vmem [thread:$0]  %s2, 768, %s334, [#allocation7], 384, 384, 24
        $region20: #{tpu_custom_call.1} parent=11 // pred_fallthru
          _
        // Predicated region
        $region21: #{tpu_custom_call.1} parent=11 // pred_check
          %p340 = pneg %p115
        $region22: #{tpu_custom_call.1} parent=11 // pred_check_branch
          %342 = sbr.rel (%p340) target = $region24
        $region23: #{tpu_custom_call.1} parent=11 // pred_region
          _
        $region24: #{tpu_custom_call.1} parent=11 // pred_fallthru
          _
        // Predicated region
        $region25: #{tpu_custom_call.1} parent=11 // pred_check
          %p343 = pneg %p136
        $region26: #{tpu_custom_call.1} parent=11 // pred_check_branch
          %345 = sbr.rel (%p343) target = $region28
        $region27: #{tpu_custom_call.1} parent=11 // pred_region
          %s347 = ssub.s32 1024, 1024
          %348 = vsyncadd [#allocation7], %s347
          %s349 = sshll.u32 [#allocation8], 4
          %s350 = int_to_ptr.vmem [resolvable:$true] %s349
          %355 = dma.hbm_to_vmem [thread:$0]  %s4, 1024, %s350, [#allocation7], 512, 512, 32
        $region28: #{tpu_custom_call.1} parent=11 // pred_fallthru
          _
        // Predicated region
        $region29: #{tpu_custom_call.1} parent=11 // pred_check
          %p356 = pneg %p157
        $region30: #{tpu_custom_call.1} parent=11 // pred_check_branch
          %358 = sbr.rel (%p356) target = $region32
        $region31: #{tpu_custom_call.1} parent=11 // pred_region
          _
        $region32: #{tpu_custom_call.1} parent=11 // pred_fallthru
          _
        // Predicated region
        $region33: #{tpu_custom_call.1} parent=11 // pred_check
          %p359 = pneg %p178
        $region34: #{tpu_custom_call.1} parent=11 // pred_check_branch
          %361 = sbr.rel (%p359) target = $region36
        $region35: #{tpu_custom_call.1} parent=11 // pred_region
          %s363 = ssub.s32 1280, 1280
          %364 = vsyncadd [#allocation10], %s363
          %s365 = sshll.u32 [#allocation9], 4
          %s366 = int_to_ptr.vmem [resolvable:$true] %s365
          %371 = dma.hbm_to_vmem [thread:$0]  %s6, 1280, %s366, [#allocation10], 640, 640, 40
        $region36: #{tpu_custom_call.1} parent=11 // pred_fallthru
          _
        // Predicated region
        $region37: #{tpu_custom_call.1} parent=11 // pred_check
          %p372 = pneg %p199
        $region38: #{tpu_custom_call.1} parent=11 // pred_check_branch
          %374 = sbr.rel (%p372) target = $region40
        $region39: #{tpu_custom_call.1} parent=11 // pred_region
          _
        $region40: #{tpu_custom_call.1} parent=11 // pred_fallthru
          _
        // Predicated region
        $region41: #{tpu_custom_call.1} parent=11 // pred_check
          %p375 = pneg %p220
        $region42: #{tpu_custom_call.1} parent=11 // pred_check_branch
          %377 = sbr.rel (%p375) target = $region44
        $region43: #{tpu_custom_call.1} parent=11 // pred_region
          _
        $region44: #{tpu_custom_call.1} parent=11 // pred_fallthru
          _
        // Predicated region
        $region45: #{tpu_custom_call.1} parent=11 // pred_check
          %p378 = pneg %p241
        $region46: #{tpu_custom_call.1} parent=11 // pred_check_branch
          %380 = sbr.rel (%p378) target = $region48
        $region47: #{tpu_custom_call.1} parent=11 // pred_region
          _
        $region48: #{tpu_custom_call.1} parent=11 // pred_fallthru
          _
        // Predicated region
        $region49: #{tpu_custom_call.1} parent=11 // pred_check
          %p381 = pneg %p262
        $region50: #{tpu_custom_call.1} parent=11 // pred_check_branch
          %383 = sbr.rel (%p381) target = $region52
        $region51: #{tpu_custom_call.1} parent=11 // pred_region
          %s385 = ssub.s32 3584, 3584
          %386 = vsyncadd [#allocation10], %s385
          %s387 = sshll.u32 [#allocation11], 4
          %s388 = int_to_ptr.vmem [resolvable:$true] %s387
          %393 = dma.hbm_to_vmem [thread:$0]  %s10, 3584, %s388, [#allocation10], 896, 896, 56
        $region52: #{tpu_custom_call.1} parent=11 // pred_fallthru
          _
        // Predicated region
        $region53: #{tpu_custom_call.1} parent=11 // pred_check
          %p394 = pneg %p283
        $region54: #{tpu_custom_call.1} parent=11 // pred_check_branch
          %396 = sbr.rel (%p394) target = $region56
        $region55: #{tpu_custom_call.1} parent=11 // pred_region
          _
        $region56: #{tpu_custom_call.1} parent=11 // pred_fallthru
          _
      $region12: #{tpu_custom_call.1} parent=5 // pred_fallthru
        _
      %p397 = scmp.lt.s32.totalorder %s26, 2
      // Predicated region
      $region57: #{tpu_custom_call.1} parent=5 // pred_check
        %p398 = pneg %p397
      $region58: #{tpu_custom_call.1} parent=5 // pred_check_branch
        %400 = sbr.rel (%p398) target = $region60
      $region59: #{tpu_custom_call.1} parent=5 // pred_region
        // Predicated region
        $region61: #{tpu_custom_call.1} parent=59 // pred_check
          %p401 = pneg %p46
        $region62: #{tpu_custom_call.1} parent=59 // pred_check_branch
          %403 = sbr.rel (%p401) target = $region64
        $region63: #{tpu_custom_call.1} parent=59 // pred_region
          %s404 = sand.u32 %s36, 1
          %s405 = scalar_lea.sflag [#allocation4], %s404
          %s406 = sand.u32 %s36, 1
          %s407 = smul.addr %s406, 64
          %s408 = scalar_lea.vmem [#allocation3], %s407
          %s410 = ssub.s32 1024, 1024
          %411 = vsyncadd %s405, %s410
          %s412 = smul.addr %s26, 8
          %s413 = smul.addr %s412, 128
          %s414 = scalar_lea.hbm %s0, %s413
          %s415 = sshll.u32 %s408, 4
          %s416 = int_to_ptr.vmem [resolvable:$true] %s415
          %421 = dma.hbm_to_vmem [thread:$0]  %s414, 1024, %s416, %s405, 256, 256, 16
        $region64: #{tpu_custom_call.1} parent=59 // pred_fallthru
          _
      $region60: #{tpu_custom_call.1} parent=5 // pred_fallthru
        _
      %p422 = scmp.le.s32.totalorder 1, %s26
      %p423 = scmp.lt.s32.totalorder %s26, 3
      %p424 = pnand %p422, %p423
      %p425 = pneg %p424
      // Predicated region
      $region65: #{tpu_custom_call.1} parent=5 // pred_check
        _
      $region66: #{tpu_custom_call.1} parent=5 // pred_check_branch
        %427 = sbr.rel (%p424) target = $region68
      $region67: #{tpu_custom_call.1} parent=5 // pred_region
        %s428 = ssub.s32 %s26, 1
        %s429 = sand.u32 %s39, 1
        %s430 = scalar_lea.sflag [#allocation4], %s429
        %s431 = sand.u32 %s39, 1
        %s432 = smul.addr %s431, 64
        %s433 = scalar_lea.vmem [#allocation3], %s432
        // Predicated region
        $region69: #{tpu_custom_call.1} parent=67 // pred_check
          %p434 = pneg %p52
        $region70: #{tpu_custom_call.1} parent=67 // pred_check_branch
          %436 = sbr.rel (%p434) target = $region72
        $region71: #{tpu_custom_call.1} parent=67 // pred_region
          %437 = dma.done %s430, 1024
        $region72: #{tpu_custom_call.1} parent=67 // pred_fallthru
          _
        // Predicated region
        $region73: #{tpu_custom_call.1} parent=67 // pred_check
          %p438 = pneg %p94
        $region74: #{tpu_custom_call.1} parent=67 // pred_check_branch
          %440 = sbr.rel (%p438) target = $region76
        $region75: #{tpu_custom_call.1} parent=67 // pred_region
          %441 = dma.done [#allocation7], 768
        $region76: #{tpu_custom_call.1} parent=67 // pred_fallthru
          _
        // Predicated region
        $region77: #{tpu_custom_call.1} parent=67 // pred_check
          %p442 = pneg %p136
        $region78: #{tpu_custom_call.1} parent=67 // pred_check_branch
          %444 = sbr.rel (%p442) target = $region80
        $region79: #{tpu_custom_call.1} parent=67 // pred_region
          %445 = dma.done [#allocation7], 1024
        $region80: #{tpu_custom_call.1} parent=67 // pred_fallthru
          _
        // Predicated region
        $region81: #{tpu_custom_call.1} parent=67 // pred_check
          %p446 = pneg %p178
        $region82: #{tpu_custom_call.1} parent=67 // pred_check_branch
          %448 = sbr.rel (%p446) target = $region84
        $region83: #{tpu_custom_call.1} parent=67 // pred_region
          %449 = dma.done [#allocation10], 1280
        $region84: #{tpu_custom_call.1} parent=67 // pred_fallthru
          _
        // Predicated region
        $region85: #{tpu_custom_call.1} parent=67 // pred_check
          %p450 = pneg %p262
        $region86: #{tpu_custom_call.1} parent=67 // pred_check_branch
          %452 = sbr.rel (%p450) target = $region88
        $region87: #{tpu_custom_call.1} parent=67 // pred_region
          %453 = dma.done [#allocation10], 3584
        $region88: #{tpu_custom_call.1} parent=67 // pred_fallthru
          _
        %s454 = sand.u32 %s39, 1
        %s455 = scalar_lea.sflag [#allocation4], %s454
        %s456 = sand.u32 %s39, 1
        %s457 = smul.addr %s456, 64
        %s458 = scalar_lea.vmem [#allocation3], %s457
        %p459 = pneg %p52
        %p460 = pneg %p49
        %p461 = pneg %p73
        %p462 = pneg %p70
        %p463 = pneg %p94
        %p464 = pneg %p91
        %p465 = pneg %p115
        %p466 = pneg %p112
        %p467 = pneg %p136
        %p468 = pneg %p133
        %p469 = pneg %p157
        %p470 = pneg %p154
        %p471 = pneg %p178
        %p472 = pneg %p175
        %p473 = pneg %p199
        %p474 = pneg %p196
        %p475 = pneg %p220
        %p476 = pneg %p217
        %p477 = pneg %p241
        %p478 = pneg %p238
        %p479 = pneg %p262
        %p480 = pneg %p259
        %p481 = pneg %p283
        %p482 = pneg %p280
        %p483 = pneg %p309
        %p484 = pneg %p306
        %s485 = sand.u32 %s296, 1
        %s486 = scalar_lea.sflag [#allocation5], %s485
        %s487 = sand.u32 %s296, 1
        %s488 = smul.addr %s487, 64
        %s489 = scalar_lea.vmem [#allocation12], %s488
        %v490 = vld [vmem:[%s433] sm:$0xff]
        %v491 = vld [vmem:[%s433 + $0x8] sm:$0xff]
        %v492 = vld [vmem:[%s433 + $0x10] sm:$0xff]
        %v493 = vld [vmem:[%s433 + $0x18] sm:$0xff]
        %v494 = vld [vmem:[%s433 + $0x20] sm:$0xff]
        %v495 = vld [vmem:[%s433 + $0x28] sm:$0xff]
        %v496 = vld [vmem:[%s433 + $0x30] sm:$0xff]
        %v497 = vld [vmem:[%s433 + $0x38] sm:$0xff]
        %498 = vrot.lane.b32.xlu0 %v490, 17
        %v499 = vpop.permute.xlu0 %498
        %500 = vrot.lane.b32.xlu0 %v492, 17
        %v501 = vpop.permute.xlu0 %500
        %502 = vrot.lane.b32.xlu0 %v494, 17
        %v503 = vpop.permute.xlu0 %502
        %504 = vrot.lane.b32.xlu0 %v496, 17
        %v505 = vpop.permute.xlu0 %504
        %506 = vrot.lane.b32.xlu0 %v491, 17
        %v507 = vpop.permute.xlu0 %506
        %508 = vrot.lane.b32.xlu0 %v493, 17
        %v509 = vpop.permute.xlu0 %508
        %510 = vrot.lane.b32.xlu0 %v495, 17
        %v511 = vpop.permute.xlu0 %510
        %512 = vrot.lane.b32.xlu0 %v497, 17
        %v513 = vpop.permute.xlu0 %512
        %v514 = vlaneseq
        %v515 = vand.u32 %v514, 127
        %vm516 = vcmp.lt.s32.totalorder %v515, 17
        %v517 = vsel %vm516, %v499, %v507
        %v518 = vsel %vm516, %v501, %v509
        %v519 = vsel %vm516, %v503, %v511
        %v520 = vsel %vm516, %v505, %v513
        %v521 = vsel %vm516, %v507, %v499
        %v522 = vsel %vm516, %v509, %v501
        %v523 = vsel %vm516, %v511, %v503
        %v524 = vsel %vm516, %v513, %v505
        %v525 = vld [vmem:[%s1] ss:$8 sm:$0x3]
        %v527 = vlaneseq
        %v528 = vshrl.u32 %v527, 7
        %v529 = vsub.s32 0, %v528
        %v530 = vrot.slane %v525, %v529
        %v531 = vlaneseq
        %v532 = vshrl.u32 %v531, 7
        %v533 = vsub.s32 1, %v532
        %v534 = vrot.slane %v525, %v533
        %v537 = vmul.f32 %v521, %v530
        %v538 = vmul.f32 %v517, %v534
        %v539 = vmul.f32 %v522, %v530
        %v540 = vmul.f32 %v518, %v534
        %v541 = vmul.f32 %v523, %v530
        %v542 = vmul.f32 %v519, %v534
        %v543 = vmul.f32 %v524, %v530
        %v544 = vmul.f32 %v520, %v534
        %545 = vst [vmem:[#allocation2] sm:$0xff] %v537
        %546 = vst [vmem:[#allocation2 + $0x8] sm:$0xff] %v538
        %547 = vst [vmem:[#allocation2 + $0x10] sm:$0xff] %v539
        %548 = vst [vmem:[#allocation2 + $0x18] sm:$0xff] %v540
        %549 = vst [vmem:[#allocation2 + $0x20] sm:$0xff] %v541
        %550 = vst [vmem:[#allocation2 + $0x28] sm:$0xff] %v542
        %551 = vst [vmem:[#allocation2 + $0x30] sm:$0xff] %v543
        %552 = vst [vmem:[#allocation2 + $0x38] sm:$0xff] %v544
        %553 = vrot.lane.b32.xlu0 %v490, 16
        %v554 = vpop.permute.xlu0 %553
        %555 = vrot.lane.b32.xlu0 %v492, 16
        %v556 = vpop.permute.xlu0 %555
        %557 = vrot.lane.b32.xlu0 %v494, 16
        %v558 = vpop.permute.xlu0 %557
        %559 = vrot.lane.b32.xlu0 %v496, 16
        %v560 = vpop.permute.xlu0 %559
        %561 = vrot.lane.b32.xlu0 %v491, 16
        %v562 = vpop.permute.xlu0 %561
        %563 = vrot.lane.b32.xlu0 %v493, 16
        %v564 = vpop.permute.xlu0 %563
        %565 = vrot.lane.b32.xlu0 %v495, 16
        %v566 = vpop.permute.xlu0 %565
        %567 = vrot.lane.b32.xlu0 %v497, 16
        %v568 = vpop.permute.xlu0 %567
        %vm569 = vcmp.lt.s32.totalorder %v515, 16
        %v570 = vsel %vm569, %v554, %v562
        %v571 = vsel %vm569, %v556, %v564
        %v572 = vsel %vm569, %v558, %v566
        %v573 = vsel %vm569, %v560, %v568
        %v574 = vsel %vm569, %v562, %v554
        %v575 = vsel %vm569, %v564, %v556
        %v576 = vsel %vm569, %v566, %v558
        %v577 = vsel %vm569, %v568, %v560
        %s578 = scalar_lea.vmem %s1, 1
        %v579 = vld [vmem:[%s578] ss:$8 sm:$0x3]
        %v581 = vlaneseq
        %v582 = vshrl.u32 %v581, 7
        %v583 = vsub.s32 0, %v582
        %v584 = vrot.slane %v579, %v583
        %v585 = vlaneseq
        %v586 = vshrl.u32 %v585, 7
        %v587 = vsub.s32 1, %v586
        %v588 = vrot.slane %v579, %v587
        %v591 = vmul.f32 %v574, %v584
        %v592 = vmul.f32 %v570, %v588
        %v593 = vmul.f32 %v575, %v584
        %v594 = vmul.f32 %v571, %v588
        %v595 = vmul.f32 %v576, %v584
        %v596 = vmul.f32 %v572, %v588
        %v597 = vmul.f32 %v577, %v584
        %v598 = vmul.f32 %v573, %v588
        %599 = vst [vmem:[#allocation2 + $0x40] sm:$0xff] %v591
        %600 = vst [vmem:[#allocation2 + $0x48] sm:$0xff] %v592
        %601 = vst [vmem:[#allocation2 + $0x50] sm:$0xff] %v593
        %602 = vst [vmem:[#allocation2 + $0x58] sm:$0xff] %v594
        %603 = vst [vmem:[#allocation2 + $0x60] sm:$0xff] %v595
        %604 = vst [vmem:[#allocation2 + $0x68] sm:$0xff] %v596
        %605 = vst [vmem:[#allocation2 + $0x70] sm:$0xff] %v597
        %606 = vst [vmem:[#allocation2 + $0x78] sm:$0xff] %v598
        %607 = vrot.lane.b32.xlu0 %v490, 15
        %v608 = vpop.permute.xlu0 %607
        %609 = vrot.lane.b32.xlu0 %v492, 15
        %v610 = vpop.permute.xlu0 %609
        %611 = vrot.lane.b32.xlu0 %v494, 15
        %v612 = vpop.permute.xlu0 %611
        %613 = vrot.lane.b32.xlu0 %v496, 15
        %v614 = vpop.permute.xlu0 %613
        %615 = vrot.lane.b32.xlu0 %v491, 15
        %v616 = vpop.permute.xlu0 %615
        %617 = vrot.lane.b32.xlu0 %v493, 15
        %v618 = vpop.permute.xlu0 %617
        %619 = vrot.lane.b32.xlu0 %v495, 15
        %v620 = vpop.permute.xlu0 %619
        %621 = vrot.lane.b32.xlu0 %v497, 15
        %v622 = vpop.permute.xlu0 %621
        %vm623 = vcmp.lt.s32.totalorder %v515, 15
        %v624 = vsel %vm623, %v608, %v616
        %v625 = vsel %vm623, %v610, %v618
        %v626 = vsel %vm623, %v612, %v620
        %v627 = vsel %vm623, %v614, %v622
        %v628 = vsel %vm623, %v616, %v608
        %v629 = vsel %vm623, %v618, %v610
        %v630 = vsel %vm623, %v620, %v612
        %v631 = vsel %vm623, %v622, %v614
        %s632 = scalar_lea.vmem %s1, 2
        %v633 = vld [vmem:[%s632] ss:$8 sm:$0x3]
        %v635 = vlaneseq
        %v636 = vshrl.u32 %v635, 7
        %v637 = vsub.s32 0, %v636
        %v638 = vrot.slane %v633, %v637
        %v639 = vlaneseq
        %v640 = vshrl.u32 %v639, 7
        %v641 = vsub.s32 1, %v640
        %v642 = vrot.slane %v633, %v641
        %v645 = vmul.f32 %v628, %v638
        %v646 = vmul.f32 %v624, %v642
        %v647 = vmul.f32 %v629, %v638
        %v648 = vmul.f32 %v625, %v642
        %v649 = vmul.f32 %v630, %v638
        %v650 = vmul.f32 %v626, %v642
        %v651 = vmul.f32 %v631, %v638
        %v652 = vmul.f32 %v627, %v642
        %653 = vst [vmem:[#allocation2 + $0x80] sm:$0xff] %v645
        %654 = vst [vmem:[#allocation2 + $0x88] sm:$0xff] %v646
        %655 = vst [vmem:[#allocation2 + $0x90] sm:$0xff] %v647
        %656 = vst [vmem:[#allocation2 + $0x98] sm:$0xff] %v648
        %657 = vst [vmem:[#allocation2 + $0xa0] sm:$0xff] %v649
        %658 = vst [vmem:[#allocation2 + $0xa8] sm:$0xff] %v650
        %659 = vst [vmem:[#allocation2 + $0xb0] sm:$0xff] %v651
        %660 = vst [vmem:[#allocation2 + $0xb8] sm:$0xff] %v652
        %661 = vrot.lane.b32.xlu0 %v490, 1
        %v662 = vpop.permute.xlu0 %661
        %663 = vrot.lane.b32.xlu0 %v492, 1
        %v664 = vpop.permute.xlu0 %663
        %665 = vrot.lane.b32.xlu0 %v494, 1
        %v666 = vpop.permute.xlu0 %665
        %667 = vrot.lane.b32.xlu0 %v496, 1
        %v668 = vpop.permute.xlu0 %667
        %669 = vrot.lane.b32.xlu0 %v491, 1
        %v670 = vpop.permute.xlu0 %669
        %671 = vrot.lane.b32.xlu0 %v493, 1
        %v672 = vpop.permute.xlu0 %671
        %673 = vrot.lane.b32.xlu0 %v495, 1
        %v674 = vpop.permute.xlu0 %673
        %675 = vrot.lane.b32.xlu0 %v497, 1
        %v676 = vpop.permute.xlu0 %675
        %vm677 = vcmp.lt.s32.totalorder %v515, 1
        %v678 = vsel %vm677, %v662, %v670
        %v679 = vsel %vm677, %v664, %v672
        %v680 = vsel %vm677, %v666, %v674
        %v681 = vsel %vm677, %v668, %v676
        %v682 = vsel %vm677, %v670, %v662
        %v683 = vsel %vm677, %v672, %v664
        %v684 = vsel %vm677, %v674, %v666
        %v685 = vsel %vm677, %v676, %v668
        %s686 = scalar_lea.vmem %s1, 3
        %v687 = vld [vmem:[%s686] ss:$8 sm:$0x3]
        %v689 = vlaneseq
        %v690 = vshrl.u32 %v689, 7
        %v691 = vsub.s32 0, %v690
        %v692 = vrot.slane %v687, %v691
        %v693 = vlaneseq
        %v694 = vshrl.u32 %v693, 7
        %v695 = vsub.s32 1, %v694
        %v696 = vrot.slane %v687, %v695
        %v699 = vmul.f32 %v682, %v692
        %v700 = vmul.f32 %v678, %v696
        %v701 = vmul.f32 %v683, %v692
        %v702 = vmul.f32 %v679, %v696
        %v703 = vmul.f32 %v684, %v692
        %v704 = vmul.f32 %v680, %v696
        %v705 = vmul.f32 %v685, %v692
        %v706 = vmul.f32 %v681, %v696
        %707 = vst [vmem:[#allocation2 + $0xc0] sm:$0xff] %v699
        %708 = vst [vmem:[#allocation2 + $0xc8] sm:$0xff] %v700
        %709 = vst [vmem:[#allocation2 + $0xd0] sm:$0xff] %v701
        %710 = vst [vmem:[#allocation2 + $0xd8] sm:$0xff] %v702
        %711 = vst [vmem:[#allocation2 + $0xe0] sm:$0xff] %v703
        %712 = vst [vmem:[#allocation2 + $0xe8] sm:$0xff] %v704
        %713 = vst [vmem:[#allocation2 + $0xf0] sm:$0xff] %v705
        %714 = vst [vmem:[#allocation2 + $0xf8] sm:$0xff] %v706
        %715 = vst [vmem:[#allocation2 + $0x100] sm:$0xff] %v490
        %716 = vst [vmem:[#allocation2 + $0x108] sm:$0xff] %v491
        %717 = vst [vmem:[#allocation2 + $0x110] sm:$0xff] %v492
        %718 = vst [vmem:[#allocation2 + $0x118] sm:$0xff] %v493
        %719 = vst [vmem:[#allocation2 + $0x120] sm:$0xff] %v494
        %720 = vst [vmem:[#allocation2 + $0x128] sm:$0xff] %v495
        %721 = vst [vmem:[#allocation2 + $0x130] sm:$0xff] %v496
        %722 = vst [vmem:[#allocation2 + $0x138] sm:$0xff] %v497
        %723 = vrot.lane.b32.xlu0 %v490, 127
        %v724 = vpop.permute.xlu0 %723
        %725 = vrot.lane.b32.xlu0 %v492, 127
        %v726 = vpop.permute.xlu0 %725
        %727 = vrot.lane.b32.xlu0 %v494, 127
        %v728 = vpop.permute.xlu0 %727
        %729 = vrot.lane.b32.xlu0 %v496, 127
        %v730 = vpop.permute.xlu0 %729
        %731 = vrot.lane.b32.xlu0 %v491, 127
        %v732 = vpop.permute.xlu0 %731
        %733 = vrot.lane.b32.xlu0 %v493, 127
        %v734 = vpop.permute.xlu0 %733
        %735 = vrot.lane.b32.xlu0 %v495, 127
        %v736 = vpop.permute.xlu0 %735
        %737 = vrot.lane.b32.xlu0 %v497, 127
        %v738 = vpop.permute.xlu0 %737
        %vm739 = vcmp.lt.s32.totalorder %v515, 127
        %v740 = vsel %vm739, %v724, %v732
        %v741 = vsel %vm739, %v726, %v734
        %v742 = vsel %vm739, %v728, %v736
        %v743 = vsel %vm739, %v730, %v738
        %v744 = vsel %vm739, %v732, %v724
        %v745 = vsel %vm739, %v734, %v726
        %v746 = vsel %vm739, %v736, %v728
        %v747 = vsel %vm739, %v738, %v730
        %s748 = scalar_lea.vmem %s1, 5
        %v749 = vld [vmem:[%s748] ss:$8 sm:$0x3]
        %v751 = vlaneseq
        %v752 = vshrl.u32 %v751, 7
        %v753 = vsub.s32 0, %v752
        %v754 = vrot.slane %v749, %v753
        %v755 = vlaneseq
        %v756 = vshrl.u32 %v755, 7
        %v757 = vsub.s32 1, %v756
        %v758 = vrot.slane %v749, %v757
        %v761 = vmul.f32 %v740, %v754
        %v762 = vmul.f32 %v744, %v758
        %v763 = vmul.f32 %v741, %v754
        %v764 = vmul.f32 %v745, %v758
        %v765 = vmul.f32 %v742, %v754
        %v766 = vmul.f32 %v746, %v758
        %v767 = vmul.f32 %v743, %v754
        %v768 = vmul.f32 %v747, %v758
        %769 = vst [vmem:[#allocation2 + $0x140] sm:$0xff] %v761
        %770 = vst [vmem:[#allocation2 + $0x148] sm:$0xff] %v762
        %771 = vst [vmem:[#allocation2 + $0x150] sm:$0xff] %v763
        %772 = vst [vmem:[#allocation2 + $0x158] sm:$0xff] %v764
        %773 = vst [vmem:[#allocation2 + $0x160] sm:$0xff] %v765
        %774 = vst [vmem:[#allocation2 + $0x168] sm:$0xff] %v766
        %775 = vst [vmem:[#allocation2 + $0x170] sm:$0xff] %v767
        %776 = vst [vmem:[#allocation2 + $0x178] sm:$0xff] %v768
        %777 = vrot.lane.b32.xlu0 %v490, 113
        %v778 = vpop.permute.xlu0 %777
        %779 = vrot.lane.b32.xlu0 %v492, 113
        %v780 = vpop.permute.xlu0 %779
        %781 = vrot.lane.b32.xlu0 %v494, 113
        %v782 = vpop.permute.xlu0 %781
        %783 = vrot.lane.b32.xlu0 %v496, 113
        %v784 = vpop.permute.xlu0 %783
        %785 = vrot.lane.b32.xlu0 %v491, 113
        %v786 = vpop.permute.xlu0 %785
        %787 = vrot.lane.b32.xlu0 %v493, 113
        %v788 = vpop.permute.xlu0 %787
        %789 = vrot.lane.b32.xlu0 %v495, 113
        %v790 = vpop.permute.xlu0 %789
        %791 = vrot.lane.b32.xlu0 %v497, 113
        %v792 = vpop.permute.xlu0 %791
        %vm793 = vcmp.lt.s32.totalorder %v515, 113
        %v794 = vsel %vm793, %v778, %v786
        %v795 = vsel %vm793, %v780, %v788
        %v796 = vsel %vm793, %v782, %v790
        %v797 = vsel %vm793, %v784, %v792
        %v798 = vsel %vm793, %v786, %v778
        %v799 = vsel %vm793, %v788, %v780
        %v800 = vsel %vm793, %v790, %v782
        %v801 = vsel %vm793, %v792, %v784
        %s802 = scalar_lea.vmem %s1, 6
        %v803 = vld [vmem:[%s802] ss:$8 sm:$0x3]
        %v805 = vlaneseq
        %v806 = vshrl.u32 %v805, 7
        %v807 = vsub.s32 0, %v806
        %v808 = vrot.slane %v803, %v807
        %v809 = vlaneseq
        %v810 = vshrl.u32 %v809, 7
        %v811 = vsub.s32 1, %v810
        %v812 = vrot.slane %v803, %v811
        %v815 = vmul.f32 %v794, %v808
        %v816 = vmul.f32 %v798, %v812
        %v817 = vmul.f32 %v795, %v808
        %v818 = vmul.f32 %v799, %v812
        %v819 = vmul.f32 %v796, %v808
        %v820 = vmul.f32 %v800, %v812
        %v821 = vmul.f32 %v797, %v808
        %v822 = vmul.f32 %v801, %v812
        %823 = vst [vmem:[#allocation2 + $0x180] sm:$0xff] %v815
        %824 = vst [vmem:[#allocation2 + $0x188] sm:$0xff] %v816
        %825 = vst [vmem:[#allocation2 + $0x190] sm:$0xff] %v817
        %826 = vst [vmem:[#allocation2 + $0x198] sm:$0xff] %v818
        %827 = vst [vmem:[#allocation2 + $0x1a0] sm:$0xff] %v819
        %828 = vst [vmem:[#allocation2 + $0x1a8] sm:$0xff] %v820
        %829 = vst [vmem:[#allocation2 + $0x1b0] sm:$0xff] %v821
        %830 = vst [vmem:[#allocation2 + $0x1b8] sm:$0xff] %v822
        %831 = vrot.lane.b32.xlu0 %v490, 112
        %v832 = vpop.permute.xlu0 %831
        %833 = vrot.lane.b32.xlu0 %v492, 112
        %v834 = vpop.permute.xlu0 %833
        %835 = vrot.lane.b32.xlu0 %v494, 112
        %v836 = vpop.permute.xlu0 %835
        %837 = vrot.lane.b32.xlu0 %v496, 112
        %v838 = vpop.permute.xlu0 %837
        %839 = vrot.lane.b32.xlu0 %v491, 112
        %v840 = vpop.permute.xlu0 %839
        %841 = vrot.lane.b32.xlu0 %v493, 112
        %v842 = vpop.permute.xlu0 %841
        %843 = vrot.lane.b32.xlu0 %v495, 112
        %v844 = vpop.permute.xlu0 %843
        %845 = vrot.lane.b32.xlu0 %v497, 112
        %v846 = vpop.permute.xlu0 %845
        %vm847 = vcmp.lt.s32.totalorder %v515, 112
        %v848 = vsel %vm847, %v832, %v840
        %v849 = vsel %vm847, %v834, %v842
        %v850 = vsel %vm847, %v836, %v844
        %v851 = vsel %vm847, %v838, %v846
        %v852 = vsel %vm847, %v840, %v832
        %v853 = vsel %vm847, %v842, %v834
        %v854 = vsel %vm847, %v844, %v836
        %v855 = vsel %vm847, %v846, %v838
        %s856 = scalar_lea.vmem %s1, 7
        %v857 = vld [vmem:[%s856] ss:$8 sm:$0x3]
        %v859 = vlaneseq
        %v860 = vshrl.u32 %v859, 7
        %v861 = vsub.s32 0, %v860
        %v862 = vrot.slane %v857, %v861
        %v863 = vlaneseq
        %v864 = vshrl.u32 %v863, 7
        %v865 = vsub.s32 1, %v864
        %v866 = vrot.slane %v857, %v865
        %v869 = vmul.f32 %v848, %v862
        %v870 = vmul.f32 %v852, %v866
        %v871 = vmul.f32 %v849, %v862
        %v872 = vmul.f32 %v853, %v866
        %v873 = vmul.f32 %v850, %v862
        %v874 = vmul.f32 %v854, %v866
        %v875 = vmul.f32 %v851, %v862
        %v876 = vmul.f32 %v855, %v866
        %877 = vst [vmem:[#allocation2 + $0x1c0] sm:$0xff] %v869
        %878 = vst [vmem:[#allocation2 + $0x1c8] sm:$0xff] %v870
        %879 = vst [vmem:[#allocation2 + $0x1d0] sm:$0xff] %v871
        %880 = vst [vmem:[#allocation2 + $0x1d8] sm:$0xff] %v872
        %881 = vst [vmem:[#allocation2 + $0x1e0] sm:$0xff] %v873
        %882 = vst [vmem:[#allocation2 + $0x1e8] sm:$0xff] %v874
        %883 = vst [vmem:[#allocation2 + $0x1f0] sm:$0xff] %v875
        %884 = vst [vmem:[#allocation2 + $0x1f8] sm:$0xff] %v876
        %885 = vrot.lane.b32.xlu0 %v490, 111
        %v886 = vpop.permute.xlu0 %885
        %887 = vrot.lane.b32.xlu0 %v492, 111
        %v888 = vpop.permute.xlu0 %887
        %889 = vrot.lane.b32.xlu0 %v494, 111
        %v890 = vpop.permute.xlu0 %889
        %891 = vrot.lane.b32.xlu0 %v496, 111
        %v892 = vpop.permute.xlu0 %891
        %893 = vrot.lane.b32.xlu0 %v491, 111
        %v894 = vpop.permute.xlu0 %893
        %895 = vrot.lane.b32.xlu0 %v493, 111
        %v896 = vpop.permute.xlu0 %895
        %897 = vrot.lane.b32.xlu0 %v495, 111
        %v898 = vpop.permute.xlu0 %897
        %899 = vrot.lane.b32.xlu0 %v497, 111
        %v900 = vpop.permute.xlu0 %899
        %vm901 = vcmp.lt.s32.totalorder %v515, 111
        %v902 = vsel %vm901, %v886, %v894
        %v903 = vsel %vm901, %v888, %v896
        %v904 = vsel %vm901, %v890, %v898
        %v905 = vsel %vm901, %v892, %v900
        %v906 = vsel %vm901, %v894, %v886
        %v907 = vsel %vm901, %v896, %v888
        %v908 = vsel %vm901, %v898, %v890
        %v909 = vsel %vm901, %v900, %v892
        %s910 = scalar_lea.vmem %s1, 16
        %v911 = vld [vmem:[%s910] ss:$8 sm:$0x3]
        %v913 = vlaneseq
        %v914 = vshrl.u32 %v913, 7
        %v915 = vsub.s32 0, %v914
        %v916 = vrot.slane %v911, %v915
        %v917 = vlaneseq
        %v918 = vshrl.u32 %v917, 7
        %v919 = vsub.s32 1, %v918
        %v920 = vrot.slane %v911, %v919
        %v923 = vmul.f32 %v902, %v916
        %v924 = vmul.f32 %v906, %v920
        %v925 = vmul.f32 %v903, %v916
        %v926 = vmul.f32 %v907, %v920
        %v927 = vmul.f32 %v904, %v916
        %v928 = vmul.f32 %v908, %v920
        %v929 = vmul.f32 %v905, %v916
        %v930 = vmul.f32 %v909, %v920
        %931 = vst [vmem:[#allocation2 + $0x200] sm:$0xff] %v923
        %932 = vst [vmem:[#allocation2 + $0x208] sm:$0xff] %v924
        %933 = vst [vmem:[#allocation2 + $0x210] sm:$0xff] %v925
        %934 = vst [vmem:[#allocation2 + $0x218] sm:$0xff] %v926
        %935 = vst [vmem:[#allocation2 + $0x220] sm:$0xff] %v927
        %936 = vst [vmem:[#allocation2 + $0x228] sm:$0xff] %v928
        %937 = vst [vmem:[#allocation2 + $0x230] sm:$0xff] %v929
        %938 = vst [vmem:[#allocation2 + $0x238] sm:$0xff] %v930
        %v939 = vld [vmem:[#allocation6] sm:$0xff]
        %v940 = vld [vmem:[#allocation6 + $0x8] sm:$0xff]
        %v941 = vld [vmem:[#allocation6 + $0x10] sm:$0xff]
        %v942 = vld [vmem:[#allocation6 + $0x18] sm:$0xff]
        %v943 = vld [vmem:[#allocation6 + $0x20] sm:$0xff]
        %v944 = vld [vmem:[#allocation6 + $0x28] sm:$0xff]
        %v945 = vld [vmem:[#allocation2] sm:$0xff]
        %v946 = vld [vmem:[#allocation2 + $0x8] sm:$0xff]
        %v947 = vld [vmem:[#allocation2 + $0x10] sm:$0xff]
        %v948 = vld [vmem:[#allocation2 + $0x18] sm:$0xff]
        %v949 = vld [vmem:[#allocation2 + $0x20] sm:$0xff]
        %v950 = vld [vmem:[#allocation2 + $0x28] sm:$0xff]
        %v951 = vld [vmem:[#allocation2 + $0x30] sm:$0xff]
        %v952 = vld [vmem:[#allocation2 + $0x38] sm:$0xff]
        %v953 = vld [vmem:[#allocation2 + $0x40] sm:$0xff]
        %v954 = vld [vmem:[#allocation2 + $0x48] sm:$0xff]
        %v955 = vld [vmem:[#allocation2 + $0x50] sm:$0xff]
        %v956 = vld [vmem:[#allocation2 + $0x58] sm:$0xff]
        %v957 = vld [vmem:[#allocation2 + $0x60] sm:$0xff]
        %v958 = vld [vmem:[#allocation2 + $0x68] sm:$0xff]
        %v959 = vld [vmem:[#allocation2 + $0x70] sm:$0xff]
        %v960 = vld [vmem:[#allocation2 + $0x78] sm:$0xff]
        %v961 = vld [vmem:[#allocation2 + $0x80] sm:$0xff]
        %v962 = vld [vmem:[#allocation2 + $0x88] sm:$0xff]
        %v963 = vld [vmem:[#allocation2 + $0x90] sm:$0xff]
        %v964 = vld [vmem:[#allocation2 + $0x98] sm:$0xff]
        %v965 = vld [vmem:[#allocation2 + $0xa0] sm:$0xff]
        %v966 = vld [vmem:[#allocation2 + $0xa8] sm:$0xff]
        %v967 = vld [vmem:[#allocation2 + $0xb0] sm:$0xff]
        %v968 = vld [vmem:[#allocation2 + $0xb8] sm:$0xff]
        %v969 = vld [vmem:[#allocation2 + $0xc0] sm:$0xff]
        %v970 = vld [vmem:[#allocation2 + $0xc8] sm:$0xff]
        %v971 = vld [vmem:[#allocation2 + $0xd0] sm:$0xff]
        %v972 = vld [vmem:[#allocation2 + $0xd8] sm:$0xff]
        %v973 = vld [vmem:[#allocation2 + $0xe0] sm:$0xff]
        %v974 = vld [vmem:[#allocation2 + $0xe8] sm:$0xff]
        %v975 = vld [vmem:[#allocation2 + $0xf0] sm:$0xff]
        %v976 = vld [vmem:[#allocation2 + $0xf8] sm:$0xff]
        %v977 = vld [vmem:[#allocation2 + $0x100] sm:$0xff]
        %v978 = vld [vmem:[#allocation2 + $0x108] sm:$0xff]
        %v979 = vld [vmem:[#allocation2 + $0x110] sm:$0xff]
        %v980 = vld [vmem:[#allocation2 + $0x118] sm:$0xff]
        %v981 = vld [vmem:[#allocation2 + $0x120] sm:$0xff]
        %v982 = vld [vmem:[#allocation2 + $0x128] sm:$0xff]
        %v983 = vld [vmem:[#allocation2 + $0x130] sm:$0xff]
        %v984 = vld [vmem:[#allocation2 + $0x138] sm:$0xff]
        %v985 = vld [vmem:[#allocation2 + $0x140] sm:$0xff]
        %v986 = vld [vmem:[#allocation2 + $0x148] sm:$0xff]
        %v987 = vld [vmem:[#allocation2 + $0x150] sm:$0xff]
        %v988 = vld [vmem:[#allocation2 + $0x158] sm:$0xff]
        %v989 = vld [vmem:[#allocation2 + $0x160] sm:$0xff]
        %v990 = vld [vmem:[#allocation2 + $0x168] sm:$0xff]
        %v991 = vld [vmem:[#allocation2 + $0x170] sm:$0xff]
        %v992 = vld [vmem:[#allocation2 + $0x178] sm:$0xff]
        %v993 = vld [vmem:[#allocation2 + $0x180] sm:$0xff]
        %v994 = vld [vmem:[#allocation2 + $0x188] sm:$0xff]
        %v995 = vld [vmem:[#allocation2 + $0x190] sm:$0xff]
        %v996 = vld [vmem:[#allocation2 + $0x198] sm:$0xff]
        %v997 = vld [vmem:[#allocation2 + $0x1a0] sm:$0xff]
        %v998 = vld [vmem:[#allocation2 + $0x1a8] sm:$0xff]
        %v999 = vld [vmem:[#allocation2 + $0x1b0] sm:$0xff]
        %v1000 = vld [vmem:[#allocation2 + $0x1b8] sm:$0xff]
        %v1001 = vld [vmem:[#allocation2 + $0x1c0] sm:$0xff]
        %v1002 = vld [vmem:[#allocation2 + $0x1c8] sm:$0xff]
        %v1003 = vld [vmem:[#allocation2 + $0x1d0] sm:$0xff]
        %v1004 = vld [vmem:[#allocation2 + $0x1d8] sm:$0xff]
        %v1005 = vld [vmem:[#allocation2 + $0x1e0] sm:$0xff]
        %v1006 = vld [vmem:[#allocation2 + $0x1e8] sm:$0xff]
        %v1007 = vld [vmem:[#allocation2 + $0x1f0] sm:$0xff]
        %v1008 = vld [vmem:[#allocation2 + $0x1f8] sm:$0xff]
        %v1009 = vld [vmem:[#allocation2 + $0x200] sm:$0xff]
        %v1010 = vld [vmem:[#allocation2 + $0x208] sm:$0xff]
        %v1011 = vld [vmem:[#allocation2 + $0x210] sm:$0xff]
        %v1012 = vld [vmem:[#allocation2 + $0x218] sm:$0xff]
        %v1013 = vld [vmem:[#allocation2 + $0x220] sm:$0xff]
        %v1014 = vld [vmem:[#allocation2 + $0x228] sm:$0xff]
        %v1015 = vld [vmem:[#allocation2 + $0x230] sm:$0xff]
        %v1016 = vld [vmem:[#allocation2 + $0x238] sm:$0xff]
        %v1017 = vld [vmem:[%s3] sm:$0xff]
        %v1018 = vld [vmem:[%s3 + $0x8] sm:$0xff]
        %1020 = vset.pattern.permute.xlu0 0
        %1021 = vperm.xlu0 %1020, %v1017
        %v1022 = vpop.permute.xlu0 %1021
        %1025 = vset.pattern.permute.xlu0 0
        %1026 = vperm.xlu0 %1025, %v1018
        %v1027 = vpop.permute.xlu0 %1026
        %vm1029 = vcmask 261120
        %v1031 = vsel %vm1029, %v941, 0
        %v1034 = vsel %vm1029, %v944, 0
        %1036 = vmatprep.subr.mxu0 %v946
        %1037 = vmatpush1.msra.mxu0 %v945
        %1038 = vmatprep.subr.mxu0 %v948
        %1039 = vmatpush1.msra.mxu0 %v947
        %1040 = vmatprep.subr.mxu0 %v950
        %1041 = vmatpush1.msra.mxu0 %v949
        %1042 = vmatprep.subr.mxu0 %v952
        %1043 = vmatpush1.msra.mxu0 %v951
        %1044 = vmatprep.subr.mxu0 %v954
        %1045 = vmatpush1.msra.mxu0 %v953
        %1046 = vmatprep.subr.mxu0 %v956
        %1047 = vmatpush1.msra.mxu0 %v955
        %1048 = vmatprep.subr.mxu0 %v958
        %1049 = vmatpush1.msra.mxu0 %v957
        %1050 = vmatprep.subr.mxu0 %v960
        %1051 = vmatpush1.msra.mxu0 %v959
        %1052 = vmatprep.subr.mxu0 %v962
        %1053 = vmatpush1.msra.mxu0 %v961
        %1054 = vmatprep.subr.mxu0 %v964
        %1055 = vmatpush1.msra.mxu0 %v963
        %1056 = vmatprep.subr.mxu0 %v966
        %1057 = vmatpush1.msra.mxu0 %v965
        %1058 = vmatprep.subr.mxu0 %v968
        %1059 = vmatpush1.msra.mxu0 %v967
        %1060 = vmatprep.subr.mxu0 %v970
        %1061 = vmatpush1.msra.mxu0 %v969
        %1062 = vmatprep.subr.mxu0 %v972
        %1063 = vmatpush1.msra.mxu0 %v971
        %1064 = vmatprep.subr.mxu0 %v974
        %1065 = vmatpush1.msra.mxu0 %v973
        %1066 = vmatprep.subr.mxu0 %v976
        %1067 = vmatpush1.msra.mxu0 %v975
        %1068 = vmatprep.subr.mxu0 %v978
        %1069 = vmatpush1.msra.mxu0 %v977
        %1070 = vmatprep.subr.mxu0 %v980
        %1071 = vmatpush1.msra.mxu0 %v979
        %1072 = vmatprep.subr.mxu0 %v982
        %1073 = vmatpush1.msra.mxu0 %v981
        %1074 = vmatprep.subr.mxu0 %v984
        %1075 = vmatpush1.msra.mxu0 %v983
        %1076 = vmatprep.subr.mxu0 %v986
        %1077 = vmatpush1.msra.mxu0 %v985
        %1078 = vmatprep.subr.mxu0 %v988
        %1079 = vmatpush1.msra.mxu0 %v987
        %1080 = vmatprep.subr.mxu0 %v990
        %1081 = vmatpush1.msra.mxu0 %v989
        %1082 = vmatprep.subr.mxu0 %v992
        %1083 = vmatpush1.msra.mxu0 %v991
        %1084 = vmatprep.subr.mxu0 %v994
        %1085 = vmatpush1.msra.mxu0 %v993
        %1086 = vmatprep.subr.mxu0 %v996
        %1087 = vmatpush1.msra.mxu0 %v995
        %1088 = vmatprep.subr.mxu0 %v998
        %1089 = vmatpush1.msra.mxu0 %v997
        %1090 = vmatprep.subr.mxu0 %v1000
        %1091 = vmatpush1.msra.mxu0 %v999
        %1092 = vmatprep.subr.mxu0 %v1002
        %1093 = vmatpush1.msra.mxu0 %v1001
        %1094 = vmatprep.subr.mxu0 %v1004
        %1095 = vmatpush1.msra.mxu0 %v1003
        %1096 = vmatprep.subr.mxu0 %v1006
        %1097 = vmatpush1.msra.mxu0 %v1005
        %1098 = vmatprep.subr.mxu0 %v1008
        %1099 = vmatpush1.msra.mxu0 %v1007
        %1100 = vmatprep.mubr.f32.mxu0 %v940
        %1101 = vmatmul.mubr.f32.gmra.mrb[0].mxu0 %v939
        %v1102 = vpop.f32.mrb[0].mxu0
        %v1103 = vadd.f32 %v1022, %v1102
        %v1104 = vpop.f32.mrb[0].mxu0
        %v1105 = vadd.f32 %v1022, %v1104
        %1106 = vmatprep.mubr.f32.mxu0 %v943
        %1107 = vmatmul.mubr.f32.gmra.mrb[0].mxu0 %v942
        %v1108 = vpop.f32.mrb[0].mxu0
        %v1109 = vadd.f32 %v1027, %v1108
        %v1110 = vpop.f32.mrb[0].mxu0
        %v1111 = vadd.f32 %v1027, %v1110
        %1112 = vdwg.mxu0
        %1113 = vmatprep.subr.mxu0 %v1010
        %1114 = vmatpush1.msra.mxu0 %v1009
        %1115 = vmatprep.subr.mxu0 %v1012
        %1116 = vmatpush1.msra.mxu0 %v1011
        %1117 = vmatprep.subr.mxu0 %v1014
        %1118 = vmatpush1.msra.mxu0 %v1013
        %1119 = vmatprep.subr.mxu0 %v1016
        %1120 = vmatpush1.msra.mxu0 %v1015
        %1121 = vmatprep.subr.mxu0 0.0
        %1122 = vmatpush1.msra.mxu0 0.0
        %1123 = vmatprep.subr.mxu0 0.0
        %1124 = vmatpush1.msra.mxu0 0.0
        %1125 = vmatprep.subr.mxu0 0.0
        %1126 = vmatpush1.msra.mxu0 0.0
        %1127 = vmatprep.subr.mxu0 0.0
        %1128 = vmatpush1.msra.mxu0 0.0
        %1129 = vmatprep.subr.mxu0 0.0
        %1130 = vmatpush1.msra.mxu0 0.0
        %1131 = vmatprep.subr.mxu0 0.0
        %1132 = vmatpush1.msra.mxu0 0.0
        %1133 = vmatprep.subr.mxu0 0.0
        %1134 = vmatpush1.msra.mxu0 0.0
        %1135 = vmatprep.subr.mxu0 0.0
        %1136 = vmatpush1.msra.mxu0 0.0
        %1137 = vmatprep.subr.mxu0 0.0
        %1138 = vmatpush1.msra.mxu0 0.0
        %1139 = vmatprep.subr.mxu0 0.0
        %1140 = vmatpush1.msra.mxu0 0.0
        %1141 = vmatprep.subr.mxu0 0.0
        %1142 = vmatpush1.msra.mxu0 0.0
        %1143 = vmatprep.subr.mxu0 0.0
        %1144 = vmatpush1.msra.mxu0 0.0
        %1145 = vmatprep.subr.mxu0 0.0
        %1146 = vmatpush1.msra.mxu0 0.0
        %1147 = vmatprep.subr.mxu0 0.0
        %1148 = vmatpush1.msra.mxu0 0.0
        %1149 = vmatprep.subr.mxu0 0.0
        %1150 = vmatpush1.msra.mxu0 0.0
        %1151 = vmatprep.subr.mxu0 0.0
        %1152 = vmatpush1.msra.mxu0 0.0
        %1153 = vmatprep.subr.mxu0 0.0
        %1154 = vmatpush1.msra.mxu0 0.0
        %1155 = vmatprep.subr.mxu0 0.0
        %1156 = vmatpush1.msra.mxu0 0.0
        %1157 = vmatprep.subr.mxu0 0.0
        %1158 = vmatpush1.msra.mxu0 0.0
        %1159 = vmatprep.subr.mxu0 0.0
        %1160 = vmatpush1.msra.mxu0 0.0
        %1161 = vmatprep.subr.mxu0 0.0
        %1162 = vmatpush1.msra.mxu0 0.0
        %1163 = vmatprep.subr.mxu0 0.0
        %1164 = vmatpush1.msra.mxu0 0.0
        %1165 = vmatprep.subr.mxu0 0.0
        %1166 = vmatpush1.msra.mxu0 0.0
        %1167 = vmatprep.subr.mxu0 0.0
        %1168 = vmatpush1.msra.mxu0 0.0
        %1169 = vmatprep.subr.mxu0 0.0
        %1170 = vmatpush1.msra.mxu0 0.0
        %1171 = vmatprep.subr.mxu0 0.0
        %1172 = vmatpush1.msra.mxu0 0.0
        %1173 = vmatprep.subr.mxu0 0.0
        %1174 = vmatpush1.msra.mxu0 0.0
        %1175 = vmatprep.subr.mxu0 0.0
        %1176 = vmatpush1.msra.mxu0 0.0
        %1177 = vmatprep.mubr.f32.mxu0 0.0
        %1178 = vmatmul.mubr.f32.gmra.mrb[0].mxu0 %v1031
        %v1179 = vpop.f32.mrb[0].mxu0
        %v1180 = vadd.f32 %v1103, %v1179
        %v1181 = vpop.f32.mrb[0].mxu0
        %v1182 = vadd.f32 %v1105, %v1181
        %1183 = vmatprep.mubr.f32.mxu0 0.0
        %1184 = vmatmul.mubr.f32.gmra.mrb[0].mxu0 %v1034
        %v1185 = vpop.f32.mrb[0].mxu0
        %v1186 = vadd.f32 %v1109, %v1185
        %v1187 = vpop.f32.mrb[0].mxu0
        %v1188 = vadd.f32 %v1111, %v1187
        %1189 = vdwg.mxu0
        %vm1190 = vcmp.ge.f32.partialorder %v1180, 0.0
        %vm1191 = vcmp.ge.f32.partialorder %v1182, 0.0
        %vm1192 = vcmp.ge.f32.partialorder %v1186, 0.0
        %vm1193 = vcmp.ge.f32.partialorder %v1188, 0.0
        %v1194 = vmul.f32 %v1180, 0.2
        %v1195 = vmul.f32 %v1182, 0.2
        %v1196 = vmul.f32 %v1186, 0.2
        %v1197 = vmul.f32 %v1188, 0.2
        %v1198 = vsel %vm1190, %v1180, %v1194
        %v1199 = vsel %vm1191, %v1182, %v1195
        %v1200 = vsel %vm1192, %v1186, %v1196
        %v1201 = vsel %vm1193, %v1188, %v1197
        %1202 = vrot.lane.b32.xlu0 %v1198, 17
        %v1203 = vpop.permute.xlu0 %1202
        %1204 = vrot.lane.b32.xlu0 %v1200, 17
        %v1205 = vpop.permute.xlu0 %1204
        %1206 = vrot.lane.b32.xlu0 %v1199, 17
        %v1207 = vpop.permute.xlu0 %1206
        %1208 = vrot.lane.b32.xlu0 %v1201, 17
        %v1209 = vpop.permute.xlu0 %1208
        %v1210 = vsel %vm516, %v1203, %v1207
        %v1211 = vsel %vm516, %v1205, %v1209
        %v1212 = vsel %vm516, %v1207, %v1203
        %v1213 = vsel %vm516, %v1209, %v1205
        %v1214 = vld [vmem:[%s1] ss:$8 sm:$0x3]
        %v1216 = vlaneseq
        %v1217 = vshrl.u32 %v1216, 7
        %v1218 = vsub.s32 0, %v1217
        %v1219 = vrot.slane %v1214, %v1218
        %v1220 = vlaneseq
        %v1221 = vshrl.u32 %v1220, 7
        %v1222 = vsub.s32 1, %v1221
        %v1223 = vrot.slane %v1214, %v1222
        %v1226 = vmul.f32 %v1212, %v1219
        %v1227 = vmul.f32 %v1210, %v1223
        %v1228 = vmul.f32 %v1213, %v1219
        %v1229 = vmul.f32 %v1211, %v1223
        %1230 = vst [vmem:[#allocation2 + $0x240] sm:$0xff] %v1226
        %1231 = vst [vmem:[#allocation2 + $0x248] sm:$0xff] %v1227
        %1232 = vst [vmem:[#allocation2 + $0x250] sm:$0xff] %v1228
        %1233 = vst [vmem:[#allocation2 + $0x258] sm:$0xff] %v1229
        %1234 = vrot.lane.b32.xlu0 %v1198, 16
        %v1235 = vpop.permute.xlu0 %1234
        %1236 = vrot.lane.b32.xlu0 %v1200, 16
        %v1237 = vpop.permute.xlu0 %1236
        %1238 = vrot.lane.b32.xlu0 %v1199, 16
        %v1239 = vpop.permute.xlu0 %1238
        %1240 = vrot.lane.b32.xlu0 %v1201, 16
        %v1241 = vpop.permute.xlu0 %1240
        %v1242 = vsel %vm569, %v1235, %v1239
        %v1243 = vsel %vm569, %v1237, %v1241
        %v1244 = vsel %vm569, %v1239, %v1235
        %v1245 = vsel %vm569, %v1241, %v1237
        %v1246 = vld [vmem:[%s578] ss:$8 sm:$0x3]
        %v1248 = vlaneseq
        %v1249 = vshrl.u32 %v1248, 7
        %v1250 = vsub.s32 0, %v1249
        %v1251 = vrot.slane %v1246, %v1250
        %v1252 = vlaneseq
        %v1253 = vshrl.u32 %v1252, 7
        %v1254 = vsub.s32 1, %v1253
        %v1255 = vrot.slane %v1246, %v1254
        %v1258 = vmul.f32 %v1244, %v1251
        %v1259 = vmul.f32 %v1242, %v1255
        %v1260 = vmul.f32 %v1245, %v1251
        %v1261 = vmul.f32 %v1243, %v1255
        %1262 = vst [vmem:[#allocation2 + $0x260] sm:$0xff] %v1258
        %1263 = vst [vmem:[#allocation2 + $0x268] sm:$0xff] %v1259
        %1264 = vst [vmem:[#allocation2 + $0x270] sm:$0xff] %v1260
        %1265 = vst [vmem:[#allocation2 + $0x278] sm:$0xff] %v1261
        %1266 = vrot.lane.b32.xlu0 %v1198, 15
        %v1267 = vpop.permute.xlu0 %1266
        %1268 = vrot.lane.b32.xlu0 %v1200, 15
        %v1269 = vpop.permute.xlu0 %1268
        %1270 = vrot.lane.b32.xlu0 %v1199, 15
        %v1271 = vpop.permute.xlu0 %1270
        %1272 = vrot.lane.b32.xlu0 %v1201, 15
        %v1273 = vpop.permute.xlu0 %1272
        %v1274 = vsel %vm623, %v1267, %v1271
        %v1275 = vsel %vm623, %v1269, %v1273
        %v1276 = vsel %vm623, %v1271, %v1267
        %v1277 = vsel %vm623, %v1273, %v1269
        %v1278 = vld [vmem:[%s632] ss:$8 sm:$0x3]
        %v1280 = vlaneseq
        %v1281 = vshrl.u32 %v1280, 7
        %v1282 = vsub.s32 0, %v1281
        %v1283 = vrot.slane %v1278, %v1282
        %v1284 = vlaneseq
        %v1285 = vshrl.u32 %v1284, 7
        %v1286 = vsub.s32 1, %v1285
        %v1287 = vrot.slane %v1278, %v1286
        %v1290 = vmul.f32 %v1276, %v1283
        %v1291 = vmul.f32 %v1274, %v1287
        %v1292 = vmul.f32 %v1277, %v1283
        %v1293 = vmul.f32 %v1275, %v1287
        %1294 = vst [vmem:[#allocation2 + $0x280] sm:$0xff] %v1290
        %1295 = vst [vmem:[#allocation2 + $0x288] sm:$0xff] %v1291
        %1296 = vst [vmem:[#allocation2 + $0x290] sm:$0xff] %v1292
        %1297 = vst [vmem:[#allocation2 + $0x298] sm:$0xff] %v1293
        %1298 = vrot.lane.b32.xlu0 %v1198, 1
        %v1299 = vpop.permute.xlu0 %1298
        %1300 = vrot.lane.b32.xlu0 %v1200, 1
        %v1301 = vpop.permute.xlu0 %1300
        %1302 = vrot.lane.b32.xlu0 %v1199, 1
        %v1303 = vpop.permute.xlu0 %1302
        %1304 = vrot.lane.b32.xlu0 %v1201, 1
        %v1305 = vpop.permute.xlu0 %1304
        %v1306 = vsel %vm677, %v1299, %v1303
        %v1307 = vsel %vm677, %v1301, %v1305
        %v1308 = vsel %vm677, %v1303, %v1299
        %v1309 = vsel %vm677, %v1305, %v1301
        %v1310 = vld [vmem:[%s686] ss:$8 sm:$0x3]
        %v1312 = vlaneseq
        %v1313 = vshrl.u32 %v1312, 7
        %v1314 = vsub.s32 0, %v1313
        %v1315 = vrot.slane %v1310, %v1314
        %v1316 = vlaneseq
        %v1317 = vshrl.u32 %v1316, 7
        %v1318 = vsub.s32 1, %v1317
        %v1319 = vrot.slane %v1310, %v1318
        %v1322 = vmul.f32 %v1308, %v1315
        %v1323 = vmul.f32 %v1306, %v1319
        %v1324 = vmul.f32 %v1309, %v1315
        %v1325 = vmul.f32 %v1307, %v1319
        %1326 = vst [vmem:[#allocation2 + $0x2a0] sm:$0xff] %v1322
        %1327 = vst [vmem:[#allocation2 + $0x2a8] sm:$0xff] %v1323
        %1328 = vst [vmem:[#allocation2 + $0x2b0] sm:$0xff] %v1324
        %1329 = vst [vmem:[#allocation2 + $0x2b8] sm:$0xff] %v1325
        %1330 = vst [vmem:[#allocation2 + $0x2c0] sm:$0xff] %v1198
        %1331 = vst [vmem:[#allocation2 + $0x2c8] sm:$0xff] %v1199
        %1332 = vst [vmem:[#allocation2 + $0x2d0] sm:$0xff] %v1200
        %1333 = vst [vmem:[#allocation2 + $0x2d8] sm:$0xff] %v1201
        %1334 = vrot.lane.b32.xlu0 %v1198, 127
        %v1335 = vpop.permute.xlu0 %1334
        %1336 = vrot.lane.b32.xlu0 %v1200, 127
        %v1337 = vpop.permute.xlu0 %1336
        %1338 = vrot.lane.b32.xlu0 %v1199, 127
        %v1339 = vpop.permute.xlu0 %1338
        %1340 = vrot.lane.b32.xlu0 %v1201, 127
        %v1341 = vpop.permute.xlu0 %1340
        %v1342 = vsel %vm739, %v1335, %v1339
        %v1343 = vsel %vm739, %v1337, %v1341
        %v1344 = vsel %vm739, %v1339, %v1335
        %v1345 = vsel %vm739, %v1341, %v1337
        %v1346 = vld [vmem:[%s748] ss:$8 sm:$0x3]
        %v1348 = vlaneseq
        %v1349 = vshrl.u32 %v1348, 7
        %v1350 = vsub.s32 0, %v1349
        %v1351 = vrot.slane %v1346, %v1350
        %v1352 = vlaneseq
        %v1353 = vshrl.u32 %v1352, 7
        %v1354 = vsub.s32 1, %v1353
        %v1355 = vrot.slane %v1346, %v1354
        %v1358 = vmul.f32 %v1342, %v1351
        %v1359 = vmul.f32 %v1344, %v1355
        %v1360 = vmul.f32 %v1343, %v1351
        %v1361 = vmul.f32 %v1345, %v1355
        %1362 = vst [vmem:[#allocation2 + $0x2e0] sm:$0xff] %v1358
        %1363 = vst [vmem:[#allocation2 + $0x2e8] sm:$0xff] %v1359
        %1364 = vst [vmem:[#allocation2 + $0x2f0] sm:$0xff] %v1360
        %1365 = vst [vmem:[#allocation2 + $0x2f8] sm:$0xff] %v1361
        %1366 = vrot.lane.b32.xlu0 %v1198, 113
        %v1367 = vpop.permute.xlu0 %1366
        %1368 = vrot.lane.b32.xlu0 %v1200, 113
        %v1369 = vpop.permute.xlu0 %1368
        %1370 = vrot.lane.b32.xlu0 %v1199, 113
        %v1371 = vpop.permute.xlu0 %1370
        %1372 = vrot.lane.b32.xlu0 %v1201, 113
        %v1373 = vpop.permute.xlu0 %1372
        %v1374 = vsel %vm793, %v1367, %v1371
        %v1375 = vsel %vm793, %v1369, %v1373
        %v1376 = vsel %vm793, %v1371, %v1367
        %v1377 = vsel %vm793, %v1373, %v1369
        %v1378 = vld [vmem:[%s802] ss:$8 sm:$0x3]
        %v1380 = vlaneseq
        %v1381 = vshrl.u32 %v1380, 7
        %v1382 = vsub.s32 0, %v1381
        %v1383 = vrot.slane %v1378, %v1382
        %v1384 = vlaneseq
        %v1385 = vshrl.u32 %v1384, 7
        %v1386 = vsub.s32 1, %v1385
        %v1387 = vrot.slane %v1378, %v1386
        %v1390 = vmul.f32 %v1374, %v1383
        %v1391 = vmul.f32 %v1376, %v1387
        %v1392 = vmul.f32 %v1375, %v1383
        %v1393 = vmul.f32 %v1377, %v1387
        %1394 = vst [vmem:[#allocation2 + $0x300] sm:$0xff] %v1390
        %1395 = vst [vmem:[#allocation2 + $0x308] sm:$0xff] %v1391
        %1396 = vst [vmem:[#allocation2 + $0x310] sm:$0xff] %v1392
        %1397 = vst [vmem:[#allocation2 + $0x318] sm:$0xff] %v1393
        %1398 = vrot.lane.b32.xlu0 %v1198, 112
        %v1399 = vpop.permute.xlu0 %1398
        %1400 = vrot.lane.b32.xlu0 %v1200, 112
        %v1401 = vpop.permute.xlu0 %1400
        %1402 = vrot.lane.b32.xlu0 %v1199, 112
        %v1403 = vpop.permute.xlu0 %1402
        %1404 = vrot.lane.b32.xlu0 %v1201, 112
        %v1405 = vpop.permute.xlu0 %1404
        %v1406 = vsel %vm847, %v1399, %v1403
        %v1407 = vsel %vm847, %v1401, %v1405
        %v1408 = vsel %vm847, %v1403, %v1399
        %v1409 = vsel %vm847, %v1405, %v1401
        %v1410 = vld [vmem:[%s856] ss:$8 sm:$0x3]
        %v1412 = vlaneseq
        %v1413 = vshrl.u32 %v1412, 7
        %v1414 = vsub.s32 0, %v1413
        %v1415 = vrot.slane %v1410, %v1414
        %v1416 = vlaneseq
        %v1417 = vshrl.u32 %v1416, 7
        %v1418 = vsub.s32 1, %v1417
        %v1419 = vrot.slane %v1410, %v1418
        %v1422 = vmul.f32 %v1406, %v1415
        %v1423 = vmul.f32 %v1408, %v1419
        %v1424 = vmul.f32 %v1407, %v1415
        %v1425 = vmul.f32 %v1409, %v1419
        %1426 = vst [vmem:[#allocation2 + $0x320] sm:$0xff] %v1422
        %1427 = vst [vmem:[#allocation2 + $0x328] sm:$0xff] %v1423
        %1428 = vst [vmem:[#allocation2 + $0x330] sm:$0xff] %v1424
        %1429 = vst [vmem:[#allocation2 + $0x338] sm:$0xff] %v1425
        %1430 = vrot.lane.b32.xlu0 %v1198, 111
        %v1431 = vpop.permute.xlu0 %1430
        %1432 = vrot.lane.b32.xlu0 %v1200, 111
        %v1433 = vpop.permute.xlu0 %1432
        %1434 = vrot.lane.b32.xlu0 %v1199, 111
        %v1435 = vpop.permute.xlu0 %1434
        %1436 = vrot.lane.b32.xlu0 %v1201, 111
        %v1437 = vpop.permute.xlu0 %1436
        %v1438 = vsel %vm901, %v1431, %v1435
        %v1439 = vsel %vm901, %v1433, %v1437
        %v1440 = vsel %vm901, %v1435, %v1431
        %v1441 = vsel %vm901, %v1437, %v1433
        %v1442 = vld [vmem:[%s910] ss:$8 sm:$0x3]
        %v1444 = vlaneseq
        %v1445 = vshrl.u32 %v1444, 7
        %v1446 = vsub.s32 0, %v1445
        %v1447 = vrot.slane %v1442, %v1446
        %v1448 = vlaneseq
        %v1449 = vshrl.u32 %v1448, 7
        %v1450 = vsub.s32 1, %v1449
        %v1451 = vrot.slane %v1442, %v1450
        %v1454 = vmul.f32 %v1438, %v1447
        %v1455 = vmul.f32 %v1440, %v1451
        %v1456 = vmul.f32 %v1439, %v1447
        %v1457 = vmul.f32 %v1441, %v1451
        %1458 = vst [vmem:[#allocation2 + $0x340] sm:$0xff] %v1454
        %1459 = vst [vmem:[#allocation2 + $0x348] sm:$0xff] %v1455
        %1460 = vst [vmem:[#allocation2 + $0x350] sm:$0xff] %v1456
        %1461 = vst [vmem:[#allocation2 + $0x358] sm:$0xff] %v1457
        %v1462 = vld [vmem:[#allocation8] sm:$0xff]
        %v1463 = vld [vmem:[#allocation8 + $0x8] sm:$0xff]
        %v1464 = vld [vmem:[#allocation8 + $0x10] sm:$0xff]
        %v1465 = vld [vmem:[#allocation8 + $0x18] sm:$0xff]
        %v1466 = vld [vmem:[#allocation8 + $0x20] sm:$0xff]
        %v1467 = vld [vmem:[#allocation8 + $0x28] sm:$0xff]
        %v1468 = vld [vmem:[#allocation8 + $0x30] sm:$0xff]
        %v1469 = vld [vmem:[#allocation8 + $0x38] sm:$0xff]
        %v1470 = vld [vmem:[#allocation2] sm:$0xff]
        %v1471 = vld [vmem:[#allocation2 + $0x8] sm:$0xff]
        %v1472 = vld [vmem:[#allocation2 + $0x10] sm:$0xff]
        %v1473 = vld [vmem:[#allocation2 + $0x18] sm:$0xff]
        %v1474 = vld [vmem:[#allocation2 + $0x20] sm:$0xff]
        %v1475 = vld [vmem:[#allocation2 + $0x28] sm:$0xff]
        %v1476 = vld [vmem:[#allocation2 + $0x30] sm:$0xff]
        %v1477 = vld [vmem:[#allocation2 + $0x38] sm:$0xff]
        %v1478 = vld [vmem:[#allocation2 + $0x40] sm:$0xff]
        %v1479 = vld [vmem:[#allocation2 + $0x48] sm:$0xff]
        %v1480 = vld [vmem:[#allocation2 + $0x50] sm:$0xff]
        %v1481 = vld [vmem:[#allocation2 + $0x58] sm:$0xff]
        %v1482 = vld [vmem:[#allocation2 + $0x60] sm:$0xff]
        %v1483 = vld [vmem:[#allocation2 + $0x68] sm:$0xff]
        %v1484 = vld [vmem:[#allocation2 + $0x70] sm:$0xff]
        %v1485 = vld [vmem:[#allocation2 + $0x78] sm:$0xff]
        %v1486 = vld [vmem:[#allocation2 + $0x80] sm:$0xff]
        %v1487 = vld [vmem:[#allocation2 + $0x88] sm:$0xff]
        %v1488 = vld [vmem:[#allocation2 + $0x90] sm:$0xff]
        %v1489 = vld [vmem:[#allocation2 + $0x98] sm:$0xff]
        %v1490 = vld [vmem:[#allocation2 + $0xa0] sm:$0xff]
        %v1491 = vld [vmem:[#allocation2 + $0xa8] sm:$0xff]
        %v1492 = vld [vmem:[#allocation2 + $0xb0] sm:$0xff]
        %v1493 = vld [vmem:[#allocation2 + $0xb8] sm:$0xff]
        %v1494 = vld [vmem:[#allocation2 + $0xc0] sm:$0xff]
        %v1495 = vld [vmem:[#allocation2 + $0xc8] sm:$0xff]
        %v1496 = vld [vmem:[#allocation2 + $0xd0] sm:$0xff]
        %v1497 = vld [vmem:[#allocation2 + $0xd8] sm:$0xff]
        %v1498 = vld [vmem:[#allocation2 + $0xe0] sm:$0xff]
        %v1499 = vld [vmem:[#allocation2 + $0xe8] sm:$0xff]
        %v1500 = vld [vmem:[#allocation2 + $0xf0] sm:$0xff]
        %v1501 = vld [vmem:[#allocation2 + $0xf8] sm:$0xff]
        %v1502 = vld [vmem:[#allocation2 + $0x100] sm:$0xff]
        %v1503 = vld [vmem:[#allocation2 + $0x108] sm:$0xff]
        %v1504 = vld [vmem:[#allocation2 + $0x110] sm:$0xff]
        %v1505 = vld [vmem:[#allocation2 + $0x118] sm:$0xff]
        %v1506 = vld [vmem:[#allocation2 + $0x120] sm:$0xff]
        %v1507 = vld [vmem:[#allocation2 + $0x128] sm:$0xff]
        %v1508 = vld [vmem:[#allocation2 + $0x130] sm:$0xff]
        %v1509 = vld [vmem:[#allocation2 + $0x138] sm:$0xff]
        %v1510 = vld [vmem:[#allocation2 + $0x140] sm:$0xff]
        %v1511 = vld [vmem:[#allocation2 + $0x148] sm:$0xff]
        %v1512 = vld [vmem:[#allocation2 + $0x150] sm:$0xff]
        %v1513 = vld [vmem:[#allocation2 + $0x158] sm:$0xff]
        %v1514 = vld [vmem:[#allocation2 + $0x160] sm:$0xff]
        %v1515 = vld [vmem:[#allocation2 + $0x168] sm:$0xff]
        %v1516 = vld [vmem:[#allocation2 + $0x170] sm:$0xff]
        %v1517 = vld [vmem:[#allocation2 + $0x178] sm:$0xff]
        %v1518 = vld [vmem:[#allocation2 + $0x180] sm:$0xff]
        %v1519 = vld [vmem:[#allocation2 + $0x188] sm:$0xff]
        %v1520 = vld [vmem:[#allocation2 + $0x190] sm:$0xff]
        %v1521 = vld [vmem:[#allocation2 + $0x198] sm:$0xff]
        %v1522 = vld [vmem:[#allocation2 + $0x1a0] sm:$0xff]
        %v1523 = vld [vmem:[#allocation2 + $0x1a8] sm:$0xff]
        %v1524 = vld [vmem:[#allocation2 + $0x1b0] sm:$0xff]
        %v1525 = vld [vmem:[#allocation2 + $0x1b8] sm:$0xff]
        %v1526 = vld [vmem:[#allocation2 + $0x1c0] sm:$0xff]
        %v1527 = vld [vmem:[#allocation2 + $0x1c8] sm:$0xff]
        %v1528 = vld [vmem:[#allocation2 + $0x1d0] sm:$0xff]
        %v1529 = vld [vmem:[#allocation2 + $0x1d8] sm:$0xff]
        %v1530 = vld [vmem:[#allocation2 + $0x1e0] sm:$0xff]
        %v1531 = vld [vmem:[#allocation2 + $0x1e8] sm:$0xff]
        %v1532 = vld [vmem:[#allocation2 + $0x1f0] sm:$0xff]
        %v1533 = vld [vmem:[#allocation2 + $0x1f8] sm:$0xff]
        %v1534 = vld [vmem:[#allocation2 + $0x200] sm:$0xff]
        %v1535 = vld [vmem:[#allocation2 + $0x208] sm:$0xff]
        %v1536 = vld [vmem:[#allocation2 + $0x210] sm:$0xff]
        %v1537 = vld [vmem:[#allocation2 + $0x218] sm:$0xff]
        %v1538 = vld [vmem:[#allocation2 + $0x220] sm:$0xff]
        %v1539 = vld [vmem:[#allocation2 + $0x228] sm:$0xff]
        %v1540 = vld [vmem:[#allocation2 + $0x230] sm:$0xff]
        %v1541 = vld [vmem:[#allocation2 + $0x238] sm:$0xff]
        %v1542 = vld [vmem:[#allocation2 + $0x240] sm:$0xff]
        %v1543 = vld [vmem:[#allocation2 + $0x248] sm:$0xff]
        %v1544 = vld [vmem:[#allocation2 + $0x250] sm:$0xff]
        %v1545 = vld [vmem:[#allocation2 + $0x258] sm:$0xff]
        %v1546 = vld [vmem:[#allocation2 + $0x260] sm:$0xff]
        %v1547 = vld [vmem:[#allocation2 + $0x268] sm:$0xff]
        %v1548 = vld [vmem:[#allocation2 + $0x270] sm:$0xff]
        %v1549 = vld [vmem:[#allocation2 + $0x278] sm:$0xff]
        %v1550 = vld [vmem:[#allocation2 + $0x280] sm:$0xff]
        %v1551 = vld [vmem:[#allocation2 + $0x288] sm:$0xff]
        %v1552 = vld [vmem:[#allocation2 + $0x290] sm:$0xff]
        %v1553 = vld [vmem:[#allocation2 + $0x298] sm:$0xff]
        %v1554 = vld [vmem:[#allocation2 + $0x2a0] sm:$0xff]
        %v1555 = vld [vmem:[#allocation2 + $0x2a8] sm:$0xff]
        %v1556 = vld [vmem:[#allocation2 + $0x2b0] sm:$0xff]
        %v1557 = vld [vmem:[#allocation2 + $0x2b8] sm:$0xff]
        %v1558 = vld [vmem:[#allocation2 + $0x2c0] sm:$0xff]
        %v1559 = vld [vmem:[#allocation2 + $0x2c8] sm:$0xff]
        %v1560 = vld [vmem:[#allocation2 + $0x2d0] sm:$0xff]
        %v1561 = vld [vmem:[#allocation2 + $0x2d8] sm:$0xff]
        %v1562 = vld [vmem:[#allocation2 + $0x2e0] sm:$0xff]
        %v1563 = vld [vmem:[#allocation2 + $0x2e8] sm:$0xff]
        %v1564 = vld [vmem:[#allocation2 + $0x2f0] sm:$0xff]
        %v1565 = vld [vmem:[#allocation2 + $0x2f8] sm:$0xff]
        %v1566 = vld [vmem:[#allocation2 + $0x300] sm:$0xff]
        %v1567 = vld [vmem:[#allocation2 + $0x308] sm:$0xff]
        %v1568 = vld [vmem:[#allocation2 + $0x310] sm:$0xff]
        %v1569 = vld [vmem:[#allocation2 + $0x318] sm:$0xff]
        %v1570 = vld [vmem:[#allocation2 + $0x320] sm:$0xff]
        %v1571 = vld [vmem:[#allocation2 + $0x328] sm:$0xff]
        %v1572 = vld [vmem:[#allocation2 + $0x330] sm:$0xff]
        %v1573 = vld [vmem:[#allocation2 + $0x338] sm:$0xff]
        %v1574 = vld [vmem:[#allocation2 + $0x340] sm:$0xff]
        %v1575 = vld [vmem:[#allocation2 + $0x348] sm:$0xff]
        %v1576 = vld [vmem:[#allocation2 + $0x350] sm:$0xff]
        %v1577 = vld [vmem:[#allocation2 + $0x358] sm:$0xff]
        %v1578 = vld [vmem:[%s5] sm:$0xff]
        %v1579 = vld [vmem:[%s5 + $0x8] sm:$0xff]
        %1581 = vset.pattern.permute.xlu0 0
        %1582 = vperm.xlu0 %1581, %v1578
        %v1583 = vpop.permute.xlu0 %1582
        %1586 = vset.pattern.permute.xlu0 0
        %1587 = vperm.xlu0 %1586, %v1579
        %v1588 = vpop.permute.xlu0 %1587
        %vm1590 = vcmask 392192
        %v1592 = vsel %vm1590, %v1465, 0
        %v1595 = vsel %vm1590, %v1469, 0
        %1597 = vmatprep.subr.mxu0 %v1471
        %1598 = vmatpush1.msra.mxu0 %v1470
        %1599 = vmatprep.subr.mxu0 %v1473
        %1600 = vmatpush1.msra.mxu0 %v1472
        %1601 = vmatprep.subr.mxu0 %v1475
        %1602 = vmatpush1.msra.mxu0 %v1474
        %1603 = vmatprep.subr.mxu0 %v1477
        %1604 = vmatpush1.msra.mxu0 %v1476
        %1605 = vmatprep.subr.mxu0 %v1479
        %1606 = vmatpush1.msra.mxu0 %v1478
        %1607 = vmatprep.subr.mxu0 %v1481
        %1608 = vmatpush1.msra.mxu0 %v1480
        %1609 = vmatprep.subr.mxu0 %v1483
        %1610 = vmatpush1.msra.mxu0 %v1482
        %1611 = vmatprep.subr.mxu0 %v1485
        %1612 = vmatpush1.msra.mxu0 %v1484
        %1613 = vmatprep.subr.mxu0 %v1487
        %1614 = vmatpush1.msra.mxu0 %v1486
        %1615 = vmatprep.subr.mxu0 %v1489
        %1616 = vmatpush1.msra.mxu0 %v1488
        %1617 = vmatprep.subr.mxu0 %v1491
        %1618 = vmatpush1.msra.mxu0 %v1490
        %1619 = vmatprep.subr.mxu0 %v1493
        %1620 = vmatpush1.msra.mxu0 %v1492
        %1621 = vmatprep.subr.mxu0 %v1495
        %1622 = vmatpush1.msra.mxu0 %v1494
        %1623 = vmatprep.subr.mxu0 %v1497
        %1624 = vmatpush1.msra.mxu0 %v1496
        %1625 = vmatprep.subr.mxu0 %v1499
        %1626 = vmatpush1.msra.mxu0 %v1498
        %1627 = vmatprep.subr.mxu0 %v1501
        %1628 = vmatpush1.msra.mxu0 %v1500
        %1629 = vmatprep.subr.mxu0 %v1503
        %1630 = vmatpush1.msra.mxu0 %v1502
        %1631 = vmatprep.subr.mxu0 %v1505
        %1632 = vmatpush1.msra.mxu0 %v1504
        %1633 = vmatprep.subr.mxu0 %v1507
        %1634 = vmatpush1.msra.mxu0 %v1506
        %1635 = vmatprep.subr.mxu0 %v1509
        %1636 = vmatpush1.msra.mxu0 %v1508
        %1637 = vmatprep.subr.mxu0 %v1511
        %1638 = vmatpush1.msra.mxu0 %v1510
        %1639 = vmatprep.subr.mxu0 %v1513
        %1640 = vmatpush1.msra.mxu0 %v1512
        %1641 = vmatprep.subr.mxu0 %v1515
        %1642 = vmatpush1.msra.mxu0 %v1514
        %1643 = vmatprep.subr.mxu0 %v1517
        %1644 = vmatpush1.msra.mxu0 %v1516
        %1645 = vmatprep.subr.mxu0 %v1519
        %1646 = vmatpush1.msra.mxu0 %v1518
        %1647 = vmatprep.subr.mxu0 %v1521
        %1648 = vmatpush1.msra.mxu0 %v1520
        %1649 = vmatprep.subr.mxu0 %v1523
        %1650 = vmatpush1.msra.mxu0 %v1522
        %1651 = vmatprep.subr.mxu0 %v1525
        %1652 = vmatpush1.msra.mxu0 %v1524
        %1653 = vmatprep.subr.mxu0 %v1527
        %1654 = vmatpush1.msra.mxu0 %v1526
        %1655 = vmatprep.subr.mxu0 %v1529
        %1656 = vmatpush1.msra.mxu0 %v1528
        %1657 = vmatprep.subr.mxu0 %v1531
        %1658 = vmatpush1.msra.mxu0 %v1530
        %1659 = vmatprep.subr.mxu0 %v1533
        %1660 = vmatpush1.msra.mxu0 %v1532
        %1661 = vmatprep.mubr.f32.mxu0 %v1463
        %1662 = vmatmul.mubr.f32.gmra.mrb[0].mxu0 %v1462
        %v1663 = vpop.f32.mrb[0].mxu0
        %v1664 = vadd.f32 %v1583, %v1663
        %v1665 = vpop.f32.mrb[0].mxu0
        %v1666 = vadd.f32 %v1583, %v1665
        %1667 = vmatprep.mubr.f32.mxu0 %v1467
        %1668 = vmatmul.mubr.f32.gmra.mrb[0].mxu0 %v1466
        %v1669 = vpop.f32.mrb[0].mxu0
        %v1670 = vadd.f32 %v1588, %v1669
        %v1671 = vpop.f32.mrb[0].mxu0
        %v1672 = vadd.f32 %v1588, %v1671
        %1673 = vdwg.mxu0
        %1674 = vmatprep.subr.mxu0 %v1535
        %1675 = vmatpush1.msra.mxu0 %v1534
        %1676 = vmatprep.subr.mxu0 %v1537
        %1677 = vmatpush1.msra.mxu0 %v1536
        %1678 = vmatprep.subr.mxu0 %v1539
        %1679 = vmatpush1.msra.mxu0 %v1538
        %1680 = vmatprep.subr.mxu0 %v1541
        %1681 = vmatpush1.msra.mxu0 %v1540
        %1682 = vmatprep.subr.mxu0 %v1543
        %1683 = vmatpush1.msra.mxu0 %v1542
        %1684 = vmatprep.subr.mxu0 %v1545
        %1685 = vmatpush1.msra.mxu0 %v1544
        %1686 = vmatprep.subr.mxu0 %v1547
        %1687 = vmatpush1.msra.mxu0 %v1546
        %1688 = vmatprep.subr.mxu0 %v1549
        %1689 = vmatpush1.msra.mxu0 %v1548
        %1690 = vmatprep.subr.mxu0 %v1551
        %1691 = vmatpush1.msra.mxu0 %v1550
        %1692 = vmatprep.subr.mxu0 %v1553
        %1693 = vmatpush1.msra.mxu0 %v1552
        %1694 = vmatprep.subr.mxu0 %v1555
        %1695 = vmatpush1.msra.mxu0 %v1554
        %1696 = vmatprep.subr.mxu0 %v1557
        %1697 = vmatpush1.msra.mxu0 %v1556
        %1698 = vmatprep.subr.mxu0 %v1559
        %1699 = vmatpush1.msra.mxu0 %v1558
        %1700 = vmatprep.subr.mxu0 %v1561
        %1701 = vmatpush1.msra.mxu0 %v1560
        %1702 = vmatprep.subr.mxu0 %v1563
        %1703 = vmatpush1.msra.mxu0 %v1562
        %1704 = vmatprep.subr.mxu0 %v1565
        %1705 = vmatpush1.msra.mxu0 %v1564
        %1706 = vmatprep.subr.mxu0 %v1567
        %1707 = vmatpush1.msra.mxu0 %v1566
        %1708 = vmatprep.subr.mxu0 %v1569
        %1709 = vmatpush1.msra.mxu0 %v1568
        %1710 = vmatprep.subr.mxu0 %v1571
        %1711 = vmatpush1.msra.mxu0 %v1570
        %1712 = vmatprep.subr.mxu0 %v1573
        %1713 = vmatpush1.msra.mxu0 %v1572
        %1714 = vmatprep.subr.mxu0 %v1575
        %1715 = vmatpush1.msra.mxu0 %v1574
        %1716 = vmatprep.subr.mxu0 %v1577
        %1717 = vmatpush1.msra.mxu0 %v1576
        %1718 = vmatprep.subr.mxu0 0.0
        %1719 = vmatpush1.msra.mxu0 0.0
        %1720 = vmatprep.subr.mxu0 0.0
        %1721 = vmatpush1.msra.mxu0 0.0
        %1722 = vmatprep.subr.mxu0 0.0
        %1723 = vmatpush1.msra.mxu0 0.0
        %1724 = vmatprep.subr.mxu0 0.0
        %1725 = vmatpush1.msra.mxu0 0.0
        %1726 = vmatprep.subr.mxu0 0.0
        %1727 = vmatpush1.msra.mxu0 0.0
        %1728 = vmatprep.subr.mxu0 0.0
        %1729 = vmatpush1.msra.mxu0 0.0
        %1730 = vmatprep.subr.mxu0 0.0
        %1731 = vmatpush1.msra.mxu0 0.0
        %1732 = vmatprep.subr.mxu0 0.0
        %1733 = vmatpush1.msra.mxu0 0.0
        %1734 = vmatprep.subr.mxu0 0.0
        %1735 = vmatpush1.msra.mxu0 0.0
        %1736 = vmatprep.subr.mxu0 0.0
        %1737 = vmatpush1.msra.mxu0 0.0
        %1738 = vmatprep.mubr.f32.mxu0 %v1592
        %1739 = vmatmul.mubr.f32.gmra.mrb[0].mxu0 %v1464
        %v1740 = vpop.f32.mrb[0].mxu0
        %v1741 = vadd.f32 %v1664, %v1740
        %v1742 = vpop.f32.mrb[0].mxu0
        %v1743 = vadd.f32 %v1666, %v1742
        %1744 = vmatprep.mubr.f32.mxu0 %v1595
        %1745 = vmatmul.mubr.f32.gmra.mrb[0].mxu0 %v1468
        %v1746 = vpop.f32.mrb[0].mxu0
        %v1747 = vadd.f32 %v1670, %v1746
        %v1748 = vpop.f32.mrb[0].mxu0
        %v1749 = vadd.f32 %v1672, %v1748
        %1750 = vdwg.mxu0
        %vm1751 = vcmp.ge.f32.partialorder %v1741, 0.0
        %vm1752 = vcmp.ge.f32.partialorder %v1743, 0.0
        %vm1753 = vcmp.ge.f32.partialorder %v1747, 0.0
        %vm1754 = vcmp.ge.f32.partialorder %v1749, 0.0
        %v1755 = vmul.f32 %v1741, 0.2
        %v1756 = vmul.f32 %v1743, 0.2
        %v1757 = vmul.f32 %v1747, 0.2
        %v1758 = vmul.f32 %v1749, 0.2
        %v1759 = vsel %vm1751, %v1741, %v1755
        %v1760 = vsel %vm1752, %v1743, %v1756
        %v1761 = vsel %vm1753, %v1747, %v1757
        %v1762 = vsel %vm1754, %v1749, %v1758
        %1763 = vrot.lane.b32.xlu0 %v1759, 17
        %v1764 = vpop.permute.xlu0 %1763
        %1765 = vrot.lane.b32.xlu0 %v1761, 17
        %v1766 = vpop.permute.xlu0 %1765
        %1767 = vrot.lane.b32.xlu0 %v1760, 17
        %v1768 = vpop.permute.xlu0 %1767
        %1769 = vrot.lane.b32.xlu0 %v1762, 17
        %v1770 = vpop.permute.xlu0 %1769
        %v1771 = vsel %vm516, %v1764, %v1768
        %v1772 = vsel %vm516, %v1766, %v1770
        %v1773 = vsel %vm516, %v1768, %v1764
        %v1774 = vsel %vm516, %v1770, %v1766
        %v1775 = vld [vmem:[%s1] ss:$8 sm:$0x3]
        %v1777 = vlaneseq
        %v1778 = vshrl.u32 %v1777, 7
        %v1779 = vsub.s32 0, %v1778
        %v1780 = vrot.slane %v1775, %v1779
        %v1781 = vlaneseq
        %v1782 = vshrl.u32 %v1781, 7
        %v1783 = vsub.s32 1, %v1782
        %v1784 = vrot.slane %v1775, %v1783
        %v1787 = vmul.f32 %v1773, %v1780
        %v1788 = vmul.f32 %v1771, %v1784
        %v1789 = vmul.f32 %v1774, %v1780
        %v1790 = vmul.f32 %v1772, %v1784
        %1791 = vst [vmem:[#allocation2 + $0x360] sm:$0xff] %v1787
        %1792 = vst [vmem:[#allocation2 + $0x368] sm:$0xff] %v1788
        %1793 = vst [vmem:[#allocation2 + $0x370] sm:$0xff] %v1789
        %1794 = vst [vmem:[#allocation2 + $0x378] sm:$0xff] %v1790
        %1795 = vrot.lane.b32.xlu0 %v1759, 16
        %v1796 = vpop.permute.xlu0 %1795
        %1797 = vrot.lane.b32.xlu0 %v1761, 16
        %v1798 = vpop.permute.xlu0 %1797
        %1799 = vrot.lane.b32.xlu0 %v1760, 16
        %v1800 = vpop.permute.xlu0 %1799
        %1801 = vrot.lane.b32.xlu0 %v1762, 16
        %v1802 = vpop.permute.xlu0 %1801
        %v1803 = vsel %vm569, %v1796, %v1800
        %v1804 = vsel %vm569, %v1798, %v1802
        %v1805 = vsel %vm569, %v1800, %v1796
        %v1806 = vsel %vm569, %v1802, %v1798
        %v1807 = vld [vmem:[%s578] ss:$8 sm:$0x3]
        %v1809 = vlaneseq
        %v1810 = vshrl.u32 %v1809, 7
        %v1811 = vsub.s32 0, %v1810
        %v1812 = vrot.slane %v1807, %v1811
        %v1813 = vlaneseq
        %v1814 = vshrl.u32 %v1813, 7
        %v1815 = vsub.s32 1, %v1814
        %v1816 = vrot.slane %v1807, %v1815
        %v1819 = vmul.f32 %v1805, %v1812
        %v1820 = vmul.f32 %v1803, %v1816
        %v1821 = vmul.f32 %v1806, %v1812
        %v1822 = vmul.f32 %v1804, %v1816
        %1823 = vst [vmem:[#allocation2 + $0x380] sm:$0xff] %v1819
        %1824 = vst [vmem:[#allocation2 + $0x388] sm:$0xff] %v1820
        %1825 = vst [vmem:[#allocation2 + $0x390] sm:$0xff] %v1821
        %1826 = vst [vmem:[#allocation2 + $0x398] sm:$0xff] %v1822
        %1827 = vrot.lane.b32.xlu0 %v1759, 15
        %v1828 = vpop.permute.xlu0 %1827
        %1829 = vrot.lane.b32.xlu0 %v1761, 15
        %v1830 = vpop.permute.xlu0 %1829
        %1831 = vrot.lane.b32.xlu0 %v1760, 15
        %v1832 = vpop.permute.xlu0 %1831
        %1833 = vrot.lane.b32.xlu0 %v1762, 15
        %v1834 = vpop.permute.xlu0 %1833
        %v1835 = vsel %vm623, %v1828, %v1832
        %v1836 = vsel %vm623, %v1830, %v1834
        %v1837 = vsel %vm623, %v1832, %v1828
        %v1838 = vsel %vm623, %v1834, %v1830
        %v1839 = vld [vmem:[%s632] ss:$8 sm:$0x3]
        %v1841 = vlaneseq
        %v1842 = vshrl.u32 %v1841, 7
        %v1843 = vsub.s32 0, %v1842
        %v1844 = vrot.slane %v1839, %v1843
        %v1845 = vlaneseq
        %v1846 = vshrl.u32 %v1845, 7
        %v1847 = vsub.s32 1, %v1846
        %v1848 = vrot.slane %v1839, %v1847
        %v1851 = vmul.f32 %v1837, %v1844
        %v1852 = vmul.f32 %v1835, %v1848
        %v1853 = vmul.f32 %v1838, %v1844
        %v1854 = vmul.f32 %v1836, %v1848
        %1855 = vst [vmem:[#allocation2 + $0x3a0] sm:$0xff] %v1851
        %1856 = vst [vmem:[#allocation2 + $0x3a8] sm:$0xff] %v1852
        %1857 = vst [vmem:[#allocation2 + $0x3b0] sm:$0xff] %v1853
        %1858 = vst [vmem:[#allocation2 + $0x3b8] sm:$0xff] %v1854
        %1859 = vrot.lane.b32.xlu0 %v1759, 1
        %v1860 = vpop.permute.xlu0 %1859
        %1861 = vrot.lane.b32.xlu0 %v1761, 1
        %v1862 = vpop.permute.xlu0 %1861
        %1863 = vrot.lane.b32.xlu0 %v1760, 1
        %v1864 = vpop.permute.xlu0 %1863
        %1865 = vrot.lane.b32.xlu0 %v1762, 1
        %v1866 = vpop.permute.xlu0 %1865
        %v1867 = vsel %vm677, %v1860, %v1864
        %v1868 = vsel %vm677, %v1862, %v1866
        %v1869 = vsel %vm677, %v1864, %v1860
        %v1870 = vsel %vm677, %v1866, %v1862
        %v1871 = vld [vmem:[%s686] ss:$8 sm:$0x3]
        %v1873 = vlaneseq
        %v1874 = vshrl.u32 %v1873, 7
        %v1875 = vsub.s32 0, %v1874
        %v1876 = vrot.slane %v1871, %v1875
        %v1877 = vlaneseq
        %v1878 = vshrl.u32 %v1877, 7
        %v1879 = vsub.s32 1, %v1878
        %v1880 = vrot.slane %v1871, %v1879
        %v1883 = vmul.f32 %v1869, %v1876
        %v1884 = vmul.f32 %v1867, %v1880
        %v1885 = vmul.f32 %v1870, %v1876
        %v1886 = vmul.f32 %v1868, %v1880
        %1887 = vst [vmem:[#allocation2 + $0x3c0] sm:$0xff] %v1883
        %1888 = vst [vmem:[#allocation2 + $0x3c8] sm:$0xff] %v1884
        %1889 = vst [vmem:[#allocation2 + $0x3d0] sm:$0xff] %v1885
        %1890 = vst [vmem:[#allocation2 + $0x3d8] sm:$0xff] %v1886
        %1891 = vst [vmem:[#allocation2 + $0x3e0] sm:$0xff] %v1759
        %1892 = vst [vmem:[#allocation2 + $0x3e8] sm:$0xff] %v1760
        %1893 = vst [vmem:[#allocation2 + $0x3f0] sm:$0xff] %v1761
        %1894 = vst [vmem:[#allocation2 + $0x3f8] sm:$0xff] %v1762
        %1895 = vrot.lane.b32.xlu0 %v1759, 127
        %v1896 = vpop.permute.xlu0 %1895
        %1897 = vrot.lane.b32.xlu0 %v1761, 127
        %v1898 = vpop.permute.xlu0 %1897
        %1899 = vrot.lane.b32.xlu0 %v1760, 127
        %v1900 = vpop.permute.xlu0 %1899
        %1901 = vrot.lane.b32.xlu0 %v1762, 127
        %v1902 = vpop.permute.xlu0 %1901
        %v1903 = vsel %vm739, %v1896, %v1900
        %v1904 = vsel %vm739, %v1898, %v1902
        %v1905 = vsel %vm739, %v1900, %v1896
        %v1906 = vsel %vm739, %v1902, %v1898
        %v1907 = vld [vmem:[%s748] ss:$8 sm:$0x3]
        %v1909 = vlaneseq
        %v1910 = vshrl.u32 %v1909, 7
        %v1911 = vsub.s32 0, %v1910
        %v1912 = vrot.slane %v1907, %v1911
        %v1913 = vlaneseq
        %v1914 = vshrl.u32 %v1913, 7
        %v1915 = vsub.s32 1, %v1914
        %v1916 = vrot.slane %v1907, %v1915
        %v1919 = vmul.f32 %v1903, %v1912
        %v1920 = vmul.f32 %v1905, %v1916
        %v1921 = vmul.f32 %v1904, %v1912
        %v1922 = vmul.f32 %v1906, %v1916
        %1923 = vst [vmem:[#allocation2 + $0x400] sm:$0xff] %v1919
        %1924 = vst [vmem:[#allocation2 + $0x408] sm:$0xff] %v1920
        %1925 = vst [vmem:[#allocation2 + $0x410] sm:$0xff] %v1921
        %1926 = vst [vmem:[#allocation2 + $0x418] sm:$0xff] %v1922
        %1927 = vrot.lane.b32.xlu0 %v1759, 113
        %v1928 = vpop.permute.xlu0 %1927
        %1929 = vrot.lane.b32.xlu0 %v1761, 113
        %v1930 = vpop.permute.xlu0 %1929
        %1931 = vrot.lane.b32.xlu0 %v1760, 113
        %v1932 = vpop.permute.xlu0 %1931
        %1933 = vrot.lane.b32.xlu0 %v1762, 113
        %v1934 = vpop.permute.xlu0 %1933
        %v1935 = vsel %vm793, %v1928, %v1932
        %v1936 = vsel %vm793, %v1930, %v1934
        %v1937 = vsel %vm793, %v1932, %v1928
        %v1938 = vsel %vm793, %v1934, %v1930
        %v1939 = vld [vmem:[%s802] ss:$8 sm:$0x3]
        %v1941 = vlaneseq
        %v1942 = vshrl.u32 %v1941, 7
        %v1943 = vsub.s32 0, %v1942
        %v1944 = vrot.slane %v1939, %v1943
        %v1945 = vlaneseq
        %v1946 = vshrl.u32 %v1945, 7
        %v1947 = vsub.s32 1, %v1946
        %v1948 = vrot.slane %v1939, %v1947
        %v1951 = vmul.f32 %v1935, %v1944
        %v1952 = vmul.f32 %v1937, %v1948
        %v1953 = vmul.f32 %v1936, %v1944
        %v1954 = vmul.f32 %v1938, %v1948
        %1955 = vst [vmem:[#allocation2 + $0x420] sm:$0xff] %v1951
        %1956 = vst [vmem:[#allocation2 + $0x428] sm:$0xff] %v1952
        %1957 = vst [vmem:[#allocation2 + $0x430] sm:$0xff] %v1953
        %1958 = vst [vmem:[#allocation2 + $0x438] sm:$0xff] %v1954
        %1959 = vrot.lane.b32.xlu0 %v1759, 112
        %v1960 = vpop.permute.xlu0 %1959
        %1961 = vrot.lane.b32.xlu0 %v1761, 112
        %v1962 = vpop.permute.xlu0 %1961
        %1963 = vrot.lane.b32.xlu0 %v1760, 112
        %v1964 = vpop.permute.xlu0 %1963
        %1965 = vrot.lane.b32.xlu0 %v1762, 112
        %v1966 = vpop.permute.xlu0 %1965
        %v1967 = vsel %vm847, %v1960, %v1964
        %v1968 = vsel %vm847, %v1962, %v1966
        %v1969 = vsel %vm847, %v1964, %v1960
        %v1970 = vsel %vm847, %v1966, %v1962
        %v1971 = vld [vmem:[%s856] ss:$8 sm:$0x3]
        %v1973 = vlaneseq
        %v1974 = vshrl.u32 %v1973, 7
        %v1975 = vsub.s32 0, %v1974
        %v1976 = vrot.slane %v1971, %v1975
        %v1977 = vlaneseq
        %v1978 = vshrl.u32 %v1977, 7
        %v1979 = vsub.s32 1, %v1978
        %v1980 = vrot.slane %v1971, %v1979
        %v1983 = vmul.f32 %v1967, %v1976
        %v1984 = vmul.f32 %v1969, %v1980
        %v1985 = vmul.f32 %v1968, %v1976
        %v1986 = vmul.f32 %v1970, %v1980
        %1987 = vst [vmem:[#allocation2 + $0x440] sm:$0xff] %v1983
        %1988 = vst [vmem:[#allocation2 + $0x448] sm:$0xff] %v1984
        %1989 = vst [vmem:[#allocation2 + $0x450] sm:$0xff] %v1985
        %1990 = vst [vmem:[#allocation2 + $0x458] sm:$0xff] %v1986
        %1991 = vrot.lane.b32.xlu0 %v1759, 111
        %v1992 = vpop.permute.xlu0 %1991
        %1993 = vrot.lane.b32.xlu0 %v1761, 111
        %v1994 = vpop.permute.xlu0 %1993
        %1995 = vrot.lane.b32.xlu0 %v1760, 111
        %v1996 = vpop.permute.xlu0 %1995
        %1997 = vrot.lane.b32.xlu0 %v1762, 111
        %v1998 = vpop.permute.xlu0 %1997
        %v1999 = vsel %vm901, %v1992, %v1996
        %v2000 = vsel %vm901, %v1994, %v1998
        %v2001 = vsel %vm901, %v1996, %v1992
        %v2002 = vsel %vm901, %v1998, %v1994
        %v2003 = vld [vmem:[%s910] ss:$8 sm:$0x3]
        %v2005 = vlaneseq
        %v2006 = vshrl.u32 %v2005, 7
        %v2007 = vsub.s32 0, %v2006
        %v2008 = vrot.slane %v2003, %v2007
        %v2009 = vlaneseq
        %v2010 = vshrl.u32 %v2009, 7
        %v2011 = vsub.s32 1, %v2010
        %v2012 = vrot.slane %v2003, %v2011
        %v2015 = vmul.f32 %v1999, %v2008
        %v2016 = vmul.f32 %v2001, %v2012
        %v2017 = vmul.f32 %v2000, %v2008
        %v2018 = vmul.f32 %v2002, %v2012
        %2019 = vst [vmem:[#allocation2 + $0x460] sm:$0xff] %v2015
        %2020 = vst [vmem:[#allocation2 + $0x468] sm:$0xff] %v2016
        %2021 = vst [vmem:[#allocation2 + $0x470] sm:$0xff] %v2017
        %2022 = vst [vmem:[#allocation2 + $0x478] sm:$0xff] %v2018
        %v2023 = vld [vmem:[#allocation9] sm:$0xff]
        %v2024 = vld [vmem:[#allocation9 + $0x8] sm:$0xff]
        %v2025 = vld [vmem:[#allocation9 + $0x10] sm:$0xff]
        %v2026 = vld [vmem:[#allocation9 + $0x18] sm:$0xff]
        %v2027 = vld [vmem:[#allocation9 + $0x20] sm:$0xff]
        %v2028 = vld [vmem:[#allocation9 + $0x28] sm:$0xff]
        %v2029 = vld [vmem:[#allocation9 + $0x30] sm:$0xff]
        %v2030 = vld [vmem:[#allocation9 + $0x38] sm:$0xff]
        %v2031 = vld [vmem:[#allocation9 + $0x40] sm:$0xff]
        %v2032 = vld [vmem:[#allocation9 + $0x48] sm:$0xff]
        %v2033 = vld [vmem:[#allocation2] sm:$0xff]
        %v2034 = vld [vmem:[#allocation2 + $0x8] sm:$0xff]
        %v2035 = vld [vmem:[#allocation2 + $0x10] sm:$0xff]
        %v2036 = vld [vmem:[#allocation2 + $0x18] sm:$0xff]
        %v2037 = vld [vmem:[#allocation2 + $0x20] sm:$0xff]
        %v2038 = vld [vmem:[#allocation2 + $0x28] sm:$0xff]
        %v2039 = vld [vmem:[#allocation2 + $0x30] sm:$0xff]
        %v2040 = vld [vmem:[#allocation2 + $0x38] sm:$0xff]
        %v2041 = vld [vmem:[#allocation2 + $0x40] sm:$0xff]
        %v2042 = vld [vmem:[#allocation2 + $0x48] sm:$0xff]
        %v2043 = vld [vmem:[#allocation2 + $0x50] sm:$0xff]
        %v2044 = vld [vmem:[#allocation2 + $0x58] sm:$0xff]
        %v2045 = vld [vmem:[#allocation2 + $0x60] sm:$0xff]
        %v2046 = vld [vmem:[#allocation2 + $0x68] sm:$0xff]
        %v2047 = vld [vmem:[#allocation2 + $0x70] sm:$0xff]
        %v2048 = vld [vmem:[#allocation2 + $0x78] sm:$0xff]
        %v2049 = vld [vmem:[#allocation2 + $0x80] sm:$0xff]
        %v2050 = vld [vmem:[#allocation2 + $0x88] sm:$0xff]
        %v2051 = vld [vmem:[#allocation2 + $0x90] sm:$0xff]
        %v2052 = vld [vmem:[#allocation2 + $0x98] sm:$0xff]
        %v2053 = vld [vmem:[#allocation2 + $0xa0] sm:$0xff]
        %v2054 = vld [vmem:[#allocation2 + $0xa8] sm:$0xff]
        %v2055 = vld [vmem:[#allocation2 + $0xb0] sm:$0xff]
        %v2056 = vld [vmem:[#allocation2 + $0xb8] sm:$0xff]
        %v2057 = vld [vmem:[#allocation2 + $0xc0] sm:$0xff]
        %v2058 = vld [vmem:[#allocation2 + $0xc8] sm:$0xff]
        %v2059 = vld [vmem:[#allocation2 + $0xd0] sm:$0xff]
        %v2060 = vld [vmem:[#allocation2 + $0xd8] sm:$0xff]
        %v2061 = vld [vmem:[#allocation2 + $0xe0] sm:$0xff]
        %v2062 = vld [vmem:[#allocation2 + $0xe8] sm:$0xff]
        %v2063 = vld [vmem:[#allocation2 + $0xf0] sm:$0xff]
        %v2064 = vld [vmem:[#allocation2 + $0xf8] sm:$0xff]
        %v2065 = vld [vmem:[#allocation2 + $0x100] sm:$0xff]
        %v2066 = vld [vmem:[#allocation2 + $0x108] sm:$0xff]
        %v2067 = vld [vmem:[#allocation2 + $0x110] sm:$0xff]
        %v2068 = vld [vmem:[#allocation2 + $0x118] sm:$0xff]
        %v2069 = vld [vmem:[#allocation2 + $0x120] sm:$0xff]
        %v2070 = vld [vmem:[#allocation2 + $0x128] sm:$0xff]
        %v2071 = vld [vmem:[#allocation2 + $0x130] sm:$0xff]
        %v2072 = vld [vmem:[#allocation2 + $0x138] sm:$0xff]
        %v2073 = vld [vmem:[#allocation2 + $0x140] sm:$0xff]
        %v2074 = vld [vmem:[#allocation2 + $0x148] sm:$0xff]
        %v2075 = vld [vmem:[#allocation2 + $0x150] sm:$0xff]
        %v2076 = vld [vmem:[#allocation2 + $0x158] sm:$0xff]
        %v2077 = vld [vmem:[#allocation2 + $0x160] sm:$0xff]
        %v2078 = vld [vmem:[#allocation2 + $0x168] sm:$0xff]
        %v2079 = vld [vmem:[#allocation2 + $0x170] sm:$0xff]
        %v2080 = vld [vmem:[#allocation2 + $0x178] sm:$0xff]
        %v2081 = vld [vmem:[#allocation2 + $0x180] sm:$0xff]
        %v2082 = vld [vmem:[#allocation2 + $0x188] sm:$0xff]
        %v2083 = vld [vmem:[#allocation2 + $0x190] sm:$0xff]
        %v2084 = vld [vmem:[#allocation2 + $0x198] sm:$0xff]
        %v2085 = vld [vmem:[#allocation2 + $0x1a0] sm:$0xff]
        %v2086 = vld [vmem:[#allocation2 + $0x1a8] sm:$0xff]
        %v2087 = vld [vmem:[#allocation2 + $0x1b0] sm:$0xff]
        %v2088 = vld [vmem:[#allocation2 + $0x1b8] sm:$0xff]
        %v2089 = vld [vmem:[#allocation2 + $0x1c0] sm:$0xff]
        %v2090 = vld [vmem:[#allocation2 + $0x1c8] sm:$0xff]
        %v2091 = vld [vmem:[#allocation2 + $0x1d0] sm:$0xff]
        %v2092 = vld [vmem:[#allocation2 + $0x1d8] sm:$0xff]
        %v2093 = vld [vmem:[#allocation2 + $0x1e0] sm:$0xff]
        %v2094 = vld [vmem:[#allocation2 + $0x1e8] sm:$0xff]
        %v2095 = vld [vmem:[#allocation2 + $0x1f0] sm:$0xff]
        %v2096 = vld [vmem:[#allocation2 + $0x1f8] sm:$0xff]
        %v2097 = vld [vmem:[#allocation2 + $0x200] sm:$0xff]
        %v2098 = vld [vmem:[#allocation2 + $0x208] sm:$0xff]
        %v2099 = vld [vmem:[#allocation2 + $0x210] sm:$0xff]
        %v2100 = vld [vmem:[#allocation2 + $0x218] sm:$0xff]
        %v2101 = vld [vmem:[#allocation2 + $0x220] sm:$0xff]
        %v2102 = vld [vmem:[#allocation2 + $0x228] sm:$0xff]
        %v2103 = vld [vmem:[#allocation2 + $0x230] sm:$0xff]
        %v2104 = vld [vmem:[#allocation2 + $0x238] sm:$0xff]
        %v2105 = vld [vmem:[#allocation2 + $0x240] sm:$0xff]
        %v2106 = vld [vmem:[#allocation2 + $0x248] sm:$0xff]
        %v2107 = vld [vmem:[#allocation2 + $0x250] sm:$0xff]
        %v2108 = vld [vmem:[#allocation2 + $0x258] sm:$0xff]
        %v2109 = vld [vmem:[#allocation2 + $0x260] sm:$0xff]
        %v2110 = vld [vmem:[#allocation2 + $0x268] sm:$0xff]
        %v2111 = vld [vmem:[#allocation2 + $0x270] sm:$0xff]
        %v2112 = vld [vmem:[#allocation2 + $0x278] sm:$0xff]
        %v2113 = vld [vmem:[#allocation2 + $0x280] sm:$0xff]
        %v2114 = vld [vmem:[#allocation2 + $0x288] sm:$0xff]
        %v2115 = vld [vmem:[#allocation2 + $0x290] sm:$0xff]
        %v2116 = vld [vmem:[#allocation2 + $0x298] sm:$0xff]
        %v2117 = vld [vmem:[#allocation2 + $0x2a0] sm:$0xff]
        %v2118 = vld [vmem:[#allocation2 + $0x2a8] sm:$0xff]
        %v2119 = vld [vmem:[#allocation2 + $0x2b0] sm:$0xff]
        %v2120 = vld [vmem:[#allocation2 + $0x2b8] sm:$0xff]
        %v2121 = vld [vmem:[#allocation2 + $0x2c0] sm:$0xff]
        %v2122 = vld [vmem:[#allocation2 + $0x2c8] sm:$0xff]
        %v2123 = vld [vmem:[#allocation2 + $0x2d0] sm:$0xff]
        %v2124 = vld [vmem:[#allocation2 + $0x2d8] sm:$0xff]
        %v2125 = vld [vmem:[#allocation2 + $0x2e0] sm:$0xff]
        %v2126 = vld [vmem:[#allocation2 + $0x2e8] sm:$0xff]
        %v2127 = vld [vmem:[#allocation2 + $0x2f0] sm:$0xff]
        %v2128 = vld [vmem:[#allocation2 + $0x2f8] sm:$0xff]
        %v2129 = vld [vmem:[#allocation2 + $0x300] sm:$0xff]
        %v2130 = vld [vmem:[#allocation2 + $0x308] sm:$0xff]
        %v2131 = vld [vmem:[#allocation2 + $0x310] sm:$0xff]
        %v2132 = vld [vmem:[#allocation2 + $0x318] sm:$0xff]
        %v2133 = vld [vmem:[#allocation2 + $0x320] sm:$0xff]
        %v2134 = vld [vmem:[#allocation2 + $0x328] sm:$0xff]
        %v2135 = vld [vmem:[#allocation2 + $0x330] sm:$0xff]
        %v2136 = vld [vmem:[#allocation2 + $0x338] sm:$0xff]
        %v2137 = vld [vmem:[#allocation2 + $0x340] sm:$0xff]
        %v2138 = vld [vmem:[#allocation2 + $0x348] sm:$0xff]
        %v2139 = vld [vmem:[#allocation2 + $0x350] sm:$0xff]
        %v2140 = vld [vmem:[#allocation2 + $0x358] sm:$0xff]
        %v2141 = vld [vmem:[#allocation2 + $0x360] sm:$0xff]
        %v2142 = vld [vmem:[#allocation2 + $0x368] sm:$0xff]
        %v2143 = vld [vmem:[#allocation2 + $0x370] sm:$0xff]
        %v2144 = vld [vmem:[#allocation2 + $0x378] sm:$0xff]
        %v2145 = vld [vmem:[#allocation2 + $0x380] sm:$0xff]
        %v2146 = vld [vmem:[#allocation2 + $0x388] sm:$0xff]
        %v2147 = vld [vmem:[#allocation2 + $0x390] sm:$0xff]
        %v2148 = vld [vmem:[#allocation2 + $0x398] sm:$0xff]
        %v2149 = vld [vmem:[#allocation2 + $0x3a0] sm:$0xff]
        %v2150 = vld [vmem:[#allocation2 + $0x3a8] sm:$0xff]
        %v2151 = vld [vmem:[#allocation2 + $0x3b0] sm:$0xff]
        %v2152 = vld [vmem:[#allocation2 + $0x3b8] sm:$0xff]
        %v2153 = vld [vmem:[#allocation2 + $0x3c0] sm:$0xff]
        %v2154 = vld [vmem:[#allocation2 + $0x3c8] sm:$0xff]
        %v2155 = vld [vmem:[#allocation2 + $0x3d0] sm:$0xff]
        %v2156 = vld [vmem:[#allocation2 + $0x3d8] sm:$0xff]
        %v2157 = vld [vmem:[#allocation2 + $0x3e0] sm:$0xff]
        %v2158 = vld [vmem:[#allocation2 + $0x3e8] sm:$0xff]
        %v2159 = vld [vmem:[#allocation2 + $0x3f0] sm:$0xff]
        %v2160 = vld [vmem:[#allocation2 + $0x3f8] sm:$0xff]
        %v2161 = vld [vmem:[#allocation2 + $0x400] sm:$0xff]
        %v2162 = vld [vmem:[#allocation2 + $0x408] sm:$0xff]
        %v2163 = vld [vmem:[#allocation2 + $0x410] sm:$0xff]
        %v2164 = vld [vmem:[#allocation2 + $0x418] sm:$0xff]
        %v2165 = vld [vmem:[#allocation2 + $0x420] sm:$0xff]
        %v2166 = vld [vmem:[#allocation2 + $0x428] sm:$0xff]
        %v2167 = vld [vmem:[#allocation2 + $0x430] sm:$0xff]
        %v2168 = vld [vmem:[#allocation2 + $0x438] sm:$0xff]
        %v2169 = vld [vmem:[#allocation2 + $0x440] sm:$0xff]
        %v2170 = vld [vmem:[#allocation2 + $0x448] sm:$0xff]
        %v2171 = vld [vmem:[#allocation2 + $0x450] sm:$0xff]
        %v2172 = vld [vmem:[#allocation2 + $0x458] sm:$0xff]
        %v2173 = vld [vmem:[#allocation2 + $0x460] sm:$0xff]
        %v2174 = vld [vmem:[#allocation2 + $0x468] sm:$0xff]
        %v2175 = vld [vmem:[#allocation2 + $0x470] sm:$0xff]
        %v2176 = vld [vmem:[#allocation2 + $0x478] sm:$0xff]
        %v2177 = vld [vmem:[%s7] sm:$0xff]
        %v2178 = vld [vmem:[%s7 + $0x8] sm:$0xff]
        %2180 = vset.pattern.permute.xlu0 0
        %2181 = vperm.xlu0 %2180, %v2177
        %v2182 = vpop.permute.xlu0 %2181
        %2185 = vset.pattern.permute.xlu0 0
        %2186 = vperm.xlu0 %2185, %v2178
        %v2187 = vpop.permute.xlu0 %2186
        %vm2189 = vcmask 523264
        %v2191 = vsel %vm2189, %v2027, 0
        %v2194 = vsel %vm2189, %v2032, 0
        %2196 = vmatprep.subr.mxu0 %v2034
        %2197 = vmatpush1.msra.mxu0 %v2033
        %2198 = vmatprep.subr.mxu0 %v2036
        %2199 = vmatpush1.msra.mxu0 %v2035
        %2200 = vmatprep.subr.mxu0 %v2038
        %2201 = vmatpush1.msra.mxu0 %v2037
        %2202 = vmatprep.subr.mxu0 %v2040
        %2203 = vmatpush1.msra.mxu0 %v2039
        %2204 = vmatprep.subr.mxu0 %v2042
        %2205 = vmatpush1.msra.mxu0 %v2041
        %2206 = vmatprep.subr.mxu0 %v2044
        %2207 = vmatpush1.msra.mxu0 %v2043
        %2208 = vmatprep.subr.mxu0 %v2046
        %2209 = vmatpush1.msra.mxu0 %v2045
        %2210 = vmatprep.subr.mxu0 %v2048
        %2211 = vmatpush1.msra.mxu0 %v2047
        %2212 = vmatprep.subr.mxu0 %v2050
        %2213 = vmatpush1.msra.mxu0 %v2049
        %2214 = vmatprep.subr.mxu0 %v2052
        %2215 = vmatpush1.msra.mxu0 %v2051
        %2216 = vmatprep.subr.mxu0 %v2054
        %2217 = vmatpush1.msra.mxu0 %v2053
        %2218 = vmatprep.subr.mxu0 %v2056
        %2219 = vmatpush1.msra.mxu0 %v2055
        %2220 = vmatprep.subr.mxu0 %v2058
        %2221 = vmatpush1.msra.mxu0 %v2057
        %2222 = vmatprep.subr.mxu0 %v2060
        %2223 = vmatpush1.msra.mxu0 %v2059
        %2224 = vmatprep.subr.mxu0 %v2062
        %2225 = vmatpush1.msra.mxu0 %v2061
        %2226 = vmatprep.subr.mxu0 %v2064
        %2227 = vmatpush1.msra.mxu0 %v2063
        %2228 = vmatprep.subr.mxu0 %v2066
        %2229 = vmatpush1.msra.mxu0 %v2065
        %2230 = vmatprep.subr.mxu0 %v2068
        %2231 = vmatpush1.msra.mxu0 %v2067
        %2232 = vmatprep.subr.mxu0 %v2070
        %2233 = vmatpush1.msra.mxu0 %v2069
        %2234 = vmatprep.subr.mxu0 %v2072
        %2235 = vmatpush1.msra.mxu0 %v2071
        %2236 = vmatprep.subr.mxu0 %v2074
        %2237 = vmatpush1.msra.mxu0 %v2073
        %2238 = vmatprep.subr.mxu0 %v2076
        %2239 = vmatpush1.msra.mxu0 %v2075
        %2240 = vmatprep.subr.mxu0 %v2078
        %2241 = vmatpush1.msra.mxu0 %v2077
        %2242 = vmatprep.subr.mxu0 %v2080
        %2243 = vmatpush1.msra.mxu0 %v2079
        %2244 = vmatprep.subr.mxu0 %v2082
        %2245 = vmatpush1.msra.mxu0 %v2081
        %2246 = vmatprep.subr.mxu0 %v2084
        %2247 = vmatpush1.msra.mxu0 %v2083
        %2248 = vmatprep.subr.mxu0 %v2086
        %2249 = vmatpush1.msra.mxu0 %v2085
        %2250 = vmatprep.subr.mxu0 %v2088
        %2251 = vmatpush1.msra.mxu0 %v2087
        %2252 = vmatprep.subr.mxu0 %v2090
        %2253 = vmatpush1.msra.mxu0 %v2089
        %2254 = vmatprep.subr.mxu0 %v2092
        %2255 = vmatpush1.msra.mxu0 %v2091
        %2256 = vmatprep.subr.mxu0 %v2094
        %2257 = vmatpush1.msra.mxu0 %v2093
        %2258 = vmatprep.subr.mxu0 %v2096
        %2259 = vmatpush1.msra.mxu0 %v2095
        %2260 = vmatprep.mubr.f32.mxu0 %v2024
        %2261 = vmatmul.mubr.f32.gmra.mrb[0].mxu0 %v2023
        %v2262 = vpop.f32.mrb[0].mxu0
        %v2263 = vadd.f32 %v2182, %v2262
        %v2264 = vpop.f32.mrb[0].mxu0
        %v2265 = vadd.f32 %v2182, %v2264
        %2266 = vmatprep.mubr.f32.mxu0 %v2029
        %2267 = vmatmul.mubr.f32.gmra.mrb[0].mxu0 %v2028
        %v2268 = vpop.f32.mrb[0].mxu0
        %v2269 = vadd.f32 %v2187, %v2268
        %v2270 = vpop.f32.mrb[0].mxu0
        %v2271 = vadd.f32 %v2187, %v2270
        %2272 = vdwg.mxu0
        %2273 = vmatprep.subr.mxu0 %v2098
        %2274 = vmatpush1.msra.mxu0 %v2097
        %2275 = vmatprep.subr.mxu0 %v2100
        %2276 = vmatpush1.msra.mxu0 %v2099
        %2277 = vmatprep.subr.mxu0 %v2102
        %2278 = vmatpush1.msra.mxu0 %v2101
        %2279 = vmatprep.subr.mxu0 %v2104
        %2280 = vmatpush1.msra.mxu0 %v2103
        %2281 = vmatprep.subr.mxu0 %v2106
        %2282 = vmatpush1.msra.mxu0 %v2105
        %2283 = vmatprep.subr.mxu0 %v2108
        %2284 = vmatpush1.msra.mxu0 %v2107
        %2285 = vmatprep.subr.mxu0 %v2110
        %2286 = vmatpush1.msra.mxu0 %v2109
        %2287 = vmatprep.subr.mxu0 %v2112
        %2288 = vmatpush1.msra.mxu0 %v2111
        %2289 = vmatprep.subr.mxu0 %v2114
        %2290 = vmatpush1.msra.mxu0 %v2113
        %2291 = vmatprep.subr.mxu0 %v2116
        %2292 = vmatpush1.msra.mxu0 %v2115
        %2293 = vmatprep.subr.mxu0 %v2118
        %2294 = vmatpush1.msra.mxu0 %v2117
        %2295 = vmatprep.subr.mxu0 %v2120
        %2296 = vmatpush1.msra.mxu0 %v2119
        %2297 = vmatprep.subr.mxu0 %v2122
        %2298 = vmatpush1.msra.mxu0 %v2121
        %2299 = vmatprep.subr.mxu0 %v2124
        %2300 = vmatpush1.msra.mxu0 %v2123
        %2301 = vmatprep.subr.mxu0 %v2126
        %2302 = vmatpush1.msra.mxu0 %v2125
        %2303 = vmatprep.subr.mxu0 %v2128
        %2304 = vmatpush1.msra.mxu0 %v2127
        %2305 = vmatprep.subr.mxu0 %v2130
        %2306 = vmatpush1.msra.mxu0 %v2129
        %2307 = vmatprep.subr.mxu0 %v2132
        %2308 = vmatpush1.msra.mxu0 %v2131
        %2309 = vmatprep.subr.mxu0 %v2134
        %2310 = vmatpush1.msra.mxu0 %v2133
        %2311 = vmatprep.subr.mxu0 %v2136
        %2312 = vmatpush1.msra.mxu0 %v2135
        %2313 = vmatprep.subr.mxu0 %v2138
        %2314 = vmatpush1.msra.mxu0 %v2137
        %2315 = vmatprep.subr.mxu0 %v2140
        %2316 = vmatpush1.msra.mxu0 %v2139
        %2317 = vmatprep.subr.mxu0 %v2142
        %2318 = vmatpush1.msra.mxu0 %v2141
        %2319 = vmatprep.subr.mxu0 %v2144
        %2320 = vmatpush1.msra.mxu0 %v2143
        %2321 = vmatprep.subr.mxu0 %v2146
        %2322 = vmatpush1.msra.mxu0 %v2145
        %2323 = vmatprep.subr.mxu0 %v2148
        %2324 = vmatpush1.msra.mxu0 %v2147
        %2325 = vmatprep.subr.mxu0 %v2150
        %2326 = vmatpush1.msra.mxu0 %v2149
        %2327 = vmatprep.subr.mxu0 %v2152
        %2328 = vmatpush1.msra.mxu0 %v2151
        %2329 = vmatprep.subr.mxu0 %v2154
        %2330 = vmatpush1.msra.mxu0 %v2153
        %2331 = vmatprep.subr.mxu0 %v2156
        %2332 = vmatpush1.msra.mxu0 %v2155
        %2333 = vmatprep.subr.mxu0 %v2158
        %2334 = vmatpush1.msra.mxu0 %v2157
        %2335 = vmatprep.subr.mxu0 %v2160
        %2336 = vmatpush1.msra.mxu0 %v2159
        %2337 = vmatprep.mubr.f32.mxu0 %v2026
        %2338 = vmatmul.mubr.f32.gmra.mrb[0].mxu0 %v2025
        %v2339 = vpop.f32.mrb[0].mxu0
        %v2340 = vadd.f32 %v2263, %v2339
        %v2341 = vpop.f32.mrb[0].mxu0
        %v2342 = vadd.f32 %v2265, %v2341
        %2343 = vmatprep.mubr.f32.mxu0 %v2031
        %2344 = vmatmul.mubr.f32.gmra.mrb[0].mxu0 %v2030
        %v2345 = vpop.f32.mrb[0].mxu0
        %v2346 = vadd.f32 %v2269, %v2345
        %v2347 = vpop.f32.mrb[0].mxu0
        %v2348 = vadd.f32 %v2271, %v2347
        %2349 = vdwg.mxu0
        %2350 = vmatprep.subr.mxu0 %v2162
        %2351 = vmatpush1.msra.mxu0 %v2161
        %2352 = vmatprep.subr.mxu0 %v2164
        %2353 = vmatpush1.msra.mxu0 %v2163
        %2354 = vmatprep.subr.mxu0 %v2166
        %2355 = vmatpush1.msra.mxu0 %v2165
        %2356 = vmatprep.subr.mxu0 %v2168
        %2357 = vmatpush1.msra.mxu0 %v2167
        %2358 = vmatprep.subr.mxu0 %v2170
        %2359 = vmatpush1.msra.mxu0 %v2169
        %2360 = vmatprep.subr.mxu0 %v2172
        %2361 = vmatpush1.msra.mxu0 %v2171
        %2362 = vmatprep.subr.mxu0 %v2174
        %2363 = vmatpush1.msra.mxu0 %v2173
        %2364 = vmatprep.subr.mxu0 %v2176
        %2365 = vmatpush1.msra.mxu0 %v2175
        %2366 = vmatprep.subr.mxu0 0.0
        %2367 = vmatpush1.msra.mxu0 0.0
        %2368 = vmatprep.subr.mxu0 0.0
        %2369 = vmatpush1.msra.mxu0 0.0
        %2370 = vmatprep.subr.mxu0 0.0
        %2371 = vmatpush1.msra.mxu0 0.0
        %2372 = vmatprep.subr.mxu0 0.0
        %2373 = vmatpush1.msra.mxu0 0.0
        %2374 = vmatprep.subr.mxu0 0.0
        %2375 = vmatpush1.msra.mxu0 0.0
        %2376 = vmatprep.subr.mxu0 0.0
        %2377 = vmatpush1.msra.mxu0 0.0
        %2378 = vmatprep.subr.mxu0 0.0
        %2379 = vmatpush1.msra.mxu0 0.0
        %2380 = vmatprep.subr.mxu0 0.0
        %2381 = vmatpush1.msra.mxu0 0.0
        %2382 = vmatprep.subr.mxu0 0.0
        %2383 = vmatpush1.msra.mxu0 0.0
        %2384 = vmatprep.subr.mxu0 0.0
        %2385 = vmatpush1.msra.mxu0 0.0
        %2386 = vmatprep.subr.mxu0 0.0
        %2387 = vmatpush1.msra.mxu0 0.0
        %2388 = vmatprep.subr.mxu0 0.0
        %2389 = vmatpush1.msra.mxu0 0.0
        %2390 = vmatprep.subr.mxu0 0.0
        %2391 = vmatpush1.msra.mxu0 0.0
        %2392 = vmatprep.subr.mxu0 0.0
        %2393 = vmatpush1.msra.mxu0 0.0
        %2394 = vmatprep.subr.mxu0 0.0
        %2395 = vmatpush1.msra.mxu0 0.0
        %2396 = vmatprep.subr.mxu0 0.0
        %2397 = vmatpush1.msra.mxu0 0.0
        %2398 = vmatprep.subr.mxu0 0.0
        %2399 = vmatpush1.msra.mxu0 0.0
        %2400 = vmatprep.subr.mxu0 0.0
        %2401 = vmatpush1.msra.mxu0 0.0
        %2402 = vmatprep.subr.mxu0 0.0
        %2403 = vmatpush1.msra.mxu0 0.0
        %2404 = vmatprep.subr.mxu0 0.0
        %2405 = vmatpush1.msra.mxu0 0.0
        %2406 = vmatprep.subr.mxu0 0.0
        %2407 = vmatpush1.msra.mxu0 0.0
        %2408 = vmatprep.subr.mxu0 0.0
        %2409 = vmatpush1.msra.mxu0 0.0
        %2410 = vmatprep.subr.mxu0 0.0
        %2411 = vmatpush1.msra.mxu0 0.0
        %2412 = vmatprep.subr.mxu0 0.0
        %2413 = vmatpush1.msra.mxu0 0.0
        %2414 = vmatprep.mubr.f32.mxu0 0.0
        %2415 = vmatmul.mubr.f32.gmra.mrb[0].mxu0 %v2191
        %v2416 = vpop.f32.mrb[0].mxu0
        %v2417 = vadd.f32 %v2340, %v2416
        %v2418 = vpop.f32.mrb[0].mxu0
        %v2419 = vadd.f32 %v2342, %v2418
        %2420 = vmatprep.mubr.f32.mxu0 0.0
        %2421 = vmatmul.mubr.f32.gmra.mrb[0].mxu0 %v2194
        %v2422 = vpop.f32.mrb[0].mxu0
        %v2423 = vadd.f32 %v2346, %v2422
        %v2424 = vpop.f32.mrb[0].mxu0
        %v2425 = vadd.f32 %v2348, %v2424
        %2426 = vdwg.mxu0
        %vm2427 = vcmp.ge.f32.partialorder %v2417, 0.0
        %vm2428 = vcmp.ge.f32.partialorder %v2419, 0.0
        %vm2429 = vcmp.ge.f32.partialorder %v2423, 0.0
        %vm2430 = vcmp.ge.f32.partialorder %v2425, 0.0
        %v2431 = vmul.f32 %v2417, 0.2
        %v2432 = vmul.f32 %v2419, 0.2
        %v2433 = vmul.f32 %v2423, 0.2
        %v2434 = vmul.f32 %v2425, 0.2
        %v2435 = vsel %vm2427, %v2417, %v2431
        %v2436 = vsel %vm2428, %v2419, %v2432
        %v2437 = vsel %vm2429, %v2423, %v2433
        %v2438 = vsel %vm2430, %v2425, %v2434
        %2439 = vrot.lane.b32.xlu0 %v2435, 17
        %v2440 = vpop.permute.xlu0 %2439
        %2441 = vrot.lane.b32.xlu0 %v2437, 17
        %v2442 = vpop.permute.xlu0 %2441
        %2443 = vrot.lane.b32.xlu0 %v2436, 17
        %v2444 = vpop.permute.xlu0 %2443
        %2445 = vrot.lane.b32.xlu0 %v2438, 17
        %v2446 = vpop.permute.xlu0 %2445
        %v2447 = vsel %vm516, %v2440, %v2444
        %v2448 = vsel %vm516, %v2442, %v2446
        %v2449 = vsel %vm516, %v2444, %v2440
        %v2450 = vsel %vm516, %v2446, %v2442
        %v2451 = vld [vmem:[%s1] ss:$8 sm:$0x3]
        %v2453 = vlaneseq
        %v2454 = vshrl.u32 %v2453, 7
        %v2455 = vsub.s32 0, %v2454
        %v2456 = vrot.slane %v2451, %v2455
        %v2457 = vlaneseq
        %v2458 = vshrl.u32 %v2457, 7
        %v2459 = vsub.s32 1, %v2458
        %v2460 = vrot.slane %v2451, %v2459
        %v2463 = vmul.f32 %v2449, %v2456
        %v2464 = vmul.f32 %v2447, %v2460
        %v2465 = vmul.f32 %v2450, %v2456
        %v2466 = vmul.f32 %v2448, %v2460
        %2467 = vst [vmem:[#allocation2 + $0x480] sm:$0xff] %v2463
        %2468 = vst [vmem:[#allocation2 + $0x488] sm:$0xff] %v2464
        %2469 = vst [vmem:[#allocation2 + $0x490] sm:$0xff] %v2465
        %2470 = vst [vmem:[#allocation2 + $0x498] sm:$0xff] %v2466
        %2471 = vrot.lane.b32.xlu0 %v2435, 16
        %v2472 = vpop.permute.xlu0 %2471
        %2473 = vrot.lane.b32.xlu0 %v2437, 16
        %v2474 = vpop.permute.xlu0 %2473
        %2475 = vrot.lane.b32.xlu0 %v2436, 16
        %v2476 = vpop.permute.xlu0 %2475
        %2477 = vrot.lane.b32.xlu0 %v2438, 16
        %v2478 = vpop.permute.xlu0 %2477
        %v2479 = vsel %vm569, %v2472, %v2476
        %v2480 = vsel %vm569, %v2474, %v2478
        %v2481 = vsel %vm569, %v2476, %v2472
        %v2482 = vsel %vm569, %v2478, %v2474
        %v2483 = vld [vmem:[%s578] ss:$8 sm:$0x3]
        %v2485 = vlaneseq
        %v2486 = vshrl.u32 %v2485, 7
        %v2487 = vsub.s32 0, %v2486
        %v2488 = vrot.slane %v2483, %v2487
        %v2489 = vlaneseq
        %v2490 = vshrl.u32 %v2489, 7
        %v2491 = vsub.s32 1, %v2490
        %v2492 = vrot.slane %v2483, %v2491
        %v2495 = vmul.f32 %v2481, %v2488
        %v2496 = vmul.f32 %v2479, %v2492
        %v2497 = vmul.f32 %v2482, %v2488
        %v2498 = vmul.f32 %v2480, %v2492
        %2499 = vst [vmem:[#allocation2 + $0x4a0] sm:$0xff] %v2495
        %2500 = vst [vmem:[#allocation2 + $0x4a8] sm:$0xff] %v2496
        %2501 = vst [vmem:[#allocation2 + $0x4b0] sm:$0xff] %v2497
        %2502 = vst [vmem:[#allocation2 + $0x4b8] sm:$0xff] %v2498
        %2503 = vrot.lane.b32.xlu0 %v2435, 15
        %v2504 = vpop.permute.xlu0 %2503
        %2505 = vrot.lane.b32.xlu0 %v2437, 15
        %v2506 = vpop.permute.xlu0 %2505
        %2507 = vrot.lane.b32.xlu0 %v2436, 15
        %v2508 = vpop.permute.xlu0 %2507
        %2509 = vrot.lane.b32.xlu0 %v2438, 15
        %v2510 = vpop.permute.xlu0 %2509
        %v2511 = vsel %vm623, %v2504, %v2508
        %v2512 = vsel %vm623, %v2506, %v2510
        %v2513 = vsel %vm623, %v2508, %v2504
        %v2514 = vsel %vm623, %v2510, %v2506
        %v2515 = vld [vmem:[%s632] ss:$8 sm:$0x3]
        %v2517 = vlaneseq
        %v2518 = vshrl.u32 %v2517, 7
        %v2519 = vsub.s32 0, %v2518
        %v2520 = vrot.slane %v2515, %v2519
        %v2521 = vlaneseq
        %v2522 = vshrl.u32 %v2521, 7
        %v2523 = vsub.s32 1, %v2522
        %v2524 = vrot.slane %v2515, %v2523
        %v2527 = vmul.f32 %v2513, %v2520
        %v2528 = vmul.f32 %v2511, %v2524
        %v2529 = vmul.f32 %v2514, %v2520
        %v2530 = vmul.f32 %v2512, %v2524
        %2531 = vst [vmem:[#allocation2 + $0x4c0] sm:$0xff] %v2527
        %2532 = vst [vmem:[#allocation2 + $0x4c8] sm:$0xff] %v2528
        %2533 = vst [vmem:[#allocation2 + $0x4d0] sm:$0xff] %v2529
        %2534 = vst [vmem:[#allocation2 + $0x4d8] sm:$0xff] %v2530
        %2535 = vrot.lane.b32.xlu0 %v2435, 1
        %v2536 = vpop.permute.xlu0 %2535
        %2537 = vrot.lane.b32.xlu0 %v2437, 1
        %v2538 = vpop.permute.xlu0 %2537
        %2539 = vrot.lane.b32.xlu0 %v2436, 1
        %v2540 = vpop.permute.xlu0 %2539
        %2541 = vrot.lane.b32.xlu0 %v2438, 1
        %v2542 = vpop.permute.xlu0 %2541
        %v2543 = vsel %vm677, %v2536, %v2540
        %v2544 = vsel %vm677, %v2538, %v2542
        %v2545 = vsel %vm677, %v2540, %v2536
        %v2546 = vsel %vm677, %v2542, %v2538
        %v2547 = vld [vmem:[%s686] ss:$8 sm:$0x3]
        %v2549 = vlaneseq
        %v2550 = vshrl.u32 %v2549, 7
        %v2551 = vsub.s32 0, %v2550
        %v2552 = vrot.slane %v2547, %v2551
        %v2553 = vlaneseq
        %v2554 = vshrl.u32 %v2553, 7
        %v2555 = vsub.s32 1, %v2554
        %v2556 = vrot.slane %v2547, %v2555
        %v2559 = vmul.f32 %v2545, %v2552
        %v2560 = vmul.f32 %v2543, %v2556
        %v2561 = vmul.f32 %v2546, %v2552
        %v2562 = vmul.f32 %v2544, %v2556
        %2563 = vst [vmem:[#allocation2 + $0x4e0] sm:$0xff] %v2559
        %2564 = vst [vmem:[#allocation2 + $0x4e8] sm:$0xff] %v2560
        %2565 = vst [vmem:[#allocation2 + $0x4f0] sm:$0xff] %v2561
        %2566 = vst [vmem:[#allocation2 + $0x4f8] sm:$0xff] %v2562
        %2567 = vst [vmem:[#allocation2 + $0x500] sm:$0xff] %v2435
        %2568 = vst [vmem:[#allocation2 + $0x508] sm:$0xff] %v2436
        %2569 = vst [vmem:[#allocation2 + $0x510] sm:$0xff] %v2437
        %2570 = vst [vmem:[#allocation2 + $0x518] sm:$0xff] %v2438
        %2571 = vrot.lane.b32.xlu0 %v2435, 127
        %v2572 = vpop.permute.xlu0 %2571
        %2573 = vrot.lane.b32.xlu0 %v2437, 127
        %v2574 = vpop.permute.xlu0 %2573
        %2575 = vrot.lane.b32.xlu0 %v2436, 127
        %v2576 = vpop.permute.xlu0 %2575
        %2577 = vrot.lane.b32.xlu0 %v2438, 127
        %v2578 = vpop.permute.xlu0 %2577
        %v2579 = vsel %vm739, %v2572, %v2576
        %v2580 = vsel %vm739, %v2574, %v2578
        %v2581 = vsel %vm739, %v2576, %v2572
        %v2582 = vsel %vm739, %v2578, %v2574
        %v2583 = vld [vmem:[%s748] ss:$8 sm:$0x3]
        %v2585 = vlaneseq
        %v2586 = vshrl.u32 %v2585, 7
        %v2587 = vsub.s32 0, %v2586
        %v2588 = vrot.slane %v2583, %v2587
        %v2589 = vlaneseq
        %v2590 = vshrl.u32 %v2589, 7
        %v2591 = vsub.s32 1, %v2590
        %v2592 = vrot.slane %v2583, %v2591
        %v2595 = vmul.f32 %v2579, %v2588
        %v2596 = vmul.f32 %v2581, %v2592
        %v2597 = vmul.f32 %v2580, %v2588
        %v2598 = vmul.f32 %v2582, %v2592
        %2599 = vst [vmem:[#allocation2 + $0x520] sm:$0xff] %v2595
        %2600 = vst [vmem:[#allocation2 + $0x528] sm:$0xff] %v2596
        %2601 = vst [vmem:[#allocation2 + $0x530] sm:$0xff] %v2597
        %2602 = vst [vmem:[#allocation2 + $0x538] sm:$0xff] %v2598
        %2603 = vrot.lane.b32.xlu0 %v2435, 113
        %v2604 = vpop.permute.xlu0 %2603
        %2605 = vrot.lane.b32.xlu0 %v2437, 113
        %v2606 = vpop.permute.xlu0 %2605
        %2607 = vrot.lane.b32.xlu0 %v2436, 113
        %v2608 = vpop.permute.xlu0 %2607
        %2609 = vrot.lane.b32.xlu0 %v2438, 113
        %v2610 = vpop.permute.xlu0 %2609
        %v2611 = vsel %vm793, %v2604, %v2608
        %v2612 = vsel %vm793, %v2606, %v2610
        %v2613 = vsel %vm793, %v2608, %v2604
        %v2614 = vsel %vm793, %v2610, %v2606
        %v2615 = vld [vmem:[%s802] ss:$8 sm:$0x3]
        %v2617 = vlaneseq
        %v2618 = vshrl.u32 %v2617, 7
        %v2619 = vsub.s32 0, %v2618
        %v2620 = vrot.slane %v2615, %v2619
        %v2621 = vlaneseq
        %v2622 = vshrl.u32 %v2621, 7
        %v2623 = vsub.s32 1, %v2622
        %v2624 = vrot.slane %v2615, %v2623
        %v2627 = vmul.f32 %v2611, %v2620
        %v2628 = vmul.f32 %v2613, %v2624
        %v2629 = vmul.f32 %v2612, %v2620
        %v2630 = vmul.f32 %v2614, %v2624
        %2631 = vst [vmem:[#allocation2 + $0x540] sm:$0xff] %v2627
        %2632 = vst [vmem:[#allocation2 + $0x548] sm:$0xff] %v2628
        %2633 = vst [vmem:[#allocation2 + $0x550] sm:$0xff] %v2629
        %2634 = vst [vmem:[#allocation2 + $0x558] sm:$0xff] %v2630
        %2635 = vrot.lane.b32.xlu0 %v2435, 112
        %v2636 = vpop.permute.xlu0 %2635
        %2637 = vrot.lane.b32.xlu0 %v2437, 112
        %v2638 = vpop.permute.xlu0 %2637
        %2639 = vrot.lane.b32.xlu0 %v2436, 112
        %v2640 = vpop.permute.xlu0 %2639
        %2641 = vrot.lane.b32.xlu0 %v2438, 112
        %v2642 = vpop.permute.xlu0 %2641
        %v2643 = vsel %vm847, %v2636, %v2640
        %v2644 = vsel %vm847, %v2638, %v2642
        %v2645 = vsel %vm847, %v2640, %v2636
        %v2646 = vsel %vm847, %v2642, %v2638
        %v2647 = vld [vmem:[%s856] ss:$8 sm:$0x3]
        %v2649 = vlaneseq
        %v2650 = vshrl.u32 %v2649, 7
        %v2651 = vsub.s32 0, %v2650
        %v2652 = vrot.slane %v2647, %v2651
        %v2653 = vlaneseq
        %v2654 = vshrl.u32 %v2653, 7
        %v2655 = vsub.s32 1, %v2654
        %v2656 = vrot.slane %v2647, %v2655
        %v2659 = vmul.f32 %v2643, %v2652
        %v2660 = vmul.f32 %v2645, %v2656
        %v2661 = vmul.f32 %v2644, %v2652
        %v2662 = vmul.f32 %v2646, %v2656
        %2663 = vst [vmem:[#allocation2 + $0x560] sm:$0xff] %v2659
        %2664 = vst [vmem:[#allocation2 + $0x568] sm:$0xff] %v2660
        %2665 = vst [vmem:[#allocation2 + $0x570] sm:$0xff] %v2661
        %2666 = vst [vmem:[#allocation2 + $0x578] sm:$0xff] %v2662
        %2667 = vrot.lane.b32.xlu0 %v2435, 111
        %v2668 = vpop.permute.xlu0 %2667
        %2669 = vrot.lane.b32.xlu0 %v2437, 111
        %v2670 = vpop.permute.xlu0 %2669
        %2671 = vrot.lane.b32.xlu0 %v2436, 111
        %v2672 = vpop.permute.xlu0 %2671
        %2673 = vrot.lane.b32.xlu0 %v2438, 111
        %v2674 = vpop.permute.xlu0 %2673
        %v2675 = vsel %vm901, %v2668, %v2672
        %v2676 = vsel %vm901, %v2670, %v2674
        %v2677 = vsel %vm901, %v2672, %v2668
        %v2678 = vsel %vm901, %v2674, %v2670
        %v2679 = vld [vmem:[%s910] ss:$8 sm:$0x3]
        %v2681 = vlaneseq
        %v2682 = vshrl.u32 %v2681, 7
        %v2683 = vsub.s32 0, %v2682
        %v2684 = vrot.slane %v2679, %v2683
        %v2685 = vlaneseq
        %v2686 = vshrl.u32 %v2685, 7
        %v2687 = vsub.s32 1, %v2686
        %v2688 = vrot.slane %v2679, %v2687
        %v2691 = vmul.f32 %v2675, %v2684
        %v2692 = vmul.f32 %v2677, %v2688
        %v2693 = vmul.f32 %v2676, %v2684
        %v2694 = vmul.f32 %v2678, %v2688
        %2695 = vst [vmem:[#allocation2 + $0x580] sm:$0xff] %v2691
        %2696 = vst [vmem:[#allocation2 + $0x588] sm:$0xff] %v2692
        %2697 = vst [vmem:[#allocation2 + $0x590] sm:$0xff] %v2693
        %2698 = vst [vmem:[#allocation2 + $0x598] sm:$0xff] %v2694
        %v2699 = vld [vmem:[%s8] sm:$0xff]
        %v2700 = vld [vmem:[%s8 + $0x8] sm:$0xff]
        %v2701 = vld [vmem:[%s8 + $0x10] sm:$0xff]
        %v2702 = vld [vmem:[%s8 + $0x18] sm:$0xff]
        %v2703 = vld [vmem:[%s8 + $0x20] sm:$0xff]
        %v2704 = vld [vmem:[%s8 + $0x28] sm:$0xff]
        %v2705 = vld [vmem:[%s8 + $0x30] sm:$0xff]
        %v2706 = vld [vmem:[%s8 + $0x38] sm:$0xff]
        %v2707 = vld [vmem:[%s8 + $0x40] sm:$0xff]
        %v2708 = vld [vmem:[%s8 + $0x48] sm:$0xff]
        %v2709 = vld [vmem:[%s8 + $0x50] sm:$0xff]
        %v2710 = vld [vmem:[%s8 + $0x58] sm:$0xff]
        %v2711 = vld [vmem:[#allocation2] sm:$0xff]
        %v2712 = vld [vmem:[#allocation2 + $0x8] sm:$0xff]
        %v2713 = vld [vmem:[#allocation2 + $0x10] sm:$0xff]
        %v2714 = vld [vmem:[#allocation2 + $0x18] sm:$0xff]
        %v2715 = vld [vmem:[#allocation2 + $0x20] sm:$0xff]
        %v2716 = vld [vmem:[#allocation2 + $0x28] sm:$0xff]
        %v2717 = vld [vmem:[#allocation2 + $0x30] sm:$0xff]
        %v2718 = vld [vmem:[#allocation2 + $0x38] sm:$0xff]
        %v2719 = vld [vmem:[#allocation2 + $0x40] sm:$0xff]
        %v2720 = vld [vmem:[#allocation2 + $0x48] sm:$0xff]
        %v2721 = vld [vmem:[#allocation2 + $0x50] sm:$0xff]
        %v2722 = vld [vmem:[#allocation2 + $0x58] sm:$0xff]
        %v2723 = vld [vmem:[#allocation2 + $0x60] sm:$0xff]
        %v2724 = vld [vmem:[#allocation2 + $0x68] sm:$0xff]
        %v2725 = vld [vmem:[#allocation2 + $0x70] sm:$0xff]
        %v2726 = vld [vmem:[#allocation2 + $0x78] sm:$0xff]
        %v2727 = vld [vmem:[#allocation2 + $0x80] sm:$0xff]
        %v2728 = vld [vmem:[#allocation2 + $0x88] sm:$0xff]
        %v2729 = vld [vmem:[#allocation2 + $0x90] sm:$0xff]
        %v2730 = vld [vmem:[#allocation2 + $0x98] sm:$0xff]
        %v2731 = vld [vmem:[#allocation2 + $0xa0] sm:$0xff]
        %v2732 = vld [vmem:[#allocation2 + $0xa8] sm:$0xff]
        %v2733 = vld [vmem:[#allocation2 + $0xb0] sm:$0xff]
        %v2734 = vld [vmem:[#allocation2 + $0xb8] sm:$0xff]
        %v2735 = vld [vmem:[#allocation2 + $0xc0] sm:$0xff]
        %v2736 = vld [vmem:[#allocation2 + $0xc8] sm:$0xff]
        %v2737 = vld [vmem:[#allocation2 + $0xd0] sm:$0xff]
        %v2738 = vld [vmem:[#allocation2 + $0xd8] sm:$0xff]
        %v2739 = vld [vmem:[#allocation2 + $0xe0] sm:$0xff]
        %v2740 = vld [vmem:[#allocation2 + $0xe8] sm:$0xff]
        %v2741 = vld [vmem:[#allocation2 + $0xf0] sm:$0xff]
        %v2742 = vld [vmem:[#allocation2 + $0xf8] sm:$0xff]
        %v2743 = vld [vmem:[#allocation2 + $0x100] sm:$0xff]
        %v2744 = vld [vmem:[#allocation2 + $0x108] sm:$0xff]
        %v2745 = vld [vmem:[#allocation2 + $0x110] sm:$0xff]
        %v2746 = vld [vmem:[#allocation2 + $0x118] sm:$0xff]
        %v2747 = vld [vmem:[#allocation2 + $0x120] sm:$0xff]
        %v2748 = vld [vmem:[#allocation2 + $0x128] sm:$0xff]
        %v2749 = vld [vmem:[#allocation2 + $0x130] sm:$0xff]
        %v2750 = vld [vmem:[#allocation2 + $0x138] sm:$0xff]
        %v2751 = vld [vmem:[#allocation2 + $0x140] sm:$0xff]
        %v2752 = vld [vmem:[#allocation2 + $0x148] sm:$0xff]
        %v2753 = vld [vmem:[#allocation2 + $0x150] sm:$0xff]
        %v2754 = vld [vmem:[#allocation2 + $0x158] sm:$0xff]
        %v2755 = vld [vmem:[#allocation2 + $0x160] sm:$0xff]
        %v2756 = vld [vmem:[#allocation2 + $0x168] sm:$0xff]
        %v2757 = vld [vmem:[#allocation2 + $0x170] sm:$0xff]
        %v2758 = vld [vmem:[#allocation2 + $0x178] sm:$0xff]
        %v2759 = vld [vmem:[#allocation2 + $0x180] sm:$0xff]
        %v2760 = vld [vmem:[#allocation2 + $0x188] sm:$0xff]
        %v2761 = vld [vmem:[#allocation2 + $0x190] sm:$0xff]
        %v2762 = vld [vmem:[#allocation2 + $0x198] sm:$0xff]
        %v2763 = vld [vmem:[#allocation2 + $0x1a0] sm:$0xff]
        %v2764 = vld [vmem:[#allocation2 + $0x1a8] sm:$0xff]
        %v2765 = vld [vmem:[#allocation2 + $0x1b0] sm:$0xff]
        %v2766 = vld [vmem:[#allocation2 + $0x1b8] sm:$0xff]
        %v2767 = vld [vmem:[#allocation2 + $0x1c0] sm:$0xff]
        %v2768 = vld [vmem:[#allocation2 + $0x1c8] sm:$0xff]
        %v2769 = vld [vmem:[#allocation2 + $0x1d0] sm:$0xff]
        %v2770 = vld [vmem:[#allocation2 + $0x1d8] sm:$0xff]
        %v2771 = vld [vmem:[#allocation2 + $0x1e0] sm:$0xff]
        %v2772 = vld [vmem:[#allocation2 + $0x1e8] sm:$0xff]
        %v2773 = vld [vmem:[#allocation2 + $0x1f0] sm:$0xff]
        %v2774 = vld [vmem:[#allocation2 + $0x1f8] sm:$0xff]
        %v2775 = vld [vmem:[#allocation2 + $0x200] sm:$0xff]
        %v2776 = vld [vmem:[#allocation2 + $0x208] sm:$0xff]
        %v2777 = vld [vmem:[#allocation2 + $0x210] sm:$0xff]
        %v2778 = vld [vmem:[#allocation2 + $0x218] sm:$0xff]
        %v2779 = vld [vmem:[#allocation2 + $0x220] sm:$0xff]
        %v2780 = vld [vmem:[#allocation2 + $0x228] sm:$0xff]
        %v2781 = vld [vmem:[#allocation2 + $0x230] sm:$0xff]
        %v2782 = vld [vmem:[#allocation2 + $0x238] sm:$0xff]
        %v2783 = vld [vmem:[#allocation2 + $0x240] sm:$0xff]
        %v2784 = vld [vmem:[#allocation2 + $0x248] sm:$0xff]
        %v2785 = vld [vmem:[#allocation2 + $0x250] sm:$0xff]
        %v2786 = vld [vmem:[#allocation2 + $0x258] sm:$0xff]
        %v2787 = vld [vmem:[#allocation2 + $0x260] sm:$0xff]
        %v2788 = vld [vmem:[#allocation2 + $0x268] sm:$0xff]
        %v2789 = vld [vmem:[#allocation2 + $0x270] sm:$0xff]
        %v2790 = vld [vmem:[#allocation2 + $0x278] sm:$0xff]
        %v2791 = vld [vmem:[#allocation2 + $0x280] sm:$0xff]
        %v2792 = vld [vmem:[#allocation2 + $0x288] sm:$0xff]
        %v2793 = vld [vmem:[#allocation2 + $0x290] sm:$0xff]
        %v2794 = vld [vmem:[#allocation2 + $0x298] sm:$0xff]
        %v2795 = vld [vmem:[#allocation2 + $0x2a0] sm:$0xff]
        %v2796 = vld [vmem:[#allocation2 + $0x2a8] sm:$0xff]
        %v2797 = vld [vmem:[#allocation2 + $0x2b0] sm:$0xff]
        %v2798 = vld [vmem:[#allocation2 + $0x2b8] sm:$0xff]
        %v2799 = vld [vmem:[#allocation2 + $0x2c0] sm:$0xff]
        %v2800 = vld [vmem:[#allocation2 + $0x2c8] sm:$0xff]
        %v2801 = vld [vmem:[#allocation2 + $0x2d0] sm:$0xff]
        %v2802 = vld [vmem:[#allocation2 + $0x2d8] sm:$0xff]
        %v2803 = vld [vmem:[#allocation2 + $0x2e0] sm:$0xff]
        %v2804 = vld [vmem:[#allocation2 + $0x2e8] sm:$0xff]
        %v2805 = vld [vmem:[#allocation2 + $0x2f0] sm:$0xff]
        %v2806 = vld [vmem:[#allocation2 + $0x2f8] sm:$0xff]
        %v2807 = vld [vmem:[#allocation2 + $0x300] sm:$0xff]
        %v2808 = vld [vmem:[#allocation2 + $0x308] sm:$0xff]
        %v2809 = vld [vmem:[#allocation2 + $0x310] sm:$0xff]
        %v2810 = vld [vmem:[#allocation2 + $0x318] sm:$0xff]
        %v2811 = vld [vmem:[#allocation2 + $0x320] sm:$0xff]
        %v2812 = vld [vmem:[#allocation2 + $0x328] sm:$0xff]
        %v2813 = vld [vmem:[#allocation2 + $0x330] sm:$0xff]
        %v2814 = vld [vmem:[#allocation2 + $0x338] sm:$0xff]
        %v2815 = vld [vmem:[#allocation2 + $0x340] sm:$0xff]
        %v2816 = vld [vmem:[#allocation2 + $0x348] sm:$0xff]
        %v2817 = vld [vmem:[#allocation2 + $0x350] sm:$0xff]
        %v2818 = vld [vmem:[#allocation2 + $0x358] sm:$0xff]
        %v2819 = vld [vmem:[#allocation2 + $0x360] sm:$0xff]
        %v2820 = vld [vmem:[#allocation2 + $0x368] sm:$0xff]
        %v2821 = vld [vmem:[#allocation2 + $0x370] sm:$0xff]
        %v2822 = vld [vmem:[#allocation2 + $0x378] sm:$0xff]
        %v2823 = vld [vmem:[#allocation2 + $0x380] sm:$0xff]
        %v2824 = vld [vmem:[#allocation2 + $0x388] sm:$0xff]
        %v2825 = vld [vmem:[#allocation2 + $0x390] sm:$0xff]
        %v2826 = vld [vmem:[#allocation2 + $0x398] sm:$0xff]
        %v2827 = vld [vmem:[#allocation2 + $0x3a0] sm:$0xff]
        %v2828 = vld [vmem:[#allocation2 + $0x3a8] sm:$0xff]
        %v2829 = vld [vmem:[#allocation2 + $0x3b0] sm:$0xff]
        %v2830 = vld [vmem:[#allocation2 + $0x3b8] sm:$0xff]
        %v2831 = vld [vmem:[#allocation2 + $0x3c0] sm:$0xff]
        %v2832 = vld [vmem:[#allocation2 + $0x3c8] sm:$0xff]
        %v2833 = vld [vmem:[#allocation2 + $0x3d0] sm:$0xff]
        %v2834 = vld [vmem:[#allocation2 + $0x3d8] sm:$0xff]
        %v2835 = vld [vmem:[#allocation2 + $0x3e0] sm:$0xff]
        %v2836 = vld [vmem:[#allocation2 + $0x3e8] sm:$0xff]
        %v2837 = vld [vmem:[#allocation2 + $0x3f0] sm:$0xff]
        %v2838 = vld [vmem:[#allocation2 + $0x3f8] sm:$0xff]
        %v2839 = vld [vmem:[#allocation2 + $0x400] sm:$0xff]
        %v2840 = vld [vmem:[#allocation2 + $0x408] sm:$0xff]
        %v2841 = vld [vmem:[#allocation2 + $0x410] sm:$0xff]
        %v2842 = vld [vmem:[#allocation2 + $0x418] sm:$0xff]
        %v2843 = vld [vmem:[#allocation2 + $0x420] sm:$0xff]
        %v2844 = vld [vmem:[#allocation2 + $0x428] sm:$0xff]
        %v2845 = vld [vmem:[#allocation2 + $0x430] sm:$0xff]
        %v2846 = vld [vmem:[#allocation2 + $0x438] sm:$0xff]
        %v2847 = vld [vmem:[#allocation2 + $0x440] sm:$0xff]
        %v2848 = vld [vmem:[#allocation2 + $0x448] sm:$0xff]
        %v2849 = vld [vmem:[#allocation2 + $0x450] sm:$0xff]
        %v2850 = vld [vmem:[#allocation2 + $0x458] sm:$0xff]
        %v2851 = vld [vmem:[#allocation2 + $0x460] sm:$0xff]
        %v2852 = vld [vmem:[#allocation2 + $0x468] sm:$0xff]
        %v2853 = vld [vmem:[#allocation2 + $0x470] sm:$0xff]
        %v2854 = vld [vmem:[#allocation2 + $0x478] sm:$0xff]
        %v2855 = vld [vmem:[#allocation2 + $0x480] sm:$0xff]
        %v2856 = vld [vmem:[#allocation2 + $0x488] sm:$0xff]
        %v2857 = vld [vmem:[#allocation2 + $0x490] sm:$0xff]
        %v2858 = vld [vmem:[#allocation2 + $0x498] sm:$0xff]
        %v2859 = vld [vmem:[#allocation2 + $0x4a0] sm:$0xff]
        %v2860 = vld [vmem:[#allocation2 + $0x4a8] sm:$0xff]
        %v2861 = vld [vmem:[#allocation2 + $0x4b0] sm:$0xff]
        %v2862 = vld [vmem:[#allocation2 + $0x4b8] sm:$0xff]
        %v2863 = vld [vmem:[#allocation2 + $0x4c0] sm:$0xff]
        %v2864 = vld [vmem:[#allocation2 + $0x4c8] sm:$0xff]
        %v2865 = vld [vmem:[#allocation2 + $0x4d0] sm:$0xff]
        %v2866 = vld [vmem:[#allocation2 + $0x4d8] sm:$0xff]
        %v2867 = vld [vmem:[#allocation2 + $0x4e0] sm:$0xff]
        %v2868 = vld [vmem:[#allocation2 + $0x4e8] sm:$0xff]
        %v2869 = vld [vmem:[#allocation2 + $0x4f0] sm:$0xff]
        %v2870 = vld [vmem:[#allocation2 + $0x4f8] sm:$0xff]
        %v2871 = vld [vmem:[#allocation2 + $0x500] sm:$0xff]
        %v2872 = vld [vmem:[#allocation2 + $0x508] sm:$0xff]
        %v2873 = vld [vmem:[#allocation2 + $0x510] sm:$0xff]
        %v2874 = vld [vmem:[#allocation2 + $0x518] sm:$0xff]
        %v2875 = vld [vmem:[#allocation2 + $0x520] sm:$0xff]
        %v2876 = vld [vmem:[#allocation2 + $0x528] sm:$0xff]
        %v2877 = vld [vmem:[#allocation2 + $0x530] sm:$0xff]
        %v2878 = vld [vmem:[#allocation2 + $0x538] sm:$0xff]
        %v2879 = vld [vmem:[#allocation2 + $0x540] sm:$0xff]
        %v2880 = vld [vmem:[#allocation2 + $0x548] sm:$0xff]
        %v2881 = vld [vmem:[#allocation2 + $0x550] sm:$0xff]
        %v2882 = vld [vmem:[#allocation2 + $0x558] sm:$0xff]
        %v2883 = vld [vmem:[#allocation2 + $0x560] sm:$0xff]
        %v2884 = vld [vmem:[#allocation2 + $0x568] sm:$0xff]
        %v2885 = vld [vmem:[#allocation2 + $0x570] sm:$0xff]
        %v2886 = vld [vmem:[#allocation2 + $0x578] sm:$0xff]
        %v2887 = vld [vmem:[#allocation2 + $0x580] sm:$0xff]
        %v2888 = vld [vmem:[#allocation2 + $0x588] sm:$0xff]
        %v2889 = vld [vmem:[#allocation2 + $0x590] sm:$0xff]
        %v2890 = vld [vmem:[#allocation2 + $0x598] sm:$0xff]
        %v2891 = vld [vmem:[%s9] sm:$0xff]
        %v2892 = vld [vmem:[%s9 + $0x8] sm:$0xff]
        %2894 = vset.pattern.permute.xlu0 0
        %2895 = vperm.xlu0 %2894, %v2891
        %v2896 = vpop.permute.xlu0 %2895
        %2899 = vset.pattern.permute.xlu0 0
        %2900 = vperm.xlu0 %2899, %v2892
        %v2901 = vpop.permute.xlu0 %2900
        %vm2903 = vcmask 654336
        %v2905 = vsel %vm2903, %v2704, 0
        %v2908 = vsel %vm2903, %v2710, 0
        %2910 = vmatprep.subr.mxu0 %v2712
        %2911 = vmatpush1.msra.mxu0 %v2711
        %2912 = vmatprep.subr.mxu0 %v2714
        %2913 = vmatpush1.msra.mxu0 %v2713
        %2914 = vmatprep.subr.mxu0 %v2716
        %2915 = vmatpush1.msra.mxu0 %v2715
        %2916 = vmatprep.subr.mxu0 %v2718
        %2917 = vmatpush1.msra.mxu0 %v2717
        %2918 = vmatprep.subr.mxu0 %v2720
        %2919 = vmatpush1.msra.mxu0 %v2719
        %2920 = vmatprep.subr.mxu0 %v2722
        %2921 = vmatpush1.msra.mxu0 %v2721
        %2922 = vmatprep.subr.mxu0 %v2724
        %2923 = vmatpush1.msra.mxu0 %v2723
        %2924 = vmatprep.subr.mxu0 %v2726
        %2925 = vmatpush1.msra.mxu0 %v2725
        %2926 = vmatprep.subr.mxu0 %v2728
        %2927 = vmatpush1.msra.mxu0 %v2727
        %2928 = vmatprep.subr.mxu0 %v2730
        %2929 = vmatpush1.msra.mxu0 %v2729
        %2930 = vmatprep.subr.mxu0 %v2732
        %2931 = vmatpush1.msra.mxu0 %v2731
        %2932 = vmatprep.subr.mxu0 %v2734
        %2933 = vmatpush1.msra.mxu0 %v2733
        %2934 = vmatprep.subr.mxu0 %v2736
        %2935 = vmatpush1.msra.mxu0 %v2735
        %2936 = vmatprep.subr.mxu0 %v2738
        %2937 = vmatpush1.msra.mxu0 %v2737
        %2938 = vmatprep.subr.mxu0 %v2740
        %2939 = vmatpush1.msra.mxu0 %v2739
        %2940 = vmatprep.subr.mxu0 %v2742
        %2941 = vmatpush1.msra.mxu0 %v2741
        %2942 = vmatprep.subr.mxu0 %v2744
        %2943 = vmatpush1.msra.mxu0 %v2743
        %2944 = vmatprep.subr.mxu0 %v2746
        %2945 = vmatpush1.msra.mxu0 %v2745
        %2946 = vmatprep.subr.mxu0 %v2748
        %2947 = vmatpush1.msra.mxu0 %v2747
        %2948 = vmatprep.subr.mxu0 %v2750
        %2949 = vmatpush1.msra.mxu0 %v2749
        %2950 = vmatprep.subr.mxu0 %v2752
        %2951 = vmatpush1.msra.mxu0 %v2751
        %2952 = vmatprep.subr.mxu0 %v2754
        %2953 = vmatpush1.msra.mxu0 %v2753
        %2954 = vmatprep.subr.mxu0 %v2756
        %2955 = vmatpush1.msra.mxu0 %v2755
        %2956 = vmatprep.subr.mxu0 %v2758
        %2957 = vmatpush1.msra.mxu0 %v2757
        %2958 = vmatprep.subr.mxu0 %v2760
        %2959 = vmatpush1.msra.mxu0 %v2759
        %2960 = vmatprep.subr.mxu0 %v2762
        %2961 = vmatpush1.msra.mxu0 %v2761
        %2962 = vmatprep.subr.mxu0 %v2764
        %2963 = vmatpush1.msra.mxu0 %v2763
        %2964 = vmatprep.subr.mxu0 %v2766
        %2965 = vmatpush1.msra.mxu0 %v2765
        %2966 = vmatprep.subr.mxu0 %v2768
        %2967 = vmatpush1.msra.mxu0 %v2767
        %2968 = vmatprep.subr.mxu0 %v2770
        %2969 = vmatpush1.msra.mxu0 %v2769
        %2970 = vmatprep.subr.mxu0 %v2772
        %2971 = vmatpush1.msra.mxu0 %v2771
        %2972 = vmatprep.subr.mxu0 %v2774
        %2973 = vmatpush1.msra.mxu0 %v2773
        %2974 = vmatprep.mubr.f32.mxu0 %v2700
        %2975 = vmatmul.mubr.f32.gmra.mrb[0].mxu0 %v2699
        %v2976 = vpop.f32.mrb[0].mxu0
        %v2977 = vadd.f32 %v2896, %v2976
        %v2978 = vpop.f32.mrb[0].mxu0
        %v2979 = vadd.f32 %v2896, %v2978
        %2980 = vmatprep.mubr.f32.mxu0 %v2706
        %2981 = vmatmul.mubr.f32.gmra.mrb[0].mxu0 %v2705
        %v2982 = vpop.f32.mrb[0].mxu0
        %v2983 = vadd.f32 %v2901, %v2982
        %v2984 = vpop.f32.mrb[0].mxu0
        %v2985 = vadd.f32 %v2901, %v2984
        %2986 = vdwg.mxu0
        %2987 = vmatprep.subr.mxu0 %v2776
        %2988 = vmatpush1.msra.mxu0 %v2775
        %2989 = vmatprep.subr.mxu0 %v2778
        %2990 = vmatpush1.msra.mxu0 %v2777
        %2991 = vmatprep.subr.mxu0 %v2780
        %2992 = vmatpush1.msra.mxu0 %v2779
        %2993 = vmatprep.subr.mxu0 %v2782
        %2994 = vmatpush1.msra.mxu0 %v2781
        %2995 = vmatprep.subr.mxu0 %v2784
        %2996 = vmatpush1.msra.mxu0 %v2783
        %2997 = vmatprep.subr.mxu0 %v2786
        %2998 = vmatpush1.msra.mxu0 %v2785
        %2999 = vmatprep.subr.mxu0 %v2788
        %3000 = vmatpush1.msra.mxu0 %v2787
        %3001 = vmatprep.subr.mxu0 %v2790
        %3002 = vmatpush1.msra.mxu0 %v2789
        %3003 = vmatprep.subr.mxu0 %v2792
        %3004 = vmatpush1.msra.mxu0 %v2791
        %3005 = vmatprep.subr.mxu0 %v2794
        %3006 = vmatpush1.msra.mxu0 %v2793
        %3007 = vmatprep.subr.mxu0 %v2796
        %3008 = vmatpush1.msra.mxu0 %v2795
        %3009 = vmatprep.subr.mxu0 %v2798
        %3010 = vmatpush1.msra.mxu0 %v2797
        %3011 = vmatprep.subr.mxu0 %v2800
        %3012 = vmatpush1.msra.mxu0 %v2799
        %3013 = vmatprep.subr.mxu0 %v2802
        %3014 = vmatpush1.msra.mxu0 %v2801
        %3015 = vmatprep.subr.mxu0 %v2804
        %3016 = vmatpush1.msra.mxu0 %v2803
        %3017 = vmatprep.subr.mxu0 %v2806
        %3018 = vmatpush1.msra.mxu0 %v2805
        %3019 = vmatprep.subr.mxu0 %v2808
        %3020 = vmatpush1.msra.mxu0 %v2807
        %3021 = vmatprep.subr.mxu0 %v2810
        %3022 = vmatpush1.msra.mxu0 %v2809
        %3023 = vmatprep.subr.mxu0 %v2812
        %3024 = vmatpush1.msra.mxu0 %v2811
        %3025 = vmatprep.subr.mxu0 %v2814
        %3026 = vmatpush1.msra.mxu0 %v2813
        %3027 = vmatprep.subr.mxu0 %v2816
        %3028 = vmatpush1.msra.mxu0 %v2815
        %3029 = vmatprep.subr.mxu0 %v2818
        %3030 = vmatpush1.msra.mxu0 %v2817
        %3031 = vmatprep.subr.mxu0 %v2820
        %3032 = vmatpush1.msra.mxu0 %v2819
        %3033 = vmatprep.subr.mxu0 %v2822
        %3034 = vmatpush1.msra.mxu0 %v2821
        %3035 = vmatprep.subr.mxu0 %v2824
        %3036 = vmatpush1.msra.mxu0 %v2823
        %3037 = vmatprep.subr.mxu0 %v2826
        %3038 = vmatpush1.msra.mxu0 %v2825
        %3039 = vmatprep.subr.mxu0 %v2828
        %3040 = vmatpush1.msra.mxu0 %v2827
        %3041 = vmatprep.subr.mxu0 %v2830
        %3042 = vmatpush1.msra.mxu0 %v2829
        %3043 = vmatprep.subr.mxu0 %v2832
        %3044 = vmatpush1.msra.mxu0 %v2831
        %3045 = vmatprep.subr.mxu0 %v2834
        %3046 = vmatpush1.msra.mxu0 %v2833
        %3047 = vmatprep.subr.mxu0 %v2836
        %3048 = vmatpush1.msra.mxu0 %v2835
        %3049 = vmatprep.subr.mxu0 %v2838
        %3050 = vmatpush1.msra.mxu0 %v2837
        %3051 = vmatprep.mubr.f32.mxu0 %v2702
        %3052 = vmatmul.mubr.f32.gmra.mrb[0].mxu0 %v2701
        %v3053 = vpop.f32.mrb[0].mxu0
        %v3054 = vadd.f32 %v2977, %v3053
        %v3055 = vpop.f32.mrb[0].mxu0
        %v3056 = vadd.f32 %v2979, %v3055
        %3057 = vmatprep.mubr.f32.mxu0 %v2708
        %3058 = vmatmul.mubr.f32.gmra.mrb[0].mxu0 %v2707
        %v3059 = vpop.f32.mrb[0].mxu0
        %v3060 = vadd.f32 %v2983, %v3059
        %v3061 = vpop.f32.mrb[0].mxu0
        %v3062 = vadd.f32 %v2985, %v3061
        %3063 = vdwg.mxu0
        %3064 = vmatprep.subr.mxu0 %v2840
        %3065 = vmatpush1.msra.mxu0 %v2839
        %3066 = vmatprep.subr.mxu0 %v2842
        %3067 = vmatpush1.msra.mxu0 %v2841
        %3068 = vmatprep.subr.mxu0 %v2844
        %3069 = vmatpush1.msra.mxu0 %v2843
        %3070 = vmatprep.subr.mxu0 %v2846
        %3071 = vmatpush1.msra.mxu0 %v2845
        %3072 = vmatprep.subr.mxu0 %v2848
        %3073 = vmatpush1.msra.mxu0 %v2847
        %3074 = vmatprep.subr.mxu0 %v2850
        %3075 = vmatpush1.msra.mxu0 %v2849
        %3076 = vmatprep.subr.mxu0 %v2852
        %3077 = vmatpush1.msra.mxu0 %v2851
        %3078 = vmatprep.subr.mxu0 %v2854
        %3079 = vmatpush1.msra.mxu0 %v2853
        %3080 = vmatprep.subr.mxu0 %v2856
        %3081 = vmatpush1.msra.mxu0 %v2855
        %3082 = vmatprep.subr.mxu0 %v2858
        %3083 = vmatpush1.msra.mxu0 %v2857
        %3084 = vmatprep.subr.mxu0 %v2860
        %3085 = vmatpush1.msra.mxu0 %v2859
        %3086 = vmatprep.subr.mxu0 %v2862
        %3087 = vmatpush1.msra.mxu0 %v2861
        %3088 = vmatprep.subr.mxu0 %v2864
        %3089 = vmatpush1.msra.mxu0 %v2863
        %3090 = vmatprep.subr.mxu0 %v2866
        %3091 = vmatpush1.msra.mxu0 %v2865
        %3092 = vmatprep.subr.mxu0 %v2868
        %3093 = vmatpush1.msra.mxu0 %v2867
        %3094 = vmatprep.subr.mxu0 %v2870
        %3095 = vmatpush1.msra.mxu0 %v2869
        %3096 = vmatprep.subr.mxu0 %v2872
        %3097 = vmatpush1.msra.mxu0 %v2871
        %3098 = vmatprep.subr.mxu0 %v2874
        %3099 = vmatpush1.msra.mxu0 %v2873
        %3100 = vmatprep.subr.mxu0 %v2876
        %3101 = vmatpush1.msra.mxu0 %v2875
        %3102 = vmatprep.subr.mxu0 %v2878
        %3103 = vmatpush1.msra.mxu0 %v2877
        %3104 = vmatprep.subr.mxu0 %v2880
        %3105 = vmatpush1.msra.mxu0 %v2879
        %3106 = vmatprep.subr.mxu0 %v2882
        %3107 = vmatpush1.msra.mxu0 %v2881
        %3108 = vmatprep.subr.mxu0 %v2884
        %3109 = vmatpush1.msra.mxu0 %v2883
        %3110 = vmatprep.subr.mxu0 %v2886
        %3111 = vmatpush1.msra.mxu0 %v2885
        %3112 = vmatprep.subr.mxu0 %v2888
        %3113 = vmatpush1.msra.mxu0 %v2887
        %3114 = vmatprep.subr.mxu0 %v2890
        %3115 = vmatpush1.msra.mxu0 %v2889
        %3116 = vmatprep.subr.mxu0 0.0
        %3117 = vmatpush1.msra.mxu0 0.0
        %3118 = vmatprep.subr.mxu0 0.0
        %3119 = vmatpush1.msra.mxu0 0.0
        %3120 = vmatprep.subr.mxu0 0.0
        %3121 = vmatpush1.msra.mxu0 0.0
        %3122 = vmatprep.subr.mxu0 0.0
        %3123 = vmatpush1.msra.mxu0 0.0
        %3124 = vmatprep.subr.mxu0 0.0
        %3125 = vmatpush1.msra.mxu0 0.0
        %3126 = vmatprep.subr.mxu0 0.0
        %3127 = vmatpush1.msra.mxu0 0.0
        %3128 = vmatprep.mubr.f32.mxu0 %v2905
        %3129 = vmatmul.mubr.f32.gmra.mrb[0].mxu0 %v2703
        %v3130 = vpop.f32.mrb[0].mxu0
        %v3131 = vadd.f32 %v3054, %v3130
        %v3132 = vpop.f32.mrb[0].mxu0
        %v3133 = vadd.f32 %v3056, %v3132
        %3134 = vmatprep.mubr.f32.mxu0 %v2908
        %3135 = vmatmul.mubr.f32.gmra.mrb[0].mxu0 %v2709
        %v3136 = vpop.f32.mrb[0].mxu0
        %v3137 = vadd.f32 %v3060, %v3136
        %v3138 = vpop.f32.mrb[0].mxu0
        %v3139 = vadd.f32 %v3062, %v3138
        %3140 = vdwg.mxu0
        %vm3141 = vcmp.ge.f32.partialorder %v3131, 0.0
        %vm3142 = vcmp.ge.f32.partialorder %v3133, 0.0
        %vm3143 = vcmp.ge.f32.partialorder %v3137, 0.0
        %vm3144 = vcmp.ge.f32.partialorder %v3139, 0.0
        %v3145 = vmul.f32 %v3131, 0.2
        %v3146 = vmul.f32 %v3133, 0.2
        %v3147 = vmul.f32 %v3137, 0.2
        %v3148 = vmul.f32 %v3139, 0.2
        %v3149 = vsel %vm3141, %v3131, %v3145
        %v3150 = vsel %vm3142, %v3133, %v3146
        %v3151 = vsel %vm3143, %v3137, %v3147
        %v3152 = vsel %vm3144, %v3139, %v3148
        %3153 = vrot.lane.b32.xlu0 %v3149, 17
        %v3154 = vpop.permute.xlu0 %3153
        %3155 = vrot.lane.b32.xlu0 %v3151, 17
        %v3156 = vpop.permute.xlu0 %3155
        %3157 = vrot.lane.b32.xlu0 %v3150, 17
        %v3158 = vpop.permute.xlu0 %3157
        %3159 = vrot.lane.b32.xlu0 %v3152, 17
        %v3160 = vpop.permute.xlu0 %3159
        %v3161 = vsel %vm516, %v3154, %v3158
        %v3162 = vsel %vm516, %v3156, %v3160
        %v3163 = vsel %vm516, %v3158, %v3154
        %v3164 = vsel %vm516, %v3160, %v3156
        %v3165 = vld [vmem:[%s1] ss:$8 sm:$0x3]
        %v3167 = vlaneseq
        %v3168 = vshrl.u32 %v3167, 7
        %v3169 = vsub.s32 0, %v3168
        %v3170 = vrot.slane %v3165, %v3169
        %v3171 = vlaneseq
        %v3172 = vshrl.u32 %v3171, 7
        %v3173 = vsub.s32 1, %v3172
        %v3174 = vrot.slane %v3165, %v3173
        %v3177 = vmul.f32 %v3163, %v3170
        %v3178 = vmul.f32 %v3161, %v3174
        %v3179 = vmul.f32 %v3164, %v3170
        %v3180 = vmul.f32 %v3162, %v3174
        %3181 = vst [vmem:[#allocation2 + $0x5a0] sm:$0xff] %v3177
        %3182 = vst [vmem:[#allocation2 + $0x5a8] sm:$0xff] %v3178
        %3183 = vst [vmem:[#allocation2 + $0x5b0] sm:$0xff] %v3179
        %3184 = vst [vmem:[#allocation2 + $0x5b8] sm:$0xff] %v3180
        %3185 = vrot.lane.b32.xlu0 %v3149, 16
        %v3186 = vpop.permute.xlu0 %3185
        %3187 = vrot.lane.b32.xlu0 %v3151, 16
        %v3188 = vpop.permute.xlu0 %3187
        %3189 = vrot.lane.b32.xlu0 %v3150, 16
        %v3190 = vpop.permute.xlu0 %3189
        %3191 = vrot.lane.b32.xlu0 %v3152, 16
        %v3192 = vpop.permute.xlu0 %3191
        %v3193 = vsel %vm569, %v3186, %v3190
        %v3194 = vsel %vm569, %v3188, %v3192
        %v3195 = vsel %vm569, %v3190, %v3186
        %v3196 = vsel %vm569, %v3192, %v3188
        %v3197 = vld [vmem:[%s578] ss:$8 sm:$0x3]
        %v3199 = vlaneseq
        %v3200 = vshrl.u32 %v3199, 7
        %v3201 = vsub.s32 0, %v3200
        %v3202 = vrot.slane %v3197, %v3201
        %v3203 = vlaneseq
        %v3204 = vshrl.u32 %v3203, 7
        %v3205 = vsub.s32 1, %v3204
        %v3206 = vrot.slane %v3197, %v3205
        %v3209 = vmul.f32 %v3195, %v3202
        %v3210 = vmul.f32 %v3193, %v3206
        %v3211 = vmul.f32 %v3196, %v3202
        %v3212 = vmul.f32 %v3194, %v3206
        %3213 = vst [vmem:[#allocation2 + $0x5c0] sm:$0xff] %v3209
        %3214 = vst [vmem:[#allocation2 + $0x5c8] sm:$0xff] %v3210
        %3215 = vst [vmem:[#allocation2 + $0x5d0] sm:$0xff] %v3211
        %3216 = vst [vmem:[#allocation2 + $0x5d8] sm:$0xff] %v3212
        %3217 = vrot.lane.b32.xlu0 %v3149, 15
        %v3218 = vpop.permute.xlu0 %3217
        %3219 = vrot.lane.b32.xlu0 %v3151, 15
        %v3220 = vpop.permute.xlu0 %3219
        %3221 = vrot.lane.b32.xlu0 %v3150, 15
        %v3222 = vpop.permute.xlu0 %3221
        %3223 = vrot.lane.b32.xlu0 %v3152, 15
        %v3224 = vpop.permute.xlu0 %3223
        %v3225 = vsel %vm623, %v3218, %v3222
        %v3226 = vsel %vm623, %v3220, %v3224
        %v3227 = vsel %vm623, %v3222, %v3218
        %v3228 = vsel %vm623, %v3224, %v3220
        %v3229 = vld [vmem:[%s632] ss:$8 sm:$0x3]
        %v3231 = vlaneseq
        %v3232 = vshrl.u32 %v3231, 7
        %v3233 = vsub.s32 0, %v3232
        %v3234 = vrot.slane %v3229, %v3233
        %v3235 = vlaneseq
        %v3236 = vshrl.u32 %v3235, 7
        %v3237 = vsub.s32 1, %v3236
        %v3238 = vrot.slane %v3229, %v3237
        %v3241 = vmul.f32 %v3227, %v3234
        %v3242 = vmul.f32 %v3225, %v3238
        %v3243 = vmul.f32 %v3228, %v3234
        %v3244 = vmul.f32 %v3226, %v3238
        %3245 = vst [vmem:[#allocation2 + $0x5e0] sm:$0xff] %v3241
        %3246 = vst [vmem:[#allocation2 + $0x5e8] sm:$0xff] %v3242
        %3247 = vst [vmem:[#allocation2 + $0x5f0] sm:$0xff] %v3243
        %3248 = vst [vmem:[#allocation2 + $0x5f8] sm:$0xff] %v3244
        %3249 = vrot.lane.b32.xlu0 %v3149, 1
        %v3250 = vpop.permute.xlu0 %3249
        %3251 = vrot.lane.b32.xlu0 %v3151, 1
        %v3252 = vpop.permute.xlu0 %3251
        %3253 = vrot.lane.b32.xlu0 %v3150, 1
        %v3254 = vpop.permute.xlu0 %3253
        %3255 = vrot.lane.b32.xlu0 %v3152, 1
        %v3256 = vpop.permute.xlu0 %3255
        %v3257 = vsel %vm677, %v3250, %v3254
        %v3258 = vsel %vm677, %v3252, %v3256
        %v3259 = vsel %vm677, %v3254, %v3250
        %v3260 = vsel %vm677, %v3256, %v3252
        %v3261 = vld [vmem:[%s686] ss:$8 sm:$0x3]
        %v3263 = vlaneseq
        %v3264 = vshrl.u32 %v3263, 7
        %v3265 = vsub.s32 0, %v3264
        %v3266 = vrot.slane %v3261, %v3265
        %v3267 = vlaneseq
        %v3268 = vshrl.u32 %v3267, 7
        %v3269 = vsub.s32 1, %v3268
        %v3270 = vrot.slane %v3261, %v3269
        %v3273 = vmul.f32 %v3259, %v3266
        %v3274 = vmul.f32 %v3257, %v3270
        %v3275 = vmul.f32 %v3260, %v3266
        %v3276 = vmul.f32 %v3258, %v3270
        %3277 = vst [vmem:[#allocation2 + $0x600] sm:$0xff] %v3273
        %3278 = vst [vmem:[#allocation2 + $0x608] sm:$0xff] %v3274
        %3279 = vst [vmem:[#allocation2 + $0x610] sm:$0xff] %v3275
        %3280 = vst [vmem:[#allocation2 + $0x618] sm:$0xff] %v3276
        %3281 = vst [vmem:[#allocation2 + $0x620] sm:$0xff] %v3149
        %3282 = vst [vmem:[#allocation2 + $0x628] sm:$0xff] %v3150
        %3283 = vst [vmem:[#allocation2 + $0x630] sm:$0xff] %v3151
        %3284 = vst [vmem:[#allocation2 + $0x638] sm:$0xff] %v3152
        %3285 = vrot.lane.b32.xlu0 %v3149, 127
        %v3286 = vpop.permute.xlu0 %3285
        %3287 = vrot.lane.b32.xlu0 %v3151, 127
        %v3288 = vpop.permute.xlu0 %3287
        %3289 = vrot.lane.b32.xlu0 %v3150, 127
        %v3290 = vpop.permute.xlu0 %3289
        %3291 = vrot.lane.b32.xlu0 %v3152, 127
        %v3292 = vpop.permute.xlu0 %3291
        %v3293 = vsel %vm739, %v3286, %v3290
        %v3294 = vsel %vm739, %v3288, %v3292
        %v3295 = vsel %vm739, %v3290, %v3286
        %v3296 = vsel %vm739, %v3292, %v3288
        %v3297 = vld [vmem:[%s748] ss:$8 sm:$0x3]
        %v3299 = vlaneseq
        %v3300 = vshrl.u32 %v3299, 7
        %v3301 = vsub.s32 0, %v3300
        %v3302 = vrot.slane %v3297, %v3301
        %v3303 = vlaneseq
        %v3304 = vshrl.u32 %v3303, 7
        %v3305 = vsub.s32 1, %v3304
        %v3306 = vrot.slane %v3297, %v3305
        %v3309 = vmul.f32 %v3293, %v3302
        %v3310 = vmul.f32 %v3295, %v3306
        %v3311 = vmul.f32 %v3294, %v3302
        %v3312 = vmul.f32 %v3296, %v3306
        %3313 = vst [vmem:[#allocation2 + $0x640] sm:$0xff] %v3309
        %3314 = vst [vmem:[#allocation2 + $0x648] sm:$0xff] %v3310
        %3315 = vst [vmem:[#allocation2 + $0x650] sm:$0xff] %v3311
        %3316 = vst [vmem:[#allocation2 + $0x658] sm:$0xff] %v3312
        %3317 = vrot.lane.b32.xlu0 %v3149, 113
        %v3318 = vpop.permute.xlu0 %3317
        %3319 = vrot.lane.b32.xlu0 %v3151, 113
        %v3320 = vpop.permute.xlu0 %3319
        %3321 = vrot.lane.b32.xlu0 %v3150, 113
        %v3322 = vpop.permute.xlu0 %3321
        %3323 = vrot.lane.b32.xlu0 %v3152, 113
        %v3324 = vpop.permute.xlu0 %3323
        %v3325 = vsel %vm793, %v3318, %v3322
        %v3326 = vsel %vm793, %v3320, %v3324
        %v3327 = vsel %vm793, %v3322, %v3318
        %v3328 = vsel %vm793, %v3324, %v3320
        %v3329 = vld [vmem:[%s802] ss:$8 sm:$0x3]
        %v3331 = vlaneseq
        %v3332 = vshrl.u32 %v3331, 7
        %v3333 = vsub.s32 0, %v3332
        %v3334 = vrot.slane %v3329, %v3333
        %v3335 = vlaneseq
        %v3336 = vshrl.u32 %v3335, 7
        %v3337 = vsub.s32 1, %v3336
        %v3338 = vrot.slane %v3329, %v3337
        %v3341 = vmul.f32 %v3325, %v3334
        %v3342 = vmul.f32 %v3327, %v3338
        %v3343 = vmul.f32 %v3326, %v3334
        %v3344 = vmul.f32 %v3328, %v3338
        %3345 = vst [vmem:[#allocation2 + $0x660] sm:$0xff] %v3341
        %3346 = vst [vmem:[#allocation2 + $0x668] sm:$0xff] %v3342
        %3347 = vst [vmem:[#allocation2 + $0x670] sm:$0xff] %v3343
        %3348 = vst [vmem:[#allocation2 + $0x678] sm:$0xff] %v3344
        %3349 = vrot.lane.b32.xlu0 %v3149, 112
        %v3350 = vpop.permute.xlu0 %3349
        %3351 = vrot.lane.b32.xlu0 %v3151, 112
        %v3352 = vpop.permute.xlu0 %3351
        %3353 = vrot.lane.b32.xlu0 %v3150, 112
        %v3354 = vpop.permute.xlu0 %3353
        %3355 = vrot.lane.b32.xlu0 %v3152, 112
        %v3356 = vpop.permute.xlu0 %3355
        %v3357 = vsel %vm847, %v3350, %v3354
        %v3358 = vsel %vm847, %v3352, %v3356
        %v3359 = vsel %vm847, %v3354, %v3350
        %v3360 = vsel %vm847, %v3356, %v3352
        %v3361 = vld [vmem:[%s856] ss:$8 sm:$0x3]
        %v3363 = vlaneseq
        %v3364 = vshrl.u32 %v3363, 7
        %v3365 = vsub.s32 0, %v3364
        %v3366 = vrot.slane %v3361, %v3365
        %v3367 = vlaneseq
        %v3368 = vshrl.u32 %v3367, 7
        %v3369 = vsub.s32 1, %v3368
        %v3370 = vrot.slane %v3361, %v3369
        %v3373 = vmul.f32 %v3357, %v3366
        %v3374 = vmul.f32 %v3359, %v3370
        %v3375 = vmul.f32 %v3358, %v3366
        %v3376 = vmul.f32 %v3360, %v3370
        %3377 = vst [vmem:[#allocation2 + $0x680] sm:$0xff] %v3373
        %3378 = vst [vmem:[#allocation2 + $0x688] sm:$0xff] %v3374
        %3379 = vst [vmem:[#allocation2 + $0x690] sm:$0xff] %v3375
        %3380 = vst [vmem:[#allocation2 + $0x698] sm:$0xff] %v3376
        %3381 = vrot.lane.b32.xlu0 %v3149, 111
        %v3382 = vpop.permute.xlu0 %3381
        %3383 = vrot.lane.b32.xlu0 %v3151, 111
        %v3384 = vpop.permute.xlu0 %3383
        %3385 = vrot.lane.b32.xlu0 %v3150, 111
        %v3386 = vpop.permute.xlu0 %3385
        %3387 = vrot.lane.b32.xlu0 %v3152, 111
        %v3388 = vpop.permute.xlu0 %3387
        %v3389 = vsel %vm901, %v3382, %v3386
        %v3390 = vsel %vm901, %v3384, %v3388
        %v3391 = vsel %vm901, %v3386, %v3382
        %v3392 = vsel %vm901, %v3388, %v3384
        %v3393 = vld [vmem:[%s910] ss:$8 sm:$0x3]
        %v3395 = vlaneseq
        %v3396 = vshrl.u32 %v3395, 7
        %v3397 = vsub.s32 0, %v3396
        %v3398 = vrot.slane %v3393, %v3397
        %v3399 = vlaneseq
        %v3400 = vshrl.u32 %v3399, 7
        %v3401 = vsub.s32 1, %v3400
        %v3402 = vrot.slane %v3393, %v3401
        %v3405 = vmul.f32 %v3389, %v3398
        %v3406 = vmul.f32 %v3391, %v3402
        %v3407 = vmul.f32 %v3390, %v3398
        %v3408 = vmul.f32 %v3392, %v3402
        %3409 = vst [vmem:[#allocation2 + $0x6a0] sm:$0xff] %v3405
        %3410 = vst [vmem:[#allocation2 + $0x6a8] sm:$0xff] %v3406
        %3411 = vst [vmem:[#allocation2 + $0x6b0] sm:$0xff] %v3407
        %3412 = vst [vmem:[#allocation2 + $0x6b8] sm:$0xff] %v3408
        %v3413 = vld [vmem:[#allocation11] sm:$0xff]
        %v3414 = vld [vmem:[#allocation11 + $0x8] sm:$0xff]
        %v3415 = vld [vmem:[#allocation11 + $0x10] sm:$0xff]
        %v3416 = vld [vmem:[#allocation11 + $0x18] sm:$0xff]
        %v3417 = vld [vmem:[#allocation11 + $0x20] sm:$0xff]
        %v3418 = vld [vmem:[#allocation11 + $0x28] sm:$0xff]
        %v3419 = vld [vmem:[#allocation11 + $0x30] sm:$0xff]
        %v3420 = vld [vmem:[#allocation11 + $0x38] sm:$0xff]
        %v3421 = vld [vmem:[#allocation11 + $0x40] sm:$0xff]
        %v3422 = vld [vmem:[#allocation11 + $0x48] sm:$0xff]
        %v3423 = vld [vmem:[#allocation11 + $0x50] sm:$0xff]
        %v3424 = vld [vmem:[#allocation11 + $0x58] sm:$0xff]
        %v3425 = vld [vmem:[#allocation11 + $0x60] sm:$0xff]
        %v3426 = vld [vmem:[#allocation11 + $0x68] sm:$0xff]
        %v3427 = vld [vmem:[#allocation11 + $0x70] sm:$0xff]
        %v3428 = vld [vmem:[#allocation11 + $0x78] sm:$0xff]
        %v3429 = vld [vmem:[#allocation11 + $0x80] sm:$0xff]
        %v3430 = vld [vmem:[#allocation11 + $0x88] sm:$0xff]
        %v3431 = vld [vmem:[#allocation11 + $0x90] sm:$0xff]
        %v3432 = vld [vmem:[#allocation11 + $0x98] sm:$0xff]
        %v3433 = vld [vmem:[#allocation11 + $0xa0] sm:$0xff]
        %v3434 = vld [vmem:[#allocation11 + $0xa8] sm:$0xff]
        %v3435 = vld [vmem:[#allocation11 + $0xb0] sm:$0xff]
        %v3436 = vld [vmem:[#allocation11 + $0xb8] sm:$0xff]
        %v3437 = vld [vmem:[#allocation11 + $0xc0] sm:$0xff]
        %v3438 = vld [vmem:[#allocation11 + $0xc8] sm:$0xff]
        %v3439 = vld [vmem:[#allocation11 + $0xd0] sm:$0xff]
        %v3440 = vld [vmem:[#allocation11 + $0xd8] sm:$0xff]
        %v3441 = vld [vmem:[#allocation2] sm:$0xff]
        %v3442 = vld [vmem:[#allocation2 + $0x8] sm:$0xff]
        %v3443 = vld [vmem:[#allocation2 + $0x10] sm:$0xff]
        %v3444 = vld [vmem:[#allocation2 + $0x18] sm:$0xff]
        %v3445 = vld [vmem:[#allocation2 + $0x20] sm:$0xff]
        %v3446 = vld [vmem:[#allocation2 + $0x28] sm:$0xff]
        %v3447 = vld [vmem:[#allocation2 + $0x30] sm:$0xff]
        %v3448 = vld [vmem:[#allocation2 + $0x38] sm:$0xff]
        %v3449 = vld [vmem:[#allocation2 + $0x40] sm:$0xff]
        %v3450 = vld [vmem:[#allocation2 + $0x48] sm:$0xff]
        %v3451 = vld [vmem:[#allocation2 + $0x50] sm:$0xff]
        %v3452 = vld [vmem:[#allocation2 + $0x58] sm:$0xff]
        %v3453 = vld [vmem:[#allocation2 + $0x60] sm:$0xff]
        %v3454 = vld [vmem:[#allocation2 + $0x68] sm:$0xff]
        %v3455 = vld [vmem:[#allocation2 + $0x70] sm:$0xff]
        %v3456 = vld [vmem:[#allocation2 + $0x78] sm:$0xff]
        %v3457 = vld [vmem:[#allocation2 + $0x80] sm:$0xff]
        %v3458 = vld [vmem:[#allocation2 + $0x88] sm:$0xff]
        %v3459 = vld [vmem:[#allocation2 + $0x90] sm:$0xff]
        %v3460 = vld [vmem:[#allocation2 + $0x98] sm:$0xff]
        %v3461 = vld [vmem:[#allocation2 + $0xa0] sm:$0xff]
        %v3462 = vld [vmem:[#allocation2 + $0xa8] sm:$0xff]
        %v3463 = vld [vmem:[#allocation2 + $0xb0] sm:$0xff]
        %v3464 = vld [vmem:[#allocation2 + $0xb8] sm:$0xff]
        %v3465 = vld [vmem:[#allocation2 + $0xc0] sm:$0xff]
        %v3466 = vld [vmem:[#allocation2 + $0xc8] sm:$0xff]
        %v3467 = vld [vmem:[#allocation2 + $0xd0] sm:$0xff]
        %v3468 = vld [vmem:[#allocation2 + $0xd8] sm:$0xff]
        %v3469 = vld [vmem:[#allocation2 + $0xe0] sm:$0xff]
        %v3470 = vld [vmem:[#allocation2 + $0xe8] sm:$0xff]
        %v3471 = vld [vmem:[#allocation2 + $0xf0] sm:$0xff]
        %v3472 = vld [vmem:[#allocation2 + $0xf8] sm:$0xff]
        %v3473 = vld [vmem:[#allocation2 + $0x100] sm:$0xff]
        %v3474 = vld [vmem:[#allocation2 + $0x108] sm:$0xff]
        %v3475 = vld [vmem:[#allocation2 + $0x110] sm:$0xff]
        %v3476 = vld [vmem:[#allocation2 + $0x118] sm:$0xff]
        %v3477 = vld [vmem:[#allocation2 + $0x120] sm:$0xff]
        %v3478 = vld [vmem:[#allocation2 + $0x128] sm:$0xff]
        %v3479 = vld [vmem:[#allocation2 + $0x130] sm:$0xff]
        %v3480 = vld [vmem:[#allocation2 + $0x138] sm:$0xff]
        %v3481 = vld [vmem:[#allocation2 + $0x140] sm:$0xff]
        %v3482 = vld [vmem:[#allocation2 + $0x148] sm:$0xff]
        %v3483 = vld [vmem:[#allocation2 + $0x150] sm:$0xff]
        %v3484 = vld [vmem:[#allocation2 + $0x158] sm:$0xff]
        %v3485 = vld [vmem:[#allocation2 + $0x160] sm:$0xff]
        %v3486 = vld [vmem:[#allocation2 + $0x168] sm:$0xff]
        %v3487 = vld [vmem:[#allocation2 + $0x170] sm:$0xff]
        %v3488 = vld [vmem:[#allocation2 + $0x178] sm:$0xff]
        %v3489 = vld [vmem:[#allocation2 + $0x180] sm:$0xff]
        %v3490 = vld [vmem:[#allocation2 + $0x188] sm:$0xff]
        %v3491 = vld [vmem:[#allocation2 + $0x190] sm:$0xff]
        %v3492 = vld [vmem:[#allocation2 + $0x198] sm:$0xff]
        %v3493 = vld [vmem:[#allocation2 + $0x1a0] sm:$0xff]
        %v3494 = vld [vmem:[#allocation2 + $0x1a8] sm:$0xff]
        %v3495 = vld [vmem:[#allocation2 + $0x1b0] sm:$0xff]
        %v3496 = vld [vmem:[#allocation2 + $0x1b8] sm:$0xff]
        %v3497 = vld [vmem:[#allocation2 + $0x1c0] sm:$0xff]
        %v3498 = vld [vmem:[#allocation2 + $0x1c8] sm:$0xff]
        %v3499 = vld [vmem:[#allocation2 + $0x1d0] sm:$0xff]
        %v3500 = vld [vmem:[#allocation2 + $0x1d8] sm:$0xff]
        %v3501 = vld [vmem:[#allocation2 + $0x1e0] sm:$0xff]
        %v3502 = vld [vmem:[#allocation2 + $0x1e8] sm:$0xff]
        %v3503 = vld [vmem:[#allocation2 + $0x1f0] sm:$0xff]
        %v3504 = vld [vmem:[#allocation2 + $0x1f8] sm:$0xff]
        %v3505 = vld [vmem:[#allocation2 + $0x200] sm:$0xff]
        %v3506 = vld [vmem:[#allocation2 + $0x208] sm:$0xff]
        %v3507 = vld [vmem:[#allocation2 + $0x210] sm:$0xff]
        %v3508 = vld [vmem:[#allocation2 + $0x218] sm:$0xff]
        %v3509 = vld [vmem:[#allocation2 + $0x220] sm:$0xff]
        %v3510 = vld [vmem:[#allocation2 + $0x228] sm:$0xff]
        %v3511 = vld [vmem:[#allocation2 + $0x230] sm:$0xff]
        %v3512 = vld [vmem:[#allocation2 + $0x238] sm:$0xff]
        %v3513 = vld [vmem:[#allocation2 + $0x240] sm:$0xff]
        %v3514 = vld [vmem:[#allocation2 + $0x248] sm:$0xff]
        %v3515 = vld [vmem:[#allocation2 + $0x250] sm:$0xff]
        %v3516 = vld [vmem:[#allocation2 + $0x258] sm:$0xff]
        %v3517 = vld [vmem:[#allocation2 + $0x260] sm:$0xff]
        %v3518 = vld [vmem:[#allocation2 + $0x268] sm:$0xff]
        %v3519 = vld [vmem:[#allocation2 + $0x270] sm:$0xff]
        %v3520 = vld [vmem:[#allocation2 + $0x278] sm:$0xff]
        %v3521 = vld [vmem:[#allocation2 + $0x280] sm:$0xff]
        %v3522 = vld [vmem:[#allocation2 + $0x288] sm:$0xff]
        %v3523 = vld [vmem:[#allocation2 + $0x290] sm:$0xff]
        %v3524 = vld [vmem:[#allocation2 + $0x298] sm:$0xff]
        %v3525 = vld [vmem:[#allocation2 + $0x2a0] sm:$0xff]
        %v3526 = vld [vmem:[#allocation2 + $0x2a8] sm:$0xff]
        %v3527 = vld [vmem:[#allocation2 + $0x2b0] sm:$0xff]
        %v3528 = vld [vmem:[#allocation2 + $0x2b8] sm:$0xff]
        %v3529 = vld [vmem:[#allocation2 + $0x2c0] sm:$0xff]
        %v3530 = vld [vmem:[#allocation2 + $0x2c8] sm:$0xff]
        %v3531 = vld [vmem:[#allocation2 + $0x2d0] sm:$0xff]
        %v3532 = vld [vmem:[#allocation2 + $0x2d8] sm:$0xff]
        %v3533 = vld [vmem:[#allocation2 + $0x2e0] sm:$0xff]
        %v3534 = vld [vmem:[#allocation2 + $0x2e8] sm:$0xff]
        %v3535 = vld [vmem:[#allocation2 + $0x2f0] sm:$0xff]
        %v3536 = vld [vmem:[#allocation2 + $0x2f8] sm:$0xff]
        %v3537 = vld [vmem:[#allocation2 + $0x300] sm:$0xff]
        %v3538 = vld [vmem:[#allocation2 + $0x308] sm:$0xff]
        %v3539 = vld [vmem:[#allocation2 + $0x310] sm:$0xff]
        %v3540 = vld [vmem:[#allocation2 + $0x318] sm:$0xff]
        %v3541 = vld [vmem:[#allocation2 + $0x320] sm:$0xff]
        %v3542 = vld [vmem:[#allocation2 + $0x328] sm:$0xff]
        %v3543 = vld [vmem:[#allocation2 + $0x330] sm:$0xff]
        %v3544 = vld [vmem:[#allocation2 + $0x338] sm:$0xff]
        %v3545 = vld [vmem:[#allocation2 + $0x340] sm:$0xff]
        %v3546 = vld [vmem:[#allocation2 + $0x348] sm:$0xff]
        %v3547 = vld [vmem:[#allocation2 + $0x350] sm:$0xff]
        %v3548 = vld [vmem:[#allocation2 + $0x358] sm:$0xff]
        %v3549 = vld [vmem:[#allocation2 + $0x360] sm:$0xff]
        %v3550 = vld [vmem:[#allocation2 + $0x368] sm:$0xff]
        %v3551 = vld [vmem:[#allocation2 + $0x370] sm:$0xff]
        %v3552 = vld [vmem:[#allocation2 + $0x378] sm:$0xff]
        %v3553 = vld [vmem:[#allocation2 + $0x380] sm:$0xff]
        %v3554 = vld [vmem:[#allocation2 + $0x388] sm:$0xff]
        %v3555 = vld [vmem:[#allocation2 + $0x390] sm:$0xff]
        %v3556 = vld [vmem:[#allocation2 + $0x398] sm:$0xff]
        %v3557 = vld [vmem:[#allocation2 + $0x3a0] sm:$0xff]
        %v3558 = vld [vmem:[#allocation2 + $0x3a8] sm:$0xff]
        %v3559 = vld [vmem:[#allocation2 + $0x3b0] sm:$0xff]
        %v3560 = vld [vmem:[#allocation2 + $0x3b8] sm:$0xff]
        %v3561 = vld [vmem:[#allocation2 + $0x3c0] sm:$0xff]
        %v3562 = vld [vmem:[#allocation2 + $0x3c8] sm:$0xff]
        %v3563 = vld [vmem:[#allocation2 + $0x3d0] sm:$0xff]
        %v3564 = vld [vmem:[#allocation2 + $0x3d8] sm:$0xff]
        %v3565 = vld [vmem:[#allocation2 + $0x3e0] sm:$0xff]
        %v3566 = vld [vmem:[#allocation2 + $0x3e8] sm:$0xff]
        %v3567 = vld [vmem:[#allocation2 + $0x3f0] sm:$0xff]
        %v3568 = vld [vmem:[#allocation2 + $0x3f8] sm:$0xff]
        %v3569 = vld [vmem:[#allocation2 + $0x400] sm:$0xff]
        %v3570 = vld [vmem:[#allocation2 + $0x408] sm:$0xff]
        %v3571 = vld [vmem:[#allocation2 + $0x410] sm:$0xff]
        %v3572 = vld [vmem:[#allocation2 + $0x418] sm:$0xff]
        %v3573 = vld [vmem:[#allocation2 + $0x420] sm:$0xff]
        %v3574 = vld [vmem:[#allocation2 + $0x428] sm:$0xff]
        %v3575 = vld [vmem:[#allocation2 + $0x430] sm:$0xff]
        %v3576 = vld [vmem:[#allocation2 + $0x438] sm:$0xff]
        %v3577 = vld [vmem:[#allocation2 + $0x440] sm:$0xff]
        %v3578 = vld [vmem:[#allocation2 + $0x448] sm:$0xff]
        %v3579 = vld [vmem:[#allocation2 + $0x450] sm:$0xff]
        %v3580 = vld [vmem:[#allocation2 + $0x458] sm:$0xff]
        %v3581 = vld [vmem:[#allocation2 + $0x460] sm:$0xff]
        %v3582 = vld [vmem:[#allocation2 + $0x468] sm:$0xff]
        %v3583 = vld [vmem:[#allocation2 + $0x470] sm:$0xff]
        %v3584 = vld [vmem:[#allocation2 + $0x478] sm:$0xff]
        %v3585 = vld [vmem:[#allocation2 + $0x480] sm:$0xff]
        %v3586 = vld [vmem:[#allocation2 + $0x488] sm:$0xff]
        %v3587 = vld [vmem:[#allocation2 + $0x490] sm:$0xff]
        %v3588 = vld [vmem:[#allocation2 + $0x498] sm:$0xff]
        %v3589 = vld [vmem:[#allocation2 + $0x4a0] sm:$0xff]
        %v3590 = vld [vmem:[#allocation2 + $0x4a8] sm:$0xff]
        %v3591 = vld [vmem:[#allocation2 + $0x4b0] sm:$0xff]
        %v3592 = vld [vmem:[#allocation2 + $0x4b8] sm:$0xff]
        %v3593 = vld [vmem:[#allocation2 + $0x4c0] sm:$0xff]
        %v3594 = vld [vmem:[#allocation2 + $0x4c8] sm:$0xff]
        %v3595 = vld [vmem:[#allocation2 + $0x4d0] sm:$0xff]
        %v3596 = vld [vmem:[#allocation2 + $0x4d8] sm:$0xff]
        %v3597 = vld [vmem:[#allocation2 + $0x4e0] sm:$0xff]
        %v3598 = vld [vmem:[#allocation2 + $0x4e8] sm:$0xff]
        %v3599 = vld [vmem:[#allocation2 + $0x4f0] sm:$0xff]
        %v3600 = vld [vmem:[#allocation2 + $0x4f8] sm:$0xff]
        %v3601 = vld [vmem:[#allocation2 + $0x500] sm:$0xff]
        %v3602 = vld [vmem:[#allocation2 + $0x508] sm:$0xff]
        %v3603 = vld [vmem:[#allocation2 + $0x510] sm:$0xff]
        %v3604 = vld [vmem:[#allocation2 + $0x518] sm:$0xff]
        %v3605 = vld [vmem:[#allocation2 + $0x520] sm:$0xff]
        %v3606 = vld [vmem:[#allocation2 + $0x528] sm:$0xff]
        %v3607 = vld [vmem:[#allocation2 + $0x530] sm:$0xff]
        %v3608 = vld [vmem:[#allocation2 + $0x538] sm:$0xff]
        %v3609 = vld [vmem:[#allocation2 + $0x540] sm:$0xff]
        %v3610 = vld [vmem:[#allocation2 + $0x548] sm:$0xff]
        %v3611 = vld [vmem:[#allocation2 + $0x550] sm:$0xff]
        %v3612 = vld [vmem:[#allocation2 + $0x558] sm:$0xff]
        %v3613 = vld [vmem:[#allocation2 + $0x560] sm:$0xff]
        %v3614 = vld [vmem:[#allocation2 + $0x568] sm:$0xff]
        %v3615 = vld [vmem:[#allocation2 + $0x570] sm:$0xff]
        %v3616 = vld [vmem:[#allocation2 + $0x578] sm:$0xff]
        %v3617 = vld [vmem:[#allocation2 + $0x580] sm:$0xff]
        %v3618 = vld [vmem:[#allocation2 + $0x588] sm:$0xff]
        %v3619 = vld [vmem:[#allocation2 + $0x590] sm:$0xff]
        %v3620 = vld [vmem:[#allocation2 + $0x598] sm:$0xff]
        %v3621 = vld [vmem:[#allocation2 + $0x5a0] sm:$0xff]
        %v3622 = vld [vmem:[#allocation2 + $0x5a8] sm:$0xff]
        %v3623 = vld [vmem:[#allocation2 + $0x5b0] sm:$0xff]
        %v3624 = vld [vmem:[#allocation2 + $0x5b8] sm:$0xff]
        %v3625 = vld [vmem:[#allocation2 + $0x5c0] sm:$0xff]
        %v3626 = vld [vmem:[#allocation2 + $0x5c8] sm:$0xff]
        %v3627 = vld [vmem:[#allocation2 + $0x5d0] sm:$0xff]
        %v3628 = vld [vmem:[#allocation2 + $0x5d8] sm:$0xff]
        %v3629 = vld [vmem:[#allocation2 + $0x5e0] sm:$0xff]
        %v3630 = vld [vmem:[#allocation2 + $0x5e8] sm:$0xff]
        %v3631 = vld [vmem:[#allocation2 + $0x5f0] sm:$0xff]
        %v3632 = vld [vmem:[#allocation2 + $0x5f8] sm:$0xff]
        %v3633 = vld [vmem:[#allocation2 + $0x600] sm:$0xff]
        %v3634 = vld [vmem:[#allocation2 + $0x608] sm:$0xff]
        %v3635 = vld [vmem:[#allocation2 + $0x610] sm:$0xff]
        %v3636 = vld [vmem:[#allocation2 + $0x618] sm:$0xff]
        %v3637 = vld [vmem:[#allocation2 + $0x620] sm:$0xff]
        %v3638 = vld [vmem:[#allocation2 + $0x628] sm:$0xff]
        %v3639 = vld [vmem:[#allocation2 + $0x630] sm:$0xff]
        %v3640 = vld [vmem:[#allocation2 + $0x638] sm:$0xff]
        %v3641 = vld [vmem:[#allocation2 + $0x640] sm:$0xff]
        %v3642 = vld [vmem:[#allocation2 + $0x648] sm:$0xff]
        %v3643 = vld [vmem:[#allocation2 + $0x650] sm:$0xff]
        %v3644 = vld [vmem:[#allocation2 + $0x658] sm:$0xff]
        %v3645 = vld [vmem:[#allocation2 + $0x660] sm:$0xff]
        %v3646 = vld [vmem:[#allocation2 + $0x668] sm:$0xff]
        %v3647 = vld [vmem:[#allocation2 + $0x670] sm:$0xff]
        %v3648 = vld [vmem:[#allocation2 + $0x678] sm:$0xff]
        %v3649 = vld [vmem:[#allocation2 + $0x680] sm:$0xff]
        %v3650 = vld [vmem:[#allocation2 + $0x688] sm:$0xff]
        %v3651 = vld [vmem:[#allocation2 + $0x690] sm:$0xff]
        %v3652 = vld [vmem:[#allocation2 + $0x698] sm:$0xff]
        %v3653 = vld [vmem:[#allocation2 + $0x6a0] sm:$0xff]
        %v3654 = vld [vmem:[#allocation2 + $0x6a8] sm:$0xff]
        %v3655 = vld [vmem:[#allocation2 + $0x6b0] sm:$0xff]
        %v3656 = vld [vmem:[#allocation2 + $0x6b8] sm:$0xff]
        %v3657 = vld [vmem:[%s11] sm:$0xff]
        %v3658 = vld [vmem:[%s11 + $0x8] sm:$0xff]
        %v3659 = vld [vmem:[%s11 + $0x10] sm:$0xff]
        %v3660 = vld [vmem:[%s11 + $0x18] sm:$0xff]
        %3662 = vset.pattern.permute.xlu0 0
        %3663 = vperm.xlu0 %3662, %v3657
        %v3664 = vpop.permute.xlu0 %3663
        %3667 = vset.pattern.permute.xlu0 0
        %3668 = vperm.xlu0 %3667, %v3658
        %v3669 = vpop.permute.xlu0 %3668
        %3672 = vset.pattern.permute.xlu0 0
        %3673 = vperm.xlu0 %3672, %v3659
        %v3674 = vpop.permute.xlu0 %3673
        %3677 = vset.pattern.permute.xlu0 0
        %3678 = vperm.xlu0 %3677, %v3660
        %v3679 = vpop.permute.xlu0 %3678
        %vm3681 = vcmask 785408
        %v3683 = vsel %vm3681, %v3419, 0
        %v3686 = vsel %vm3681, %v3426, 0
        %v3689 = vsel %vm3681, %v3433, 0
        %v3692 = vsel %vm3681, %v3440, 0
        %3694 = vmatprep.subr.mxu0 %v3442
        %3695 = vmatpush1.msra.mxu0 %v3441
        %3696 = vmatprep.subr.mxu0 %v3444
        %3697 = vmatpush1.msra.mxu0 %v3443
        %3698 = vmatprep.subr.mxu0 %v3446
        %3699 = vmatpush1.msra.mxu0 %v3445
        %3700 = vmatprep.subr.mxu0 %v3448
        %3701 = vmatpush1.msra.mxu0 %v3447
        %3702 = vmatprep.subr.mxu0 %v3450
        %3703 = vmatpush1.msra.mxu0 %v3449
        %3704 = vmatprep.subr.mxu0 %v3452
        %3705 = vmatpush1.msra.mxu0 %v3451
        %3706 = vmatprep.subr.mxu0 %v3454
        %3707 = vmatpush1.msra.mxu0 %v3453
        %3708 = vmatprep.subr.mxu0 %v3456
        %3709 = vmatpush1.msra.mxu0 %v3455
        %3710 = vmatprep.subr.mxu0 %v3458
        %3711 = vmatpush1.msra.mxu0 %v3457
        %3712 = vmatprep.subr.mxu0 %v3460
        %3713 = vmatpush1.msra.mxu0 %v3459
        %3714 = vmatprep.subr.mxu0 %v3462
        %3715 = vmatpush1.msra.mxu0 %v3461
        %3716 = vmatprep.subr.mxu0 %v3464
        %3717 = vmatpush1.msra.mxu0 %v3463
        %3718 = vmatprep.subr.mxu0 %v3466
        %3719 = vmatpush1.msra.mxu0 %v3465
        %3720 = vmatprep.subr.mxu0 %v3468
        %3721 = vmatpush1.msra.mxu0 %v3467
        %3722 = vmatprep.subr.mxu0 %v3470
        %3723 = vmatpush1.msra.mxu0 %v3469
        %3724 = vmatprep.subr.mxu0 %v3472
        %3725 = vmatpush1.msra.mxu0 %v3471
        %3726 = vmatprep.subr.mxu0 %v3474
        %3727 = vmatpush1.msra.mxu0 %v3473
        %3728 = vmatprep.subr.mxu0 %v3476
        %3729 = vmatpush1.msra.mxu0 %v3475
        %3730 = vmatprep.subr.mxu0 %v3478
        %3731 = vmatpush1.msra.mxu0 %v3477
        %3732 = vmatprep.subr.mxu0 %v3480
        %3733 = vmatpush1.msra.mxu0 %v3479
        %3734 = vmatprep.subr.mxu0 %v3482
        %3735 = vmatpush1.msra.mxu0 %v3481
        %3736 = vmatprep.subr.mxu0 %v3484
        %3737 = vmatpush1.msra.mxu0 %v3483
        %3738 = vmatprep.subr.mxu0 %v3486
        %3739 = vmatpush1.msra.mxu0 %v3485
        %3740 = vmatprep.subr.mxu0 %v3488
        %3741 = vmatpush1.msra.mxu0 %v3487
        %3742 = vmatprep.subr.mxu0 %v3490
        %3743 = vmatpush1.msra.mxu0 %v3489
        %3744 = vmatprep.subr.mxu0 %v3492
        %3745 = vmatpush1.msra.mxu0 %v3491
        %3746 = vmatprep.subr.mxu0 %v3494
        %3747 = vmatpush1.msra.mxu0 %v3493
        %3748 = vmatprep.subr.mxu0 %v3496
        %3749 = vmatpush1.msra.mxu0 %v3495
        %3750 = vmatprep.subr.mxu0 %v3498
        %3751 = vmatpush1.msra.mxu0 %v3497
        %3752 = vmatprep.subr.mxu0 %v3500
        %3753 = vmatpush1.msra.mxu0 %v3499
        %3754 = vmatprep.subr.mxu0 %v3502
        %3755 = vmatpush1.msra.mxu0 %v3501
        %3756 = vmatprep.subr.mxu0 %v3504
        %3757 = vmatpush1.msra.mxu0 %v3503
        %3758 = vmatprep.mubr.f32.mxu0 %v3414
        %3759 = vmatmul.mubr.f32.gmra.mrb[0].mxu0 %v3413
        %v3760 = vpop.f32.mrb[0].mxu0
        %v3761 = vadd.f32 %v3664, %v3760
        %v3762 = vpop.f32.mrb[0].mxu0
        %v3763 = vadd.f32 %v3664, %v3762
        %3764 = vmatprep.mubr.f32.mxu0 %v3421
        %3765 = vmatmul.mubr.f32.gmra.mrb[0].mxu0 %v3420
        %v3766 = vpop.f32.mrb[0].mxu0
        %v3767 = vadd.f32 %v3669, %v3766
        %v3768 = vpop.f32.mrb[0].mxu0
        %v3769 = vadd.f32 %v3669, %v3768
        %3770 = vmatprep.mubr.f32.mxu0 %v3428
        %3771 = vmatmul.mubr.f32.gmra.mrb[0].mxu0 %v3427
        %v3772 = vpop.f32.mrb[0].mxu0
        %v3773 = vadd.f32 %v3674, %v3772
        %v3774 = vpop.f32.mrb[0].mxu0
        %v3775 = vadd.f32 %v3674, %v3774
        %3776 = vmatprep.mubr.f32.mxu0 %v3435
        %3777 = vmatmul.mubr.f32.gmra.mrb[0].mxu0 %v3434
        %v3778 = vpop.f32.mrb[0].mxu0
        %v3779 = vadd.f32 %v3679, %v3778
        %v3780 = vpop.f32.mrb[0].mxu0
        %v3781 = vadd.f32 %v3679, %v3780
        %3782 = vdwg.mxu0
        %3783 = vmatprep.subr.mxu0 %v3506
        %3784 = vmatpush1.msra.mxu0 %v3505
        %3785 = vmatprep.subr.mxu0 %v3508
        %3786 = vmatpush1.msra.mxu0 %v3507
        %3787 = vmatprep.subr.mxu0 %v3510
        %3788 = vmatpush1.msra.mxu0 %v3509
        %3789 = vmatprep.subr.mxu0 %v3512
        %3790 = vmatpush1.msra.mxu0 %v3511
        %3791 = vmatprep.subr.mxu0 %v3514
        %3792 = vmatpush1.msra.mxu0 %v3513
        %3793 = vmatprep.subr.mxu0 %v3516
        %3794 = vmatpush1.msra.mxu0 %v3515
        %3795 = vmatprep.subr.mxu0 %v3518
        %3796 = vmatpush1.msra.mxu0 %v3517
        %3797 = vmatprep.subr.mxu0 %v3520
        %3798 = vmatpush1.msra.mxu0 %v3519
        %3799 = vmatprep.subr.mxu0 %v3522
        %3800 = vmatpush1.msra.mxu0 %v3521
        %3801 = vmatprep.subr.mxu0 %v3524
        %3802 = vmatpush1.msra.mxu0 %v3523
        %3803 = vmatprep.subr.mxu0 %v3526
        %3804 = vmatpush1.msra.mxu0 %v3525
        %3805 = vmatprep.subr.mxu0 %v3528
        %3806 = vmatpush1.msra.mxu0 %v3527
        %3807 = vmatprep.subr.mxu0 %v3530
        %3808 = vmatpush1.msra.mxu0 %v3529
        %3809 = vmatprep.subr.mxu0 %v3532
        %3810 = vmatpush1.msra.mxu0 %v3531
        %3811 = vmatprep.subr.mxu0 %v3534
        %3812 = vmatpush1.msra.mxu0 %v3533
        %3813 = vmatprep.subr.mxu0 %v3536
        %3814 = vmatpush1.msra.mxu0 %v3535
        %3815 = vmatprep.subr.mxu0 %v3538
        %3816 = vmatpush1.msra.mxu0 %v3537
        %3817 = vmatprep.subr.mxu0 %v3540
        %3818 = vmatpush1.msra.mxu0 %v3539
        %3819 = vmatprep.subr.mxu0 %v3542
        %3820 = vmatpush1.msra.mxu0 %v3541
        %3821 = vmatprep.subr.mxu0 %v3544
        %3822 = vmatpush1.msra.mxu0 %v3543
        %3823 = vmatprep.subr.mxu0 %v3546
        %3824 = vmatpush1.msra.mxu0 %v3545
        %3825 = vmatprep.subr.mxu0 %v3548
        %3826 = vmatpush1.msra.mxu0 %v3547
        %3827 = vmatprep.subr.mxu0 %v3550
        %3828 = vmatpush1.msra.mxu0 %v3549
        %3829 = vmatprep.subr.mxu0 %v3552
        %3830 = vmatpush1.msra.mxu0 %v3551
        %3831 = vmatprep.subr.mxu0 %v3554
        %3832 = vmatpush1.msra.mxu0 %v3553
        %3833 = vmatprep.subr.mxu0 %v3556
        %3834 = vmatpush1.msra.mxu0 %v3555
        %3835 = vmatprep.subr.mxu0 %v3558
        %3836 = vmatpush1.msra.mxu0 %v3557
        %3837 = vmatprep.subr.mxu0 %v3560
        %3838 = vmatpush1.msra.mxu0 %v3559
        %3839 = vmatprep.subr.mxu0 %v3562
        %3840 = vmatpush1.msra.mxu0 %v3561
        %3841 = vmatprep.subr.mxu0 %v3564
        %3842 = vmatpush1.msra.mxu0 %v3563
        %3843 = vmatprep.subr.mxu0 %v3566
        %3844 = vmatpush1.msra.mxu0 %v3565
        %3845 = vmatprep.subr.mxu0 %v3568
        %3846 = vmatpush1.msra.mxu0 %v3567
        %3847 = vmatprep.mubr.f32.mxu0 %v3416
        %3848 = vmatmul.mubr.f32.gmra.mrb[0].mxu0 %v3415
        %v3849 = vpop.f32.mrb[0].mxu0
        %v3850 = vadd.f32 %v3761, %v3849
        %v3851 = vpop.f32.mrb[0].mxu0
        %v3852 = vadd.f32 %v3763, %v3851
        %3853 = vmatprep.mubr.f32.mxu0 %v3423
        %3854 = vmatmul.mubr.f32.gmra.mrb[0].mxu0 %v3422
        %v3855 = vpop.f32.mrb[0].mxu0
        %v3856 = vadd.f32 %v3767, %v3855
        %v3857 = vpop.f32.mrb[0].mxu0
        %v3858 = vadd.f32 %v3769, %v3857
        %3859 = vmatprep.mubr.f32.mxu0 %v3430
        %3860 = vmatmul.mubr.f32.gmra.mrb[0].mxu0 %v3429
        %v3861 = vpop.f32.mrb[0].mxu0
        %v3862 = vadd.f32 %v3773, %v3861
        %v3863 = vpop.f32.mrb[0].mxu0
        %v3864 = vadd.f32 %v3775, %v3863
        %3865 = vmatprep.mubr.f32.mxu0 %v3437
        %3866 = vmatmul.mubr.f32.gmra.mrb[0].mxu0 %v3436
        %v3867 = vpop.f32.mrb[0].mxu0
        %v3868 = vadd.f32 %v3779, %v3867
        %v3869 = vpop.f32.mrb[0].mxu0
        %v3870 = vadd.f32 %v3781, %v3869
        %3871 = vdwg.mxu0
        %3872 = vmatprep.subr.mxu0 %v3570
        %3873 = vmatpush1.msra.mxu0 %v3569
        %3874 = vmatprep.subr.mxu0 %v3572
        %3875 = vmatpush1.msra.mxu0 %v3571
        %3876 = vmatprep.subr.mxu0 %v3574
        %3877 = vmatpush1.msra.mxu0 %v3573
        %3878 = vmatprep.subr.mxu0 %v3576
        %3879 = vmatpush1.msra.mxu0 %v3575
        %3880 = vmatprep.subr.mxu0 %v3578
        %3881 = vmatpush1.msra.mxu0 %v3577
        %3882 = vmatprep.subr.mxu0 %v3580
        %3883 = vmatpush1.msra.mxu0 %v3579
        %3884 = vmatprep.subr.mxu0 %v3582
        %3885 = vmatpush1.msra.mxu0 %v3581
        %3886 = vmatprep.subr.mxu0 %v3584
        %3887 = vmatpush1.msra.mxu0 %v3583
        %3888 = vmatprep.subr.mxu0 %v3586
        %3889 = vmatpush1.msra.mxu0 %v3585
        %3890 = vmatprep.subr.mxu0 %v3588
        %3891 = vmatpush1.msra.mxu0 %v3587
        %3892 = vmatprep.subr.mxu0 %v3590
        %3893 = vmatpush1.msra.mxu0 %v3589
        %3894 = vmatprep.subr.mxu0 %v3592
        %3895 = vmatpush1.msra.mxu0 %v3591
        %3896 = vmatprep.subr.mxu0 %v3594
        %3897 = vmatpush1.msra.mxu0 %v3593
        %3898 = vmatprep.subr.mxu0 %v3596
        %3899 = vmatpush1.msra.mxu0 %v3595
        %3900 = vmatprep.subr.mxu0 %v3598
        %3901 = vmatpush1.msra.mxu0 %v3597
        %3902 = vmatprep.subr.mxu0 %v3600
        %3903 = vmatpush1.msra.mxu0 %v3599
        %3904 = vmatprep.subr.mxu0 %v3602
        %3905 = vmatpush1.msra.mxu0 %v3601
        %3906 = vmatprep.subr.mxu0 %v3604
        %3907 = vmatpush1.msra.mxu0 %v3603
        %3908 = vmatprep.subr.mxu0 %v3606
        %3909 = vmatpush1.msra.mxu0 %v3605
        %3910 = vmatprep.subr.mxu0 %v3608
        %3911 = vmatpush1.msra.mxu0 %v3607
        %3912 = vmatprep.subr.mxu0 %v3610
        %3913 = vmatpush1.msra.mxu0 %v3609
        %3914 = vmatprep.subr.mxu0 %v3612
        %3915 = vmatpush1.msra.mxu0 %v3611
        %3916 = vmatprep.subr.mxu0 %v3614
        %3917 = vmatpush1.msra.mxu0 %v3613
        %3918 = vmatprep.subr.mxu0 %v3616
        %3919 = vmatpush1.msra.mxu0 %v3615
        %3920 = vmatprep.subr.mxu0 %v3618
        %3921 = vmatpush1.msra.mxu0 %v3617
        %3922 = vmatprep.subr.mxu0 %v3620
        %3923 = vmatpush1.msra.mxu0 %v3619
        %3924 = vmatprep.subr.mxu0 %v3622
        %3925 = vmatpush1.msra.mxu0 %v3621
        %3926 = vmatprep.subr.mxu0 %v3624
        %3927 = vmatpush1.msra.mxu0 %v3623
        %3928 = vmatprep.subr.mxu0 %v3626
        %3929 = vmatpush1.msra.mxu0 %v3625
        %3930 = vmatprep.subr.mxu0 %v3628
        %3931 = vmatpush1.msra.mxu0 %v3627
        %3932 = vmatprep.subr.mxu0 %v3630
        %3933 = vmatpush1.msra.mxu0 %v3629
        %3934 = vmatprep.subr.mxu0 %v3632
        %3935 = vmatpush1.msra.mxu0 %v3631
        %3936 = vmatprep.mubr.f32.mxu0 %v3418
        %3937 = vmatmul.mubr.f32.gmra.mrb[0].mxu0 %v3417
        %v3938 = vpop.f32.mrb[0].mxu0
        %v3939 = vadd.f32 %v3850, %v3938
        %v3940 = vpop.f32.mrb[0].mxu0
        %v3941 = vadd.f32 %v3852, %v3940
        %3942 = vmatprep.mubr.f32.mxu0 %v3425
        %3943 = vmatmul.mubr.f32.gmra.mrb[0].mxu0 %v3424
        %v3944 = vpop.f32.mrb[0].mxu0
        %v3945 = vadd.f32 %v3856, %v3944
        %v3946 = vpop.f32.mrb[0].mxu0
        %v3947 = vadd.f32 %v3858, %v3946
        %3948 = vmatprep.mubr.f32.mxu0 %v3432
        %3949 = vmatmul.mubr.f32.gmra.mrb[0].mxu0 %v3431
        %v3950 = vpop.f32.mrb[0].mxu0
        %v3951 = vadd.f32 %v3862, %v3950
        %v3952 = vpop.f32.mrb[0].mxu0
        %v3953 = vadd.f32 %v3864, %v3952
        %3954 = vmatprep.mubr.f32.mxu0 %v3439
        %3955 = vmatmul.mubr.f32.gmra.mrb[0].mxu0 %v3438
        %v3956 = vpop.f32.mrb[0].mxu0
        %v3957 = vadd.f32 %v3868, %v3956
        %v3958 = vpop.f32.mrb[0].mxu0
        %v3959 = vadd.f32 %v3870, %v3958
        %3960 = vdwg.mxu0
        %3961 = vmatprep.subr.mxu0 %v3634
        %3962 = vmatpush1.msra.mxu0 %v3633
        %3963 = vmatprep.subr.mxu0 %v3636
        %3964 = vmatpush1.msra.mxu0 %v3635
        %3965 = vmatprep.subr.mxu0 %v3638
        %3966 = vmatpush1.msra.mxu0 %v3637
        %3967 = vmatprep.subr.mxu0 %v3640
        %3968 = vmatpush1.msra.mxu0 %v3639
        %3969 = vmatprep.subr.mxu0 %v3642
        %3970 = vmatpush1.msra.mxu0 %v3641
        %3971 = vmatprep.subr.mxu0 %v3644
        %3972 = vmatpush1.msra.mxu0 %v3643
        %3973 = vmatprep.subr.mxu0 %v3646
        %3974 = vmatpush1.msra.mxu0 %v3645
        %3975 = vmatprep.subr.mxu0 %v3648
        %3976 = vmatpush1.msra.mxu0 %v3647
        %3977 = vmatprep.subr.mxu0 %v3650
        %3978 = vmatpush1.msra.mxu0 %v3649
        %3979 = vmatprep.subr.mxu0 %v3652
        %3980 = vmatpush1.msra.mxu0 %v3651
        %3981 = vmatprep.subr.mxu0 %v3654
        %3982 = vmatpush1.msra.mxu0 %v3653
        %3983 = vmatprep.subr.mxu0 %v3656
        %3984 = vmatpush1.msra.mxu0 %v3655
        %3985 = vmatprep.subr.mxu0 0.0
        %3986 = vmatpush1.msra.mxu0 0.0
        %3987 = vmatprep.subr.mxu0 0.0
        %3988 = vmatpush1.msra.mxu0 0.0
        %3989 = vmatprep.subr.mxu0 0.0
        %3990 = vmatpush1.msra.mxu0 0.0
        %3991 = vmatprep.subr.mxu0 0.0
        %3992 = vmatpush1.msra.mxu0 0.0
        %3993 = vmatprep.subr.mxu0 0.0
        %3994 = vmatpush1.msra.mxu0 0.0
        %3995 = vmatprep.subr.mxu0 0.0
        %3996 = vmatpush1.msra.mxu0 0.0
        %3997 = vmatprep.subr.mxu0 0.0
        %3998 = vmatpush1.msra.mxu0 0.0
        %3999 = vmatprep.subr.mxu0 0.0
        %4000 = vmatpush1.msra.mxu0 0.0
        %4001 = vmatprep.subr.mxu0 0.0
        %4002 = vmatpush1.msra.mxu0 0.0
        %4003 = vmatprep.subr.mxu0 0.0
        %4004 = vmatpush1.msra.mxu0 0.0
        %4005 = vmatprep.subr.mxu0 0.0
        %4006 = vmatpush1.msra.mxu0 0.0
        %4007 = vmatprep.subr.mxu0 0.0
        %4008 = vmatpush1.msra.mxu0 0.0
        %4009 = vmatprep.subr.mxu0 0.0
        %4010 = vmatpush1.msra.mxu0 0.0
        %4011 = vmatprep.subr.mxu0 0.0
        %4012 = vmatpush1.msra.mxu0 0.0
        %4013 = vmatprep.subr.mxu0 0.0
        %4014 = vmatpush1.msra.mxu0 0.0
        %4015 = vmatprep.subr.mxu0 0.0
        %4016 = vmatpush1.msra.mxu0 0.0
        %4017 = vmatprep.subr.mxu0 0.0
        %4018 = vmatpush1.msra.mxu0 0.0
        %4019 = vmatprep.subr.mxu0 0.0
        %4020 = vmatpush1.msra.mxu0 0.0
        %4021 = vmatprep.subr.mxu0 0.0
        %4022 = vmatpush1.msra.mxu0 0.0
        %4023 = vmatprep.subr.mxu0 0.0
        %4024 = vmatpush1.msra.mxu0 0.0
        %4025 = vmatprep.mubr.f32.mxu0 0.0
        %4026 = vmatmul.mubr.f32.gmra.mrb[0].mxu0 %v3683
        %v4027 = vpop.f32.mrb[0].mxu0
        %v4028 = vadd.f32 %v3939, %v4027
        %v4029 = vpop.f32.mrb[0].mxu0
        %v4030 = vadd.f32 %v3941, %v4029
        %4031 = vmatprep.mubr.f32.mxu0 0.0
        %4032 = vmatmul.mubr.f32.gmra.mrb[0].mxu0 %v3686
        %v4033 = vpop.f32.mrb[0].mxu0
        %v4034 = vadd.f32 %v3945, %v4033
        %v4035 = vpop.f32.mrb[0].mxu0
        %v4036 = vadd.f32 %v3947, %v4035
        %4037 = vmatprep.mubr.f32.mxu0 0.0
        %4038 = vmatmul.mubr.f32.gmra.mrb[0].mxu0 %v3689
        %v4039 = vpop.f32.mrb[0].mxu0
        %v4040 = vadd.f32 %v3951, %v4039
        %v4041 = vpop.f32.mrb[0].mxu0
        %v4042 = vadd.f32 %v3953, %v4041
        %4043 = vmatprep.mubr.f32.mxu0 0.0
        %4044 = vmatmul.mubr.f32.gmra.mrb[0].mxu0 %v3692
        %v4045 = vpop.f32.mrb[0].mxu0
        %v4046 = vadd.f32 %v3957, %v4045
        %v4047 = vpop.f32.mrb[0].mxu0
        %v4048 = vadd.f32 %v3959, %v4047
        %4049 = vdwg.mxu0
        %v4050 = vmul.f32 %v4028, 0.2
        %v4051 = vmul.f32 %v4030, 0.2
        %v4052 = vmul.f32 %v4034, 0.2
        %v4053 = vmul.f32 %v4036, 0.2
        %v4054 = vmul.f32 %v4040, 0.2
        %v4055 = vmul.f32 %v4042, 0.2
        %v4056 = vmul.f32 %v4046, 0.2
        %v4057 = vmul.f32 %v4048, 0.2
        %v4058 = vadd.f32 %v4050, %v490
        %v4059 = vadd.f32 %v4051, %v491
        %v4060 = vadd.f32 %v4052, %v492
        %v4061 = vadd.f32 %v4053, %v493
        %v4062 = vadd.f32 %v4054, %v494
        %v4063 = vadd.f32 %v4055, %v495
        %v4064 = vadd.f32 %v4056, %v496
        %v4065 = vadd.f32 %v4057, %v497
        %4066 = vst [vmem:[%s489] sm:$0xff] %v4058
        %4067 = vst [vmem:[%s489 + $0x8] sm:$0xff] %v4059
        %4068 = vst [vmem:[%s489 + $0x10] sm:$0xff] %v4060
        %4069 = vst [vmem:[%s489 + $0x18] sm:$0xff] %v4061
        %4070 = vst [vmem:[%s489 + $0x20] sm:$0xff] %v4062
        %4071 = vst [vmem:[%s489 + $0x28] sm:$0xff] %v4063
        %4072 = vst [vmem:[%s489 + $0x30] sm:$0xff] %v4064
        %4073 = vst [vmem:[%s489 + $0x38] sm:$0xff] %v4065
        %s4074 = sand.u32 %s296, 1
        %s4075 = scalar_lea.sflag [#allocation5], %s4074
        %s4076 = sand.u32 %s296, 1
        %s4077 = smul.addr %s4076, 64
        %s4078 = scalar_lea.vmem [#allocation12], %s4077
        // Predicated region
        $region89: #{tpu_custom_call.1} parent=67 // pred_check
          %p4079 = pneg %p306
        $region90: #{tpu_custom_call.1} parent=67 // pred_check_branch
          %4081 = sbr.rel (%p4079) target = $region92
        $region91: #{tpu_custom_call.1} parent=67 // pred_region
          %s4083 = ssub.s32 1024, 1024
          %4084 = vsyncadd %s4075, %s4083
          %s4085 = smul.addr %s31, 8
          %s4086 = smul.addr %s4085, 128
          %s4087 = scalar_lea.hbm %s12, %s4086
          %s4088 = sshll.u32 %s4078, 4
          %s4089 = int_to_ptr.vmem [resolvable:$true] %s4088
          %4094 = dma.vmem_to_hbm [thread:$0]  %s4089, 1024, %s4087, %s4075, 256, 256, 16
        $region92: #{tpu_custom_call.1} parent=67 // pred_fallthru
          _
      $region68: #{tpu_custom_call.1} parent=5 // pred_fallthru
        _
      %p4095 = scmp.le.s32.totalorder 2, %s26
      // Predicated region
      $region93: #{tpu_custom_call.1} parent=5 // pred_check
        %p4096 = pneg %p4095
      $region94: #{tpu_custom_call.1} parent=5 // pred_check_branch
        %4098 = sbr.rel (%p4096) target = $region96
      $region95: #{tpu_custom_call.1} parent=5 // pred_region
        %s4099 = ssub.s32 %s26, 2
        // Predicated region
        $region97: #{tpu_custom_call.1} parent=95 // pred_check
          %p4100 = pneg %p312
        $region98: #{tpu_custom_call.1} parent=95 // pred_check_branch
          %4102 = sbr.rel (%p4100) target = $region100
        $region99: #{tpu_custom_call.1} parent=95 // pred_region
          %s4103 = sand.u32 %s297, 1
          %s4104 = scalar_lea.sflag [#allocation5], %s4103
          %s4105 = sand.u32 %s297, 1
          %s4106 = smul.addr %s4105, 64
          %s4107 = scalar_lea.vmem [#allocation12], %s4106
          %4108 = dma.done %s4104, 1024
        $region100: #{tpu_custom_call.1} parent=95 // pred_fallthru
          _
      $region96: #{tpu_custom_call.1} parent=5 // pred_fallthru
        _
    $region6: #{tpu_custom_call.1} parent=1 // loop_footer
      %s30 = sadd.s32 1, %s26
    $region7: #{tpu_custom_call.1} parent=1 // loop_footer_branch
      %25 = sbr.rel target = $region3
    $region8: #{tpu_custom_call.1} parent=1 // loop_exit
      _
    %4109 = vsyncpa [#allocation4], 1
    %s4110 = scalar_lea.sflag [#allocation4], 1
    %4111 = vsyncpa %s4110, 1
    %4112 = vsyncpa [#allocation7], 1
    %4113 = vsyncpa [#allocation10], 1
    %4114 = vsyncpa [#allocation5], 1
    %s4115 = scalar_lea.sflag [#allocation5], 1
    %4116 = vsyncpa %s4115, 1

</llo_original>
